<compile_context>
chip_gen: v5e
topology: v5e:2x2
jax: 0.10.0
libtpu: 0.0.40
codegen_flags: <defaults>
</compile_context>

<pallas_src>
import math

import jax
import jax.numpy as jnp
from jax import lax
from jax.experimental import pallas as pl
from jax.experimental.pallas import tpu as pltpu

# ---- model config (synthetic, small but structurally faithful) --------------
EMBED_DIM = 128          # d_model (module default 256; small example size)
NUM_HEADS = 4
HEAD_DIM = EMBED_DIM // NUM_HEADS
FF_DIM = 256             # dim_feedforward (PyTorch default is 2048; synthetic)
NUM_LAYERS = 2
OUT_DIM = 768
LN_EPS = 1e-5


def _layer_norm(x, w, b):
    # x: (R, E), w/b: (1, E) -- PyTorch LayerNorm (biased variance, eps=1e-5).
    # Single-pass statistics: var = E[x^2] - mean^2.
    mu = jnp.mean(x, axis=-1, keepdims=True)
    ms = jnp.mean(x * x, axis=-1, keepdims=True)
    var = ms - mu * mu
    return (x - mu) * lax.rsqrt(var + LN_EPS) * w + b


def _encoder_kernel(x_ref,
                    wqkv_ref, bqkv_ref, wo_ref, bo_ref,
                    ln1w_ref, ln1b_ref, ln2w_ref, ln2b_ref,
                    w1_ref, b1_ref, w2_ref, b2_ref,
                    o_ref):
    B, S, E = x_ref.shape
    T = S + 1                                  # real tokens (seq + zero "next state")
    Tp = ((T + 7) // 8) * 8                    # sublane-aligned padded token count
    H, D = NUM_HEADS, HEAD_DIM

    # ---- build the sublane-aligned (B*Tp, E) row slab ------------------------
    # rows [0, S): memory states, row S: zero "next state", rows [T, Tp): padding
    xf = jnp.concatenate(
        [x_ref[...].astype(jnp.float32),
         jnp.zeros((B, Tp - S, E), jnp.float32)], axis=1).reshape(B * Tp, E)

    # additive key mask: 0 for real columns (< T), -1e9 for padded columns
    col = lax.broadcasted_iota(jnp.int32, (H * B, Tp, Tp), 2)
    neg_mask = jnp.where(col < T, 0.0, -1e9).astype(jnp.float32)

    for l in range(NUM_LAYERS):
        # ---- multi-head self-attention: fused QKV + batched per-head dots ----
        qkv = jnp.dot(xf, wqkv_ref[l],
                      preferred_element_type=jnp.float32) + bqkv_ref[l]
        q = qkv[:, 0 * E:1 * E]           # 1/sqrt(D) already folded into Wq/bq
        k = qkv[:, 1 * E:2 * E]
        v = qkv[:, 2 * E:3 * E]

        # scores for all heads (batched over B), stacked along the major dim
        s_list = []
        for h in range(H):
            qh = q[:, h * D:(h + 1) * D].reshape(B, Tp, D)
            kh = k[:, h * D:(h + 1) * D].reshape(B, Tp, D)
            s_list.append(jnp.einsum('btd,bsd->bts', qh, kh,
                                     preferred_element_type=jnp.float32))
        s = jnp.concatenate(s_list, axis=0) + neg_mask          # (H*B, Tp, Tp)

        # one softmax chain over the stacked scores
        s = s - jnp.max(s, axis=-1, keepdims=True)
        p = jnp.exp(s)                                          # padded cols -> 0.0
        p = p * pl.reciprocal(jnp.sum(p, axis=-1, keepdims=True))

        # per-head context (batched over B), re-assembled along lanes
        ctx_heads = []
        for h in range(H):
            vh = v[:, h * D:(h + 1) * D].reshape(B, Tp, D)
            ph = p[h * B:(h + 1) * B]                           # (B, Tp, Tp)
            ctx_h = jnp.einsum('bts,bsd->btd', ph, vh,
                               preferred_element_type=jnp.float32)
            ctx_heads.append(ctx_h.reshape(B * Tp, D))
        ctx = jnp.concatenate(ctx_heads, axis=-1)               # (B*Tp, E)

        attn = jnp.dot(ctx, wo_ref[l],
                       preferred_element_type=jnp.float32) + bo_ref[l]
        xf = _layer_norm(xf + attn, ln1w_ref[l], ln1b_ref[l])

        # ---- feed-forward (ReLU) ----
        h1 = jnp.maximum(
            jnp.dot(xf, w1_ref[l], preferred_element_type=jnp.float32)
            + b1_ref[l], 0.0)
        h2 = jnp.dot(h1, w2_ref[l],
                     preferred_element_type=jnp.float32) + b2_ref[l]
        xf = _layer_norm(xf + h2, ln2w_ref[l], ln2b_ref[l])

    # ---- epilogue: last real token per batch, zero-padded to OUT_DIM lanes ---
    o_ref[:, E:OUT_DIM] = jnp.zeros((B, OUT_DIM - E), o_ref.dtype)
    last = xf.reshape(B, Tp, E)[:, S, :]                        # aligned row b*Tp+S
    o_ref[:, 0:E] = last.astype(o_ref.dtype)


def transformer_for_next_state(memory_states, params):
    """memory_states: (B, S, EMBED_DIM) float32 -> (B, 768) float32."""
    B, S, E = memory_states.shape
    assert E == EMBED_DIM
    # zero "next state" row + sublane padding are built inside the kernel
    args = (memory_states,) + tuple(params)
    vmem = pl.BlockSpec(memory_space=pltpu.MemorySpace.VMEM)
    return pl.pallas_call(
        _encoder_kernel,
        out_shape=jax.ShapeDtypeStruct((B, OUT_DIM), jnp.float32),
        in_specs=[vmem] * len(args),
        out_specs=vmem,
    )(*args)


def init_params(key):
    """Deterministic synthetic init (PyTorch parameter shapes -> kernel layout)."""
    E, H, D, F, L = EMBED_DIM, NUM_HEADS, HEAD_DIM, FF_DIM, NUM_LAYERS
    scale = 1.0 / math.sqrt(D)

    def u(k, shape, fan_in):
        bound = 1.0 / math.sqrt(fan_in)
        return jax.random.uniform(k, shape, jnp.float32, -bound, bound)

    wqkv, bqkv, wo, bo = [], [], [], []
    w1, b1, w2, b2 = [], [], [], []
    for _ in range(L):
        key, k0, k1, k2, k3, k4, k5, k6, k7 = jax.random.split(key, 9)
        in_w = u(k0, (3 * E, E), E)       # PyTorch in_proj_weight  (3E, E)
        in_b = u(k1, (3 * E,), E)
        out_w = u(k2, (E, E), E)          # out_proj.weight
        out_b = u(k3, (E,), E)
        l1_w = u(k4, (F, E), E); l1_b = u(k5, (F,), E)
        l2_w = u(k6, (E, F), F); l2_b = u(k7, (E,), F)

        # input-major layout, QKV packed along lanes, softmax scale folded into Q
        wq = in_w[0 * E:1 * E].T * scale          # (E, E)
        wk = in_w[1 * E:2 * E].T
        wv = in_w[2 * E:3 * E].T
        bq = in_b[0 * E:1 * E] * scale
        bk = in_b[1 * E:2 * E]
        bv = in_b[2 * E:3 * E]
        wqkv.append(jnp.concatenate([wq, wk, wv], axis=-1))    # (E, 3E)
        bqkv.append(jnp.concatenate([bq, bk, bv])[None, :])    # (1, 3E)
        wo.append(out_w.T)                                     # (E, E)
        bo.append(out_b[None, :])                              # (1, E)
        w1.append(l1_w.T); b1.append(l1_b[None, :])            # (E, F), (1, F)
        w2.append(l2_w.T); b2.append(l2_b[None, :])            # (F, E), (1, E)

    ln1w = jnp.ones((L, 1, E), jnp.float32)
    ln1b = jnp.zeros((L, 1, E), jnp.float32)
    ln2w = jnp.ones((L, 1, E), jnp.float32)
    ln2b = jnp.zeros((L, 1, E), jnp.float32)

    return (jnp.stack(wqkv), jnp.stack(bqkv), jnp.stack(wo), jnp.stack(bo),
            ln1w, ln1b, ln2w, ln2b,
            jnp.stack(w1), jnp.stack(b1), jnp.stack(w2), jnp.stack(b2))


def reference(memory_states, params):
    """Pure-JAX reference of the same forward pass (for verification)."""
    (wqkv, bqkv, wo, bo, ln1w, ln1b, ln2w, ln2b, w1, b1, w2, b2) = params
    B, S, E = memory_states.shape
    T = S + 1
    H, D = NUM_HEADS, HEAD_DIM
    x = jnp.concatenate(
        [memory_states, jnp.zeros((B, 1, E), memory_states.dtype)], axis=1)

    def ln(v, w, bb):
        mu = v.mean(-1, keepdims=True)
        var = ((v - mu) ** 2).mean(-1, keepdims=True)
        return (v - mu) / jnp.sqrt(var + LN_EPS) * w + bb

    for l in range(NUM_LAYERS):
        qkv = x @ wqkv[l] + bqkv[l]                            # (B, T, 3E)
        q = qkv[..., 0 * E:1 * E].reshape(B, T, H, D)          # scale pre-folded
        k = qkv[..., 1 * E:2 * E].reshape(B, T, H, D)
        v = qkv[..., 2 * E:3 * E].reshape(B, T, H, D)
        s = jnp.einsum('bthd,bshd->bhts', q, k)
        p = jax.nn.softmax(s, axis=-1)
        ctx = jnp.einsum('bhts,bshd->bthd', p, v).reshape(B, T, E)
        attn = ctx @ wo[l] + bo[l]
        x = ln(x + attn, ln1w[l], ln1b[l])
        h1 = jax.nn.relu(x @ w1[l] + b1[l])
        h2 = h1 @ w2[l] + b2[l]
        x = ln(x + h2, ln2w[l], ln2b[l])
    last = x[:, -1, :]
    return jnp.concatenate([last, jnp.zeros((B, OUT_DIM - E), last.dtype)],
                           axis=-1)


if __name__ == "__main__":
    key = jax.random.PRNGKey(0)
    k_param, k_x = jax.random.split(key)
    params = init_params(k_param)

    B, S = 2, 8
    memory_states = jax.random.normal(k_x, (B, S, EMBED_DIM), jnp.float32)

    out = transformer_for_next_state(memory_states, params)
    out = jax.block_until_ready(out)

    ref = reference(memory_states, params)
    assert out.shape == (B, OUT_DIM), out.shape
    max_err = float(jnp.max(jnp.abs(out - ref)))
    assert jnp.allclose(out, ref, atol=1e-3, rtol=1e-3), f"max_err={max_err}"

    print("KERNEL_OK")
</pallas_src>

<mosaic_0001>
module attributes {stable_mosaic.version = 11 : i64} {
  func.func @_encoder_kernel(%arg0: memref<2x8x128xf32, #tpu.memory_space<vmem>>, %arg1: memref<2x128x384xf32, #tpu.memory_space<vmem>>, %arg2: memref<2x1x384xf32, #tpu.memory_space<vmem>>, %arg3: memref<2x128x128xf32, #tpu.memory_space<vmem>>, %arg4: memref<2x1x128xf32, #tpu.memory_space<vmem>>, %arg5: memref<2x1x128xf32, #tpu.memory_space<vmem>>, %arg6: memref<2x1x128xf32, #tpu.memory_space<vmem>>, %arg7: memref<2x1x128xf32, #tpu.memory_space<vmem>>, %arg8: memref<2x1x128xf32, #tpu.memory_space<vmem>>, %arg9: memref<2x128x256xf32, #tpu.memory_space<vmem>>, %arg10: memref<2x1x256xf32, #tpu.memory_space<vmem>>, %arg11: memref<2x256x128xf32, #tpu.memory_space<vmem>>, %arg12: memref<2x1x128xf32, #tpu.memory_space<vmem>>, %arg13: memref<2x768xf32, #tpu.memory_space<vmem>>) attributes {dimension_semantics = [], scalar_prefetch = 0 : i64, scratch_operands = 0 : i64, tpu.core_type = #tpu.core_type<tc>} {
    %c0 = arith.constant 0 : index
    %c0_0 = arith.constant 0 : index
    %c0_1 = arith.constant 0 : index
    %0 = vector.load %arg0[%c0, %c0_0, %c0_1] : memref<2x8x128xf32, #tpu.memory_space<vmem>>, vector<2x8x128xf32>
    %cst = arith.constant 0.000000e+00 : f32
    %1 = vector.broadcast %cst : f32 to vector<2x8x128xf32>
    %2 = tpu.concatenate %0, %1 in 1 : vector<2x8x128xf32>, vector<2x8x128xf32> -> vector<2x16x128xf32>
    %3 = vector.shape_cast %2 : vector<2x16x128xf32> to vector<32x128xf32>
    %4 = tpu.iota {dimensions = array<i32: 2>} : vector<8x16x16xi32>
    %c9_i32 = arith.constant 9 : i32
    %5 = vector.broadcast %c9_i32 : i32 to vector<8x16x16xi32>
    %6 = arith.cmpi slt, %4, %5 : vector<8x16x16xi32>
    %cst_2 = arith.constant 0.000000e+00 : f32
    %cst_3 = arith.constant -1.000000e+09 : f32
    %7 = vector.broadcast %cst_2 : f32 to vector<8x16x16xf32>
    %8 = vector.broadcast %cst_3 : f32 to vector<8x16x16xf32>
    %9 = arith.select %6, %7, %8 : vector<8x16x16xi1>, vector<8x16x16xf32>
    %c0_4 = arith.constant 0 : index
    %c0_5 = arith.constant 0 : index
    %c0_6 = arith.constant 0 : index
    %10 = vector.load %arg1[%c0_4, %c0_5, %c0_6] : memref<2x128x384xf32, #tpu.memory_space<vmem>>, vector<1x128x384xf32>
    %11 = vector.shape_cast %10 : vector<1x128x384xf32> to vector<128x384xf32>
    %cst_7 = arith.constant dense<0.000000e+00> : vector<32x384xf32>
    %12 = tpu.matmul %3, %11, %cst_7 {dimension_numbers = #tpu.dot_dimension_numbers<[1], [0], [0], [1], [0, 0, 1, 1], [], []>} : vector<32x128xf32>, vector<128x384xf32>, vector<32x384xf32> -> vector<32x384xf32>
    %c0_8 = arith.constant 0 : index
    %c0_9 = arith.constant 0 : index
    %c0_10 = arith.constant 0 : index
    %13 = vector.load %arg2[%c0_8, %c0_9, %c0_10] : memref<2x1x384xf32, #tpu.memory_space<vmem>>, vector<1x1x384xf32>
    %14 = vector.shape_cast %13 : vector<1x1x384xf32> to vector<1x384xf32>
    %15 = vector.broadcast %14 : vector<1x384xf32> to vector<32x384xf32>
    %16 = arith.addf %12, %15 : vector<32x384xf32>
    %17 = vector.extract_strided_slice %16 {offsets = [0, 0], sizes = [32, 128], strides = [1, 1]} : vector<32x384xf32> to vector<32x128xf32>
    %18 = vector.extract_strided_slice %16 {offsets = [0, 128], sizes = [32, 128], strides = [1, 1]} : vector<32x384xf32> to vector<32x128xf32>
    %19 = vector.extract_strided_slice %16 {offsets = [0, 256], sizes = [32, 128], strides = [1, 1]} : vector<32x384xf32> to vector<32x128xf32>
    %20 = vector.extract_strided_slice %17 {offsets = [0, 0], sizes = [32, 32], strides = [1, 1]} : vector<32x128xf32> to vector<32x32xf32>
    %21 = vector.shape_cast %20 : vector<32x32xf32> to vector<2x16x32xf32>
    %22 = vector.extract_strided_slice %18 {offsets = [0, 0], sizes = [32, 32], strides = [1, 1]} : vector<32x128xf32> to vector<32x32xf32>
    %23 = vector.shape_cast %22 : vector<32x32xf32> to vector<2x16x32xf32>
    "tpu.trace_start"() <{level = 10 : i32, message = "btd,bsd->bts"}> : () -> ()
    %cst_11 = arith.constant dense<0.000000e+00> : vector<2x16x16xf32>
    %24 = tpu.matmul %21, %23, %cst_11 {dimension_numbers = #tpu.dot_dimension_numbers<[2], [2], [1], [1], [0, 0, 0, 1, 1, 1], [0], [0]>} : vector<2x16x32xf32>, vector<2x16x32xf32>, vector<2x16x16xf32> -> vector<2x16x16xf32>
    "tpu.trace_stop"() : () -> ()
    %25 = vector.extract_strided_slice %17 {offsets = [0, 32], sizes = [32, 32], strides = [1, 1]} : vector<32x128xf32> to vector<32x32xf32>
    %26 = vector.shape_cast %25 : vector<32x32xf32> to vector<2x16x32xf32>
    %27 = vector.extract_strided_slice %18 {offsets = [0, 32], sizes = [32, 32], strides = [1, 1]} : vector<32x128xf32> to vector<32x32xf32>
    %28 = vector.shape_cast %27 : vector<32x32xf32> to vector<2x16x32xf32>
    "tpu.trace_start"() <{level = 10 : i32, message = "btd,bsd->bts"}> : () -> ()
    %cst_12 = arith.constant dense<0.000000e+00> : vector<2x16x16xf32>
    %29 = tpu.matmul %26, %28, %cst_12 {dimension_numbers = #tpu.dot_dimension_numbers<[2], [2], [1], [1], [0, 0, 0, 1, 1, 1], [0], [0]>} : vector<2x16x32xf32>, vector<2x16x32xf32>, vector<2x16x16xf32> -> vector<2x16x16xf32>
    "tpu.trace_stop"() : () -> ()
    %30 = vector.extract_strided_slice %17 {offsets = [0, 64], sizes = [32, 32], strides = [1, 1]} : vector<32x128xf32> to vector<32x32xf32>
    %31 = vector.shape_cast %30 : vector<32x32xf32> to vector<2x16x32xf32>
    %32 = vector.extract_strided_slice %18 {offsets = [0, 64], sizes = [32, 32], strides = [1, 1]} : vector<32x128xf32> to vector<32x32xf32>
    %33 = vector.shape_cast %32 : vector<32x32xf32> to vector<2x16x32xf32>
    "tpu.trace_start"() <{level = 10 : i32, message = "btd,bsd->bts"}> : () -> ()
    %cst_13 = arith.constant dense<0.000000e+00> : vector<2x16x16xf32>
    %34 = tpu.matmul %31, %33, %cst_13 {dimension_numbers = #tpu.dot_dimension_numbers<[2], [2], [1], [1], [0, 0, 0, 1, 1, 1], [0], [0]>} : vector<2x16x32xf32>, vector<2x16x32xf32>, vector<2x16x16xf32> -> vector<2x16x16xf32>
    "tpu.trace_stop"() : () -> ()
    %35 = vector.extract_strided_slice %17 {offsets = [0, 96], sizes = [32, 32], strides = [1, 1]} : vector<32x128xf32> to vector<32x32xf32>
    %36 = vector.shape_cast %35 : vector<32x32xf32> to vector<2x16x32xf32>
    %37 = vector.extract_strided_slice %18 {offsets = [0, 96], sizes = [32, 32], strides = [1, 1]} : vector<32x128xf32> to vector<32x32xf32>
    %38 = vector.shape_cast %37 : vector<32x32xf32> to vector<2x16x32xf32>
    "tpu.trace_start"() <{level = 10 : i32, message = "btd,bsd->bts"}> : () -> ()
    %cst_14 = arith.constant dense<0.000000e+00> : vector<2x16x16xf32>
    %39 = tpu.matmul %36, %38, %cst_14 {dimension_numbers = #tpu.dot_dimension_numbers<[2], [2], [1], [1], [0, 0, 0, 1, 1, 1], [0], [0]>} : vector<2x16x32xf32>, vector<2x16x32xf32>, vector<2x16x16xf32> -> vector<2x16x16xf32>
    "tpu.trace_stop"() : () -> ()
    %40 = tpu.concatenate %24, %29, %34, %39 in 0 : vector<2x16x16xf32>, vector<2x16x16xf32>, vector<2x16x16xf32>, vector<2x16x16xf32> -> vector<8x16x16xf32>
    %41 = arith.addf %40, %9 : vector<8x16x16xf32>
    %cst_15 = arith.constant dense<0xFF800000> : vector<8x16xf32>
    %42 = vector.multi_reduction <maximumf>, %41, %cst_15 [2] : vector<8x16x16xf32> to vector<8x16xf32>
    %43 = vector.shape_cast %42 : vector<8x16xf32> to vector<8x16x1xf32>
    %44 = vector.broadcast %43 : vector<8x16x1xf32> to vector<8x16x16xf32>
    %45 = arith.subf %41, %44 : vector<8x16x16xf32>
    %46 = math.exp %45 : vector<8x16x16xf32>
    %cst_16 = arith.constant dense<0.000000e+00> : vector<8x16xf32>
    %47 = vector.multi_reduction <add>, %46, %cst_16 [2] : vector<8x16x16xf32> to vector<8x16xf32>
    %48 = vector.shape_cast %47 : vector<8x16xf32> to vector<8x16x1xf32>
    %49 = tpu.reciprocal %48 : vector<8x16x1xf32> -> vector<8x16x1xf32>
    %50 = vector.broadcast %49 : vector<8x16x1xf32> to vector<8x16x16xf32>
    %51 = arith.mulf %46, %50 : vector<8x16x16xf32>
    %52 = vector.extract_strided_slice %19 {offsets = [0, 0], sizes = [32, 32], strides = [1, 1]} : vector<32x128xf32> to vector<32x32xf32>
    %53 = vector.shape_cast %52 : vector<32x32xf32> to vector<2x16x32xf32>
    %54 = vector.extract_strided_slice %51 {offsets = [0, 0, 0], sizes = [2, 16, 16], strides = [1, 1, 1]} : vector<8x16x16xf32> to vector<2x16x16xf32>
    "tpu.trace_start"() <{level = 10 : i32, message = "bts,bsd->btd"}> : () -> ()
    %cst_17 = arith.constant dense<0.000000e+00> : vector<2x16x32xf32>
    %55 = tpu.matmul %54, %53, %cst_17 {dimension_numbers = #tpu.dot_dimension_numbers<[2], [1], [1], [2], [0, 0, 0, 1, 1, 2], [0], [0]>} : vector<2x16x16xf32>, vector<2x16x32xf32>, vector<2x16x32xf32> -> vector<2x16x32xf32>
    "tpu.trace_stop"() : () -> ()
    %56 = vector.shape_cast %55 : vector<2x16x32xf32> to vector<32x32xf32>
    %57 = vector.extract_strided_slice %19 {offsets = [0, 32], sizes = [32, 32], strides = [1, 1]} : vector<32x128xf32> to vector<32x32xf32>
    %58 = vector.shape_cast %57 : vector<32x32xf32> to vector<2x16x32xf32>
    %59 = vector.extract_strided_slice %51 {offsets = [2, 0, 0], sizes = [2, 16, 16], strides = [1, 1, 1]} : vector<8x16x16xf32> to vector<2x16x16xf32>
    "tpu.trace_start"() <{level = 10 : i32, message = "bts,bsd->btd"}> : () -> ()
    %cst_18 = arith.constant dense<0.000000e+00> : vector<2x16x32xf32>
    %60 = tpu.matmul %59, %58, %cst_18 {dimension_numbers = #tpu.dot_dimension_numbers<[2], [1], [1], [2], [0, 0, 0, 1, 1, 2], [0], [0]>} : vector<2x16x16xf32>, vector<2x16x32xf32>, vector<2x16x32xf32> -> vector<2x16x32xf32>
    "tpu.trace_stop"() : () -> ()
    %61 = vector.shape_cast %60 : vector<2x16x32xf32> to vector<32x32xf32>
    %62 = vector.extract_strided_slice %19 {offsets = [0, 64], sizes = [32, 32], strides = [1, 1]} : vector<32x128xf32> to vector<32x32xf32>
    %63 = vector.shape_cast %62 : vector<32x32xf32> to vector<2x16x32xf32>
    %64 = vector.extract_strided_slice %51 {offsets = [4, 0, 0], sizes = [2, 16, 16], strides = [1, 1, 1]} : vector<8x16x16xf32> to vector<2x16x16xf32>
    "tpu.trace_start"() <{level = 10 : i32, message = "bts,bsd->btd"}> : () -> ()
    %cst_19 = arith.constant dense<0.000000e+00> : vector<2x16x32xf32>
    %65 = tpu.matmul %64, %63, %cst_19 {dimension_numbers = #tpu.dot_dimension_numbers<[2], [1], [1], [2], [0, 0, 0, 1, 1, 2], [0], [0]>} : vector<2x16x16xf32>, vector<2x16x32xf32>, vector<2x16x32xf32> -> vector<2x16x32xf32>
    "tpu.trace_stop"() : () -> ()
    %66 = vector.shape_cast %65 : vector<2x16x32xf32> to vector<32x32xf32>
    %67 = vector.extract_strided_slice %19 {offsets = [0, 96], sizes = [32, 32], strides = [1, 1]} : vector<32x128xf32> to vector<32x32xf32>
    %68 = vector.shape_cast %67 : vector<32x32xf32> to vector<2x16x32xf32>
    %69 = vector.extract_strided_slice %51 {offsets = [6, 0, 0], sizes = [2, 16, 16], strides = [1, 1, 1]} : vector<8x16x16xf32> to vector<2x16x16xf32>
    "tpu.trace_start"() <{level = 10 : i32, message = "bts,bsd->btd"}> : () -> ()
    %cst_20 = arith.constant dense<0.000000e+00> : vector<2x16x32xf32>
    %70 = tpu.matmul %69, %68, %cst_20 {dimension_numbers = #tpu.dot_dimension_numbers<[2], [1], [1], [2], [0, 0, 0, 1, 1, 2], [0], [0]>} : vector<2x16x16xf32>, vector<2x16x32xf32>, vector<2x16x32xf32> -> vector<2x16x32xf32>
    "tpu.trace_stop"() : () -> ()
    %71 = vector.shape_cast %70 : vector<2x16x32xf32> to vector<32x32xf32>
    %72 = tpu.concatenate %56, %61, %66, %71 in 1 : vector<32x32xf32>, vector<32x32xf32>, vector<32x32xf32>, vector<32x32xf32> -> vector<32x128xf32>
    %c0_21 = arith.constant 0 : index
    %c0_22 = arith.constant 0 : index
    %c0_23 = arith.constant 0 : index
    %73 = vector.load %arg3[%c0_21, %c0_22, %c0_23] : memref<2x128x128xf32, #tpu.memory_space<vmem>>, vector<1x128x128xf32>
    %74 = vector.shape_cast %73 : vector<1x128x128xf32> to vector<128x128xf32>
    %cst_24 = arith.constant dense<0.000000e+00> : vector<32x128xf32>
    %75 = tpu.matmul %72, %74, %cst_24 {dimension_numbers = #tpu.dot_dimension_numbers<[1], [0], [0], [1], [0, 0, 1, 1], [], []>} : vector<32x128xf32>, vector<128x128xf32>, vector<32x128xf32> -> vector<32x128xf32>
    %c0_25 = arith.constant 0 : index
    %c0_26 = arith.constant 0 : index
    %c0_27 = arith.constant 0 : index
    %76 = vector.load %arg4[%c0_25, %c0_26, %c0_27] : memref<2x1x128xf32, #tpu.memory_space<vmem>>, vector<1x1x128xf32>
    %77 = vector.shape_cast %76 : vector<1x1x128xf32> to vector<1x128xf32>
    %78 = vector.broadcast %77 : vector<1x128xf32> to vector<32x128xf32>
    %79 = arith.addf %75, %78 : vector<32x128xf32>
    %80 = arith.addf %3, %79 : vector<32x128xf32>
    %c0_28 = arith.constant 0 : index
    %c0_29 = arith.constant 0 : index
    %c0_30 = arith.constant 0 : index
    %81 = vector.load %arg5[%c0_28, %c0_29, %c0_30] : memref<2x1x128xf32, #tpu.memory_space<vmem>>, vector<1x1x128xf32>
    %82 = vector.shape_cast %81 : vector<1x1x128xf32> to vector<1x128xf32>
    %c0_31 = arith.constant 0 : index
    %c0_32 = arith.constant 0 : index
    %c0_33 = arith.constant 0 : index
    %83 = vector.load %arg6[%c0_31, %c0_32, %c0_33] : memref<2x1x128xf32, #tpu.memory_space<vmem>>, vector<1x1x128xf32>
    %84 = vector.shape_cast %83 : vector<1x1x128xf32> to vector<1x128xf32>
    %cst_34 = arith.constant dense<0.000000e+00> : vector<32xf32>
    %85 = vector.multi_reduction <add>, %80, %cst_34 [1] : vector<32x128xf32> to vector<32xf32>
    %86 = vector.shape_cast %85 : vector<32xf32> to vector<32x1xf32>
    %cst_35 = arith.constant 1.280000e+02 : f32
    %87 = vector.broadcast %cst_35 : f32 to vector<32x1xf32>
    %88 = arith.divf %86, %87 : vector<32x1xf32>
    %89 = arith.mulf %80, %80 : vector<32x128xf32>
    %cst_36 = arith.constant dense<0.000000e+00> : vector<32xf32>
    %90 = vector.multi_reduction <add>, %89, %cst_36 [1] : vector<32x128xf32> to vector<32xf32>
    %91 = vector.shape_cast %90 : vector<32xf32> to vector<32x1xf32>
    %cst_37 = arith.constant 1.280000e+02 : f32
    %92 = vector.broadcast %cst_37 : f32 to vector<32x1xf32>
    %93 = arith.divf %91, %92 : vector<32x1xf32>
    %94 = arith.mulf %88, %88 : vector<32x1xf32>
    %95 = arith.subf %93, %94 : vector<32x1xf32>
    %96 = vector.broadcast %88 : vector<32x1xf32> to vector<32x128xf32>
    %97 = arith.subf %80, %96 : vector<32x128xf32>
    %cst_38 = arith.constant 9.99999974E-6 : f32
    %98 = vector.broadcast %cst_38 : f32 to vector<32x1xf32>
    %99 = arith.addf %95, %98 : vector<32x1xf32>
    %100 = math.rsqrt %99 : vector<32x1xf32>
    %101 = vector.broadcast %100 : vector<32x1xf32> to vector<32x128xf32>
    %102 = arith.mulf %97, %101 : vector<32x128xf32>
    %103 = vector.broadcast %82 : vector<1x128xf32> to vector<32x128xf32>
    %104 = arith.mulf %102, %103 : vector<32x128xf32>
    %105 = vector.broadcast %84 : vector<1x128xf32> to vector<32x128xf32>
    %106 = arith.addf %104, %105 : vector<32x128xf32>
    %c0_39 = arith.constant 0 : index
    %c0_40 = arith.constant 0 : index
    %c0_41 = arith.constant 0 : index
    %107 = vector.load %arg9[%c0_39, %c0_40, %c0_41] : memref<2x128x256xf32, #tpu.memory_space<vmem>>, vector<1x128x256xf32>
    %108 = vector.shape_cast %107 : vector<1x128x256xf32> to vector<128x256xf32>
    %cst_42 = arith.constant dense<0.000000e+00> : vector<32x256xf32>
    %109 = tpu.matmul %106, %108, %cst_42 {dimension_numbers = #tpu.dot_dimension_numbers<[1], [0], [0], [1], [0, 0, 1, 1], [], []>} : vector<32x128xf32>, vector<128x256xf32>, vector<32x256xf32> -> vector<32x256xf32>
    %c0_43 = arith.constant 0 : index
    %c0_44 = arith.constant 0 : index
    %c0_45 = arith.constant 0 : index
    %110 = vector.load %arg10[%c0_43, %c0_44, %c0_45] : memref<2x1x256xf32, #tpu.memory_space<vmem>>, vector<1x1x256xf32>
    %111 = vector.shape_cast %110 : vector<1x1x256xf32> to vector<1x256xf32>
    %112 = vector.broadcast %111 : vector<1x256xf32> to vector<32x256xf32>
    %113 = arith.addf %109, %112 : vector<32x256xf32>
    %cst_46 = arith.constant 0.000000e+00 : f32
    %114 = vector.broadcast %cst_46 : f32 to vector<32x256xf32>
    %115 = arith.maximumf %113, %114 : vector<32x256xf32>
    %c0_47 = arith.constant 0 : index
    %c0_48 = arith.constant 0 : index
    %c0_49 = arith.constant 0 : index
    %116 = vector.load %arg11[%c0_47, %c0_48, %c0_49] : memref<2x256x128xf32, #tpu.memory_space<vmem>>, vector<1x256x128xf32>
    %117 = vector.shape_cast %116 : vector<1x256x128xf32> to vector<256x128xf32>
    %cst_50 = arith.constant dense<0.000000e+00> : vector<32x128xf32>
    %118 = tpu.matmul %115, %117, %cst_50 {dimension_numbers = #tpu.dot_dimension_numbers<[1], [0], [0], [1], [0, 0, 1, 1], [], []>} : vector<32x256xf32>, vector<256x128xf32>, vector<32x128xf32> -> vector<32x128xf32>
    %c0_51 = arith.constant 0 : index
    %c0_52 = arith.constant 0 : index
    %c0_53 = arith.constant 0 : index
    %119 = vector.load %arg12[%c0_51, %c0_52, %c0_53] : memref<2x1x128xf32, #tpu.memory_space<vmem>>, vector<1x1x128xf32>
    %120 = vector.shape_cast %119 : vector<1x1x128xf32> to vector<1x128xf32>
    %121 = vector.broadcast %120 : vector<1x128xf32> to vector<32x128xf32>
    %122 = arith.addf %118, %121 : vector<32x128xf32>
    %123 = arith.addf %106, %122 : vector<32x128xf32>
    %c0_54 = arith.constant 0 : index
    %c0_55 = arith.constant 0 : index
    %c0_56 = arith.constant 0 : index
    %124 = vector.load %arg7[%c0_54, %c0_55, %c0_56] : memref<2x1x128xf32, #tpu.memory_space<vmem>>, vector<1x1x128xf32>
    %125 = vector.shape_cast %124 : vector<1x1x128xf32> to vector<1x128xf32>
    %c0_57 = arith.constant 0 : index
    %c0_58 = arith.constant 0 : index
    %c0_59 = arith.constant 0 : index
    %126 = vector.load %arg8[%c0_57, %c0_58, %c0_59] : memref<2x1x128xf32, #tpu.memory_space<vmem>>, vector<1x1x128xf32>
    %127 = vector.shape_cast %126 : vector<1x1x128xf32> to vector<1x128xf32>
    %cst_60 = arith.constant dense<0.000000e+00> : vector<32xf32>
    %128 = vector.multi_reduction <add>, %123, %cst_60 [1] : vector<32x128xf32> to vector<32xf32>
    %129 = vector.shape_cast %128 : vector<32xf32> to vector<32x1xf32>
    %cst_61 = arith.constant 1.280000e+02 : f32
    %130 = vector.broadcast %cst_61 : f32 to vector<32x1xf32>
    %131 = arith.divf %129, %130 : vector<32x1xf32>
    %132 = arith.mulf %123, %123 : vector<32x128xf32>
    %cst_62 = arith.constant dense<0.000000e+00> : vector<32xf32>
    %133 = vector.multi_reduction <add>, %132, %cst_62 [1] : vector<32x128xf32> to vector<32xf32>
    %134 = vector.shape_cast %133 : vector<32xf32> to vector<32x1xf32>
    %cst_63 = arith.constant 1.280000e+02 : f32
    %135 = vector.broadcast %cst_63 : f32 to vector<32x1xf32>
    %136 = arith.divf %134, %135 : vector<32x1xf32>
    %137 = arith.mulf %131, %131 : vector<32x1xf32>
    %138 = arith.subf %136, %137 : vector<32x1xf32>
    %139 = vector.broadcast %131 : vector<32x1xf32> to vector<32x128xf32>
    %140 = arith.subf %123, %139 : vector<32x128xf32>
    %cst_64 = arith.constant 9.99999974E-6 : f32
    %141 = vector.broadcast %cst_64 : f32 to vector<32x1xf32>
    %142 = arith.addf %138, %141 : vector<32x1xf32>
    %143 = math.rsqrt %142 : vector<32x1xf32>
    %144 = vector.broadcast %143 : vector<32x1xf32> to vector<32x128xf32>
    %145 = arith.mulf %140, %144 : vector<32x128xf32>
    %146 = vector.broadcast %125 : vector<1x128xf32> to vector<32x128xf32>
    %147 = arith.mulf %145, %146 : vector<32x128xf32>
    %148 = vector.broadcast %127 : vector<1x128xf32> to vector<32x128xf32>
    %149 = arith.addf %147, %148 : vector<32x128xf32>
    %c1 = arith.constant 1 : index
    %c0_65 = arith.constant 0 : index
    %c0_66 = arith.constant 0 : index
    %150 = vector.load %arg1[%c1, %c0_65, %c0_66] : memref<2x128x384xf32, #tpu.memory_space<vmem>>, vector<1x128x384xf32>
    %151 = vector.shape_cast %150 : vector<1x128x384xf32> to vector<128x384xf32>
    %cst_67 = arith.constant dense<0.000000e+00> : vector<32x384xf32>
    %152 = tpu.matmul %149, %151, %cst_67 {dimension_numbers = #tpu.dot_dimension_numbers<[1], [0], [0], [1], [0, 0, 1, 1], [], []>} : vector<32x128xf32>, vector<128x384xf32>, vector<32x384xf32> -> vector<32x384xf32>
    %c1_68 = arith.constant 1 : index
    %c0_69 = arith.constant 0 : index
    %c0_70 = arith.constant 0 : index
    %153 = vector.load %arg2[%c1_68, %c0_69, %c0_70] : memref<2x1x384xf32, #tpu.memory_space<vmem>>, vector<1x1x384xf32>
    %154 = vector.shape_cast %153 : vector<1x1x384xf32> to vector<1x384xf32>
    %155 = vector.broadcast %154 : vector<1x384xf32> to vector<32x384xf32>
    %156 = arith.addf %152, %155 : vector<32x384xf32>
    %157 = vector.extract_strided_slice %156 {offsets = [0, 0], sizes = [32, 128], strides = [1, 1]} : vector<32x384xf32> to vector<32x128xf32>
    %158 = vector.extract_strided_slice %156 {offsets = [0, 128], sizes = [32, 128], strides = [1, 1]} : vector<32x384xf32> to vector<32x128xf32>
    %159 = vector.extract_strided_slice %156 {offsets = [0, 256], sizes = [32, 128], strides = [1, 1]} : vector<32x384xf32> to vector<32x128xf32>
    %160 = vector.extract_strided_slice %157 {offsets = [0, 0], sizes = [32, 32], strides = [1, 1]} : vector<32x128xf32> to vector<32x32xf32>
    %161 = vector.shape_cast %160 : vector<32x32xf32> to vector<2x16x32xf32>
    %162 = vector.extract_strided_slice %158 {offsets = [0, 0], sizes = [32, 32], strides = [1, 1]} : vector<32x128xf32> to vector<32x32xf32>
    %163 = vector.shape_cast %162 : vector<32x32xf32> to vector<2x16x32xf32>
    "tpu.trace_start"() <{level = 10 : i32, message = "btd,bsd->bts"}> : () -> ()
    %cst_71 = arith.constant dense<0.000000e+00> : vector<2x16x16xf32>
    %164 = tpu.matmul %161, %163, %cst_71 {dimension_numbers = #tpu.dot_dimension_numbers<[2], [2], [1], [1], [0, 0, 0, 1, 1, 1], [0], [0]>} : vector<2x16x32xf32>, vector<2x16x32xf32>, vector<2x16x16xf32> -> vector<2x16x16xf32>
    "tpu.trace_stop"() : () -> ()
    %165 = vector.extract_strided_slice %157 {offsets = [0, 32], sizes = [32, 32], strides = [1, 1]} : vector<32x128xf32> to vector<32x32xf32>
    %166 = vector.shape_cast %165 : vector<32x32xf32> to vector<2x16x32xf32>
    %167 = vector.extract_strided_slice %158 {offsets = [0, 32], sizes = [32, 32], strides = [1, 1]} : vector<32x128xf32> to vector<32x32xf32>
    %168 = vector.shape_cast %167 : vector<32x32xf32> to vector<2x16x32xf32>
    "tpu.trace_start"() <{level = 10 : i32, message = "btd,bsd->bts"}> : () -> ()
    %cst_72 = arith.constant dense<0.000000e+00> : vector<2x16x16xf32>
    %169 = tpu.matmul %166, %168, %cst_72 {dimension_numbers = #tpu.dot_dimension_numbers<[2], [2], [1], [1], [0, 0, 0, 1, 1, 1], [0], [0]>} : vector<2x16x32xf32>, vector<2x16x32xf32>, vector<2x16x16xf32> -> vector<2x16x16xf32>
    "tpu.trace_stop"() : () -> ()
    %170 = vector.extract_strided_slice %157 {offsets = [0, 64], sizes = [32, 32], strides = [1, 1]} : vector<32x128xf32> to vector<32x32xf32>
    %171 = vector.shape_cast %170 : vector<32x32xf32> to vector<2x16x32xf32>
    %172 = vector.extract_strided_slice %158 {offsets = [0, 64], sizes = [32, 32], strides = [1, 1]} : vector<32x128xf32> to vector<32x32xf32>
    %173 = vector.shape_cast %172 : vector<32x32xf32> to vector<2x16x32xf32>
    "tpu.trace_start"() <{level = 10 : i32, message = "btd,bsd->bts"}> : () -> ()
    %cst_73 = arith.constant dense<0.000000e+00> : vector<2x16x16xf32>
    %174 = tpu.matmul %171, %173, %cst_73 {dimension_numbers = #tpu.dot_dimension_numbers<[2], [2], [1], [1], [0, 0, 0, 1, 1, 1], [0], [0]>} : vector<2x16x32xf32>, vector<2x16x32xf32>, vector<2x16x16xf32> -> vector<2x16x16xf32>
    "tpu.trace_stop"() : () -> ()
    %175 = vector.extract_strided_slice %157 {offsets = [0, 96], sizes = [32, 32], strides = [1, 1]} : vector<32x128xf32> to vector<32x32xf32>
    %176 = vector.shape_cast %175 : vector<32x32xf32> to vector<2x16x32xf32>
    %177 = vector.extract_strided_slice %158 {offsets = [0, 96], sizes = [32, 32], strides = [1, 1]} : vector<32x128xf32> to vector<32x32xf32>
    %178 = vector.shape_cast %177 : vector<32x32xf32> to vector<2x16x32xf32>
    "tpu.trace_start"() <{level = 10 : i32, message = "btd,bsd->bts"}> : () -> ()
    %cst_74 = arith.constant dense<0.000000e+00> : vector<2x16x16xf32>
    %179 = tpu.matmul %176, %178, %cst_74 {dimension_numbers = #tpu.dot_dimension_numbers<[2], [2], [1], [1], [0, 0, 0, 1, 1, 1], [0], [0]>} : vector<2x16x32xf32>, vector<2x16x32xf32>, vector<2x16x16xf32> -> vector<2x16x16xf32>
    "tpu.trace_stop"() : () -> ()
    %180 = tpu.concatenate %164, %169, %174, %179 in 0 : vector<2x16x16xf32>, vector<2x16x16xf32>, vector<2x16x16xf32>, vector<2x16x16xf32> -> vector<8x16x16xf32>
    %181 = arith.addf %180, %9 : vector<8x16x16xf32>
    %cst_75 = arith.constant dense<0xFF800000> : vector<8x16xf32>
    %182 = vector.multi_reduction <maximumf>, %181, %cst_75 [2] : vector<8x16x16xf32> to vector<8x16xf32>
    %183 = vector.shape_cast %182 : vector<8x16xf32> to vector<8x16x1xf32>
    %184 = vector.broadcast %183 : vector<8x16x1xf32> to vector<8x16x16xf32>
    %185 = arith.subf %181, %184 : vector<8x16x16xf32>
    %186 = math.exp %185 : vector<8x16x16xf32>
    %cst_76 = arith.constant dense<0.000000e+00> : vector<8x16xf32>
    %187 = vector.multi_reduction <add>, %186, %cst_76 [2] : vector<8x16x16xf32> to vector<8x16xf32>
    %188 = vector.shape_cast %187 : vector<8x16xf32> to vector<8x16x1xf32>
    %189 = tpu.reciprocal %188 : vector<8x16x1xf32> -> vector<8x16x1xf32>
    %190 = vector.broadcast %189 : vector<8x16x1xf32> to vector<8x16x16xf32>
    %191 = arith.mulf %186, %190 : vector<8x16x16xf32>
    %192 = vector.extract_strided_slice %159 {offsets = [0, 0], sizes = [32, 32], strides = [1, 1]} : vector<32x128xf32> to vector<32x32xf32>
    %193 = vector.shape_cast %192 : vector<32x32xf32> to vector<2x16x32xf32>
    %194 = vector.extract_strided_slice %191 {offsets = [0, 0, 0], sizes = [2, 16, 16], strides = [1, 1, 1]} : vector<8x16x16xf32> to vector<2x16x16xf32>
    "tpu.trace_start"() <{level = 10 : i32, message = "bts,bsd->btd"}> : () -> ()
    %cst_77 = arith.constant dense<0.000000e+00> : vector<2x16x32xf32>
    %195 = tpu.matmul %194, %193, %cst_77 {dimension_numbers = #tpu.dot_dimension_numbers<[2], [1], [1], [2], [0, 0, 0, 1, 1, 2], [0], [0]>} : vector<2x16x16xf32>, vector<2x16x32xf32>, vector<2x16x32xf32> -> vector<2x16x32xf32>
    "tpu.trace_stop"() : () -> ()
    %196 = vector.shape_cast %195 : vector<2x16x32xf32> to vector<32x32xf32>
    %197 = vector.extract_strided_slice %159 {offsets = [0, 32], sizes = [32, 32], strides = [1, 1]} : vector<32x128xf32> to vector<32x32xf32>
    %198 = vector.shape_cast %197 : vector<32x32xf32> to vector<2x16x32xf32>
    %199 = vector.extract_strided_slice %191 {offsets = [2, 0, 0], sizes = [2, 16, 16], strides = [1, 1, 1]} : vector<8x16x16xf32> to vector<2x16x16xf32>
    "tpu.trace_start"() <{level = 10 : i32, message = "bts,bsd->btd"}> : () -> ()
    %cst_78 = arith.constant dense<0.000000e+00> : vector<2x16x32xf32>
    %200 = tpu.matmul %199, %198, %cst_78 {dimension_numbers = #tpu.dot_dimension_numbers<[2], [1], [1], [2], [0, 0, 0, 1, 1, 2], [0], [0]>} : vector<2x16x16xf32>, vector<2x16x32xf32>, vector<2x16x32xf32> -> vector<2x16x32xf32>
    "tpu.trace_stop"() : () -> ()
    %201 = vector.shape_cast %200 : vector<2x16x32xf32> to vector<32x32xf32>
    %202 = vector.extract_strided_slice %159 {offsets = [0, 64], sizes = [32, 32], strides = [1, 1]} : vector<32x128xf32> to vector<32x32xf32>
    %203 = vector.shape_cast %202 : vector<32x32xf32> to vector<2x16x32xf32>
    %204 = vector.extract_strided_slice %191 {offsets = [4, 0, 0], sizes = [2, 16, 16], strides = [1, 1, 1]} : vector<8x16x16xf32> to vector<2x16x16xf32>
    "tpu.trace_start"() <{level = 10 : i32, message = "bts,bsd->btd"}> : () -> ()
    %cst_79 = arith.constant dense<0.000000e+00> : vector<2x16x32xf32>
    %205 = tpu.matmul %204, %203, %cst_79 {dimension_numbers = #tpu.dot_dimension_numbers<[2], [1], [1], [2], [0, 0, 0, 1, 1, 2], [0], [0]>} : vector<2x16x16xf32>, vector<2x16x32xf32>, vector<2x16x32xf32> -> vector<2x16x32xf32>
    "tpu.trace_stop"() : () -> ()
    %206 = vector.shape_cast %205 : vector<2x16x32xf32> to vector<32x32xf32>
    %207 = vector.extract_strided_slice %159 {offsets = [0, 96], sizes = [32, 32], strides = [1, 1]} : vector<32x128xf32> to vector<32x32xf32>
    %208 = vector.shape_cast %207 : vector<32x32xf32> to vector<2x16x32xf32>
    %209 = vector.extract_strided_slice %191 {offsets = [6, 0, 0], sizes = [2, 16, 16], strides = [1, 1, 1]} : vector<8x16x16xf32> to vector<2x16x16xf32>
    "tpu.trace_start"() <{level = 10 : i32, message = "bts,bsd->btd"}> : () -> ()
    %cst_80 = arith.constant dense<0.000000e+00> : vector<2x16x32xf32>
    %210 = tpu.matmul %209, %208, %cst_80 {dimension_numbers = #tpu.dot_dimension_numbers<[2], [1], [1], [2], [0, 0, 0, 1, 1, 2], [0], [0]>} : vector<2x16x16xf32>, vector<2x16x32xf32>, vector<2x16x32xf32> -> vector<2x16x32xf32>
    "tpu.trace_stop"() : () -> ()
    %211 = vector.shape_cast %210 : vector<2x16x32xf32> to vector<32x32xf32>
    %212 = tpu.concatenate %196, %201, %206, %211 in 1 : vector<32x32xf32>, vector<32x32xf32>, vector<32x32xf32>, vector<32x32xf32> -> vector<32x128xf32>
    %c1_81 = arith.constant 1 : index
    %c0_82 = arith.constant 0 : index
    %c0_83 = arith.constant 0 : index
    %213 = vector.load %arg3[%c1_81, %c0_82, %c0_83] : memref<2x128x128xf32, #tpu.memory_space<vmem>>, vector<1x128x128xf32>
    %214 = vector.shape_cast %213 : vector<1x128x128xf32> to vector<128x128xf32>
    %cst_84 = arith.constant dense<0.000000e+00> : vector<32x128xf32>
    %215 = tpu.matmul %212, %214, %cst_84 {dimension_numbers = #tpu.dot_dimension_numbers<[1], [0], [0], [1], [0, 0, 1, 1], [], []>} : vector<32x128xf32>, vector<128x128xf32>, vector<32x128xf32> -> vector<32x128xf32>
    %c1_85 = arith.constant 1 : index
    %c0_86 = arith.constant 0 : index
    %c0_87 = arith.constant 0 : index
    %216 = vector.load %arg4[%c1_85, %c0_86, %c0_87] : memref<2x1x128xf32, #tpu.memory_space<vmem>>, vector<1x1x128xf32>
    %217 = vector.shape_cast %216 : vector<1x1x128xf32> to vector<1x128xf32>
    %218 = vector.broadcast %217 : vector<1x128xf32> to vector<32x128xf32>
    %219 = arith.addf %215, %218 : vector<32x128xf32>
    %220 = arith.addf %149, %219 : vector<32x128xf32>
    %c1_88 = arith.constant 1 : index
    %c0_89 = arith.constant 0 : index
    %c0_90 = arith.constant 0 : index
    %221 = vector.load %arg5[%c1_88, %c0_89, %c0_90] : memref<2x1x128xf32, #tpu.memory_space<vmem>>, vector<1x1x128xf32>
    %222 = vector.shape_cast %221 : vector<1x1x128xf32> to vector<1x128xf32>
    %c1_91 = arith.constant 1 : index
    %c0_92 = arith.constant 0 : index
    %c0_93 = arith.constant 0 : index
    %223 = vector.load %arg6[%c1_91, %c0_92, %c0_93] : memref<2x1x128xf32, #tpu.memory_space<vmem>>, vector<1x1x128xf32>
    %224 = vector.shape_cast %223 : vector<1x1x128xf32> to vector<1x128xf32>
    %cst_94 = arith.constant dense<0.000000e+00> : vector<32xf32>
    %225 = vector.multi_reduction <add>, %220, %cst_94 [1] : vector<32x128xf32> to vector<32xf32>
    %226 = vector.shape_cast %225 : vector<32xf32> to vector<32x1xf32>
    %cst_95 = arith.constant 1.280000e+02 : f32
    %227 = vector.broadcast %cst_95 : f32 to vector<32x1xf32>
    %228 = arith.divf %226, %227 : vector<32x1xf32>
    %229 = arith.mulf %220, %220 : vector<32x128xf32>
    %cst_96 = arith.constant dense<0.000000e+00> : vector<32xf32>
    %230 = vector.multi_reduction <add>, %229, %cst_96 [1] : vector<32x128xf32> to vector<32xf32>
    %231 = vector.shape_cast %230 : vector<32xf32> to vector<32x1xf32>
    %cst_97 = arith.constant 1.280000e+02 : f32
    %232 = vector.broadcast %cst_97 : f32 to vector<32x1xf32>
    %233 = arith.divf %231, %232 : vector<32x1xf32>
    %234 = arith.mulf %228, %228 : vector<32x1xf32>
    %235 = arith.subf %233, %234 : vector<32x1xf32>
    %236 = vector.broadcast %228 : vector<32x1xf32> to vector<32x128xf32>
    %237 = arith.subf %220, %236 : vector<32x128xf32>
    %cst_98 = arith.constant 9.99999974E-6 : f32
    %238 = vector.broadcast %cst_98 : f32 to vector<32x1xf32>
    %239 = arith.addf %235, %238 : vector<32x1xf32>
    %240 = math.rsqrt %239 : vector<32x1xf32>
    %241 = vector.broadcast %240 : vector<32x1xf32> to vector<32x128xf32>
    %242 = arith.mulf %237, %241 : vector<32x128xf32>
    %243 = vector.broadcast %222 : vector<1x128xf32> to vector<32x128xf32>
    %244 = arith.mulf %242, %243 : vector<32x128xf32>
    %245 = vector.broadcast %224 : vector<1x128xf32> to vector<32x128xf32>
    %246 = arith.addf %244, %245 : vector<32x128xf32>
    %c1_99 = arith.constant 1 : index
    %c0_100 = arith.constant 0 : index
    %c0_101 = arith.constant 0 : index
    %247 = vector.load %arg9[%c1_99, %c0_100, %c0_101] : memref<2x128x256xf32, #tpu.memory_space<vmem>>, vector<1x128x256xf32>
    %248 = vector.shape_cast %247 : vector<1x128x256xf32> to vector<128x256xf32>
    %cst_102 = arith.constant dense<0.000000e+00> : vector<32x256xf32>
    %249 = tpu.matmul %246, %248, %cst_102 {dimension_numbers = #tpu.dot_dimension_numbers<[1], [0], [0], [1], [0, 0, 1, 1], [], []>} : vector<32x128xf32>, vector<128x256xf32>, vector<32x256xf32> -> vector<32x256xf32>
    %c1_103 = arith.constant 1 : index
    %c0_104 = arith.constant 0 : index
    %c0_105 = arith.constant 0 : index
    %250 = vector.load %arg10[%c1_103, %c0_104, %c0_105] : memref<2x1x256xf32, #tpu.memory_space<vmem>>, vector<1x1x256xf32>
    %251 = vector.shape_cast %250 : vector<1x1x256xf32> to vector<1x256xf32>
    %252 = vector.broadcast %251 : vector<1x256xf32> to vector<32x256xf32>
    %253 = arith.addf %249, %252 : vector<32x256xf32>
    %cst_106 = arith.constant 0.000000e+00 : f32
    %254 = vector.broadcast %cst_106 : f32 to vector<32x256xf32>
    %255 = arith.maximumf %253, %254 : vector<32x256xf32>
    %c1_107 = arith.constant 1 : index
    %c0_108 = arith.constant 0 : index
    %c0_109 = arith.constant 0 : index
    %256 = vector.load %arg11[%c1_107, %c0_108, %c0_109] : memref<2x256x128xf32, #tpu.memory_space<vmem>>, vector<1x256x128xf32>
    %257 = vector.shape_cast %256 : vector<1x256x128xf32> to vector<256x128xf32>
    %cst_110 = arith.constant dense<0.000000e+00> : vector<32x128xf32>
    %258 = tpu.matmul %255, %257, %cst_110 {dimension_numbers = #tpu.dot_dimension_numbers<[1], [0], [0], [1], [0, 0, 1, 1], [], []>} : vector<32x256xf32>, vector<256x128xf32>, vector<32x128xf32> -> vector<32x128xf32>
    %c1_111 = arith.constant 1 : index
    %c0_112 = arith.constant 0 : index
    %c0_113 = arith.constant 0 : index
    %259 = vector.load %arg12[%c1_111, %c0_112, %c0_113] : memref<2x1x128xf32, #tpu.memory_space<vmem>>, vector<1x1x128xf32>
    %260 = vector.shape_cast %259 : vector<1x1x128xf32> to vector<1x128xf32>
    %261 = vector.broadcast %260 : vector<1x128xf32> to vector<32x128xf32>
    %262 = arith.addf %258, %261 : vector<32x128xf32>
    %263 = arith.addf %246, %262 : vector<32x128xf32>
    %c1_114 = arith.constant 1 : index
    %c0_115 = arith.constant 0 : index
    %c0_116 = arith.constant 0 : index
    %264 = vector.load %arg7[%c1_114, %c0_115, %c0_116] : memref<2x1x128xf32, #tpu.memory_space<vmem>>, vector<1x1x128xf32>
    %265 = vector.shape_cast %264 : vector<1x1x128xf32> to vector<1x128xf32>
    %c1_117 = arith.constant 1 : index
    %c0_118 = arith.constant 0 : index
    %c0_119 = arith.constant 0 : index
    %266 = vector.load %arg8[%c1_117, %c0_118, %c0_119] : memref<2x1x128xf32, #tpu.memory_space<vmem>>, vector<1x1x128xf32>
    %267 = vector.shape_cast %266 : vector<1x1x128xf32> to vector<1x128xf32>
    %cst_120 = arith.constant dense<0.000000e+00> : vector<32xf32>
    %268 = vector.multi_reduction <add>, %263, %cst_120 [1] : vector<32x128xf32> to vector<32xf32>
    %269 = vector.shape_cast %268 : vector<32xf32> to vector<32x1xf32>
    %cst_121 = arith.constant 1.280000e+02 : f32
    %270 = vector.broadcast %cst_121 : f32 to vector<32x1xf32>
    %271 = arith.divf %269, %270 : vector<32x1xf32>
    %272 = arith.mulf %263, %263 : vector<32x128xf32>
    %cst_122 = arith.constant dense<0.000000e+00> : vector<32xf32>
    %273 = vector.multi_reduction <add>, %272, %cst_122 [1] : vector<32x128xf32> to vector<32xf32>
    %274 = vector.shape_cast %273 : vector<32xf32> to vector<32x1xf32>
    %cst_123 = arith.constant 1.280000e+02 : f32
    %275 = vector.broadcast %cst_123 : f32 to vector<32x1xf32>
    %276 = arith.divf %274, %275 : vector<32x1xf32>
    %277 = arith.mulf %271, %271 : vector<32x1xf32>
    %278 = arith.subf %276, %277 : vector<32x1xf32>
    %279 = vector.broadcast %271 : vector<32x1xf32> to vector<32x128xf32>
    %280 = arith.subf %263, %279 : vector<32x128xf32>
    %cst_124 = arith.constant 9.99999974E-6 : f32
    %281 = vector.broadcast %cst_124 : f32 to vector<32x1xf32>
    %282 = arith.addf %278, %281 : vector<32x1xf32>
    %283 = math.rsqrt %282 : vector<32x1xf32>
    %284 = vector.broadcast %283 : vector<32x1xf32> to vector<32x128xf32>
    %285 = arith.mulf %280, %284 : vector<32x128xf32>
    %286 = vector.broadcast %265 : vector<1x128xf32> to vector<32x128xf32>
    %287 = arith.mulf %285, %286 : vector<32x128xf32>
    %288 = vector.broadcast %267 : vector<1x128xf32> to vector<32x128xf32>
    %289 = arith.addf %287, %288 : vector<32x128xf32>
    %cst_125 = arith.constant 0.000000e+00 : f32
    %290 = vector.broadcast %cst_125 : f32 to vector<2x640xf32>
    %c0_126 = arith.constant 0 : index
    %c128 = arith.constant 128 : index
    %291 = vector.load %arg13[%c0_126, %c128] : memref<2x768xf32, #tpu.memory_space<vmem>>, vector<2x640xf32>
    tpu.vector_store %arg13[%c0_126, %c128], %290 {strides = array<i32>} : memref<2x768xf32, #tpu.memory_space<vmem>>, vector<2x640xf32>,
    %292 = vector.shape_cast %289 : vector<32x128xf32> to vector<2x16x128xf32>
    %293 = vector.extract_strided_slice %292 {offsets = [0, 8, 0], sizes = [2, 1, 128], strides = [1, 1, 1]} : vector<2x16x128xf32> to vector<2x1x128xf32>
    %294 = vector.shape_cast %293 : vector<2x1x128xf32> to vector<2x128xf32>
    %c0_127 = arith.constant 0 : index
    %c0_128 = arith.constant 0 : index
    %295 = vector.load %arg13[%c0_127, %c0_128] : memref<2x768xf32, #tpu.memory_space<vmem>>, vector<2x128xf32>
    tpu.vector_store %arg13[%c0_127, %c0_128], %294 {strides = array<i32>} : memref<2x768xf32, #tpu.memory_space<vmem>>, vector<2x128xf32>,
    return
  }
}

</mosaic_0001>

<llo_original>
// kernel: tpu_custom_call.1
$region0: #{tpu_custom_call.1}
  #allocation0 [shape = 'u32[]', space=smem, size = 0x4, offset = 0x4, fixed_abs, tag = 'smem constant byte address 0x4 - core index']
  #allocation1 [shape = 'u32[72,128]{1,0:T(1,128)}', space=vmem, size = 0x9000, scoped, tag = 'internal scratch']
  %s0 = inlined_call_operand.hbm [shape: f32[2,8,128], index: 0, kind: input, shape index: {}]
  %s1 = inlined_call_operand.hbm [shape: f32[2,128,384], index: 1, kind: input, shape index: {}]
  %s2 = inlined_call_operand.hbm [shape: f32[2,1,384], index: 2, kind: input, shape index: {}]
  %s3 = inlined_call_operand.hbm [shape: f32[2,128,128], index: 3, kind: input, shape index: {}]
  %s4 = inlined_call_operand.vmem [shape: f32[2,1,128], index: 4, kind: input, shape index: {}]
  %s5 = inlined_call_operand.hbm [shape: f32[2,1,128], index: 5, kind: input, shape index: {}]
  %s6 = inlined_call_operand.hbm [shape: f32[2,1,128], index: 6, kind: input, shape index: {}]
  %s7 = inlined_call_operand.hbm [shape: f32[2,1,128], index: 7, kind: input, shape index: {}]
  %s8 = inlined_call_operand.hbm [shape: f32[2,1,128], index: 8, kind: input, shape index: {}]
  %s9 = inlined_call_operand.hbm [shape: f32[2,128,256], index: 9, kind: input, shape index: {}]
  %s10 = inlined_call_operand.vmem [shape: f32[2,1,256], index: 10, kind: input, shape index: {}]
  %s11 = inlined_call_operand.hbm [shape: f32[2,256,128], index: 11, kind: input, shape index: {}]
  %s12 = inlined_call_operand.vmem [shape: f32[2,1,128], index: 12, kind: input, shape index: {}]
  %s13 = inlined_call_operand.hbm [shape: f32[2,768], index: 13, kind: output, shape index: {}]
  %s14 = sld [smem:[#allocation0]]
  $region102: #{tpu_custom_call.1} parent=0
    _
  %s16 = ssub.s32 1, %s14
  %s17 = scalar_select 0, %s16, %s14
  $region1: #{tpu_custom_call.1} parent=0
    #allocation2 [shape = 'u8[8192]{0}', space=vmem, size = 0x2000, scoped, tag = 'input window, operand 0, single buffered']
    #allocation3 [shape = 's32[1]{0}', space=sflag, size = 0x4, scoped, tag = 'scoped memory for tpu_custom_call.1']
    #allocation4 [shape = 's32[1]{0}', space=sflag, size = 0x4, scoped, tag = 'scoped memory for tpu_custom_call.1']
    #allocation5 [shape = 'u8[393216]{0}', space=vmem, size = 0x60000, scoped, tag = 'input window, operand 1, single buffered']
    #allocation6 [shape = 's32[1]{0}', space=sflag, size = 0x4, scoped, tag = 'scoped memory for tpu_custom_call.1']
    #allocation7 [shape = 'u8[3072]{0}', space=vmem, size = 0xc00, scoped, tag = 'input window, operand 2, single buffered']
    #allocation8 [shape = 'u8[131072]{0}', space=vmem, size = 0x20000, scoped, tag = 'input window, operand 3, single buffered']
    #allocation9 [shape = 's32[1]{0}', space=sflag, size = 0x4, scoped, tag = 'scoped memory for tpu_custom_call.1']
    #allocation10 [shape = 'u8[1024]{0}', space=vmem, size = 0x400, scoped, tag = 'input window, operand 5, single buffered']
    #allocation11 [shape = 'u8[1024]{0}', space=vmem, size = 0x400, scoped, tag = 'input window, operand 6, single buffered']
    #allocation12 [shape = 's32[1]{0}', space=sflag, size = 0x4, scoped, tag = 'scoped memory for tpu_custom_call.1']
    #allocation13 [shape = 'u8[1024]{0}', space=vmem, size = 0x400, scoped, tag = 'input window, operand 7, single buffered']
    #allocation14 [shape = 'u8[1024]{0}', space=vmem, size = 0x400, scoped, tag = 'input window, operand 8, single buffered']
    #allocation15 [shape = 's32[1]{0}', space=sflag, size = 0x4, scoped, tag = 'scoped memory for tpu_custom_call.1']
    #allocation16 [shape = 'u8[262144]{0}', space=vmem, size = 0x40000, scoped, tag = 'input window, operand 9, single buffered']
    #allocation17 [shape = 'u8[262144]{0}', space=vmem, size = 0x40000, scoped, tag = 'input window, operand 11, single buffered']
    #allocation18 [shape = 's32[1]{0}', space=sflag, size = 0x4, scoped, tag = 'scoped memory for tpu_custom_call.1']
    #allocation19 [shape = 'u8[6144]{0}', space=vmem, size = 0x1800, scoped, tag = 'output window, operand 0, single buffered']
    %18 = vsyncpa [#allocation3], 0
    %19 = vsyncpa [#allocation6], 0
    %20 = vsyncpa [#allocation9], 0
    %21 = vsyncpa [#allocation12], 0
    %22 = vsyncpa [#allocation15], 0
    %23 = vsyncpa [#allocation18], 0
    %24 = vsyncpa [#allocation4], 0
    // Predicated region
    $region2: #{tpu_custom_call.1} parent=1 // pred_check
      _
    $region3: #{tpu_custom_call.1} parent=1 // pred_check_branch
      %26 = sbr.rel (0) target = $region5
    $region4: #{tpu_custom_call.1} parent=1 // pred_region
      %28 = vsyncadd [#allocation3], 0
      %s29 = sshll.u32 %s0, 4
      %s30 = int_to_ptr.hbm [resolvable:$true] %s29
      %s31 = sshll.u32 [#allocation2], 4
      %s32 = int_to_ptr.vmem [resolvable:$true] %s31
      %37 = dma.hbm_to_vmem [thread:$0]  %s30, 256, %s32, [#allocation3], 128, 128, 8
    $region5: #{tpu_custom_call.1} parent=1 // pred_fallthru
      _
    // Predicated region
    $region6: #{tpu_custom_call.1} parent=1 // pred_check
      _
    $region7: #{tpu_custom_call.1} parent=1 // pred_check_branch
      %39 = sbr.rel (0) target = $region9
    $region8: #{tpu_custom_call.1} parent=1 // pred_region
      %41 = vsyncadd [#allocation6], 0
      %s42 = sshll.u32 %s1, 4
      %s43 = int_to_ptr.hbm [resolvable:$true] %s42
      %s44 = sshll.u32 [#allocation5], 4
      %s45 = int_to_ptr.vmem [resolvable:$true] %s44
      %50 = dma.hbm_to_vmem [thread:$0]  %s43, 12288, %s45, [#allocation6], 384, 384, 24
    $region9: #{tpu_custom_call.1} parent=1 // pred_fallthru
      _
    // Predicated region
    $region10: #{tpu_custom_call.1} parent=1 // pred_check
      _
    $region11: #{tpu_custom_call.1} parent=1 // pred_check_branch
      %52 = sbr.rel (0) target = $region13
    $region12: #{tpu_custom_call.1} parent=1 // pred_region
      %54 = vsyncadd [#allocation6], 0
      %s55 = sshll.u32 %s2, 4
      %s56 = int_to_ptr.hbm [resolvable:$true] %s55
      %s57 = sshll.u32 [#allocation7], 4
      %s58 = int_to_ptr.vmem [resolvable:$true] %s57
      %63 = dma.hbm_to_vmem [thread:$0]  %s56, 96, %s58, [#allocation6], 48, 48, 3
    $region13: #{tpu_custom_call.1} parent=1 // pred_fallthru
      _
    // Predicated region
    $region14: #{tpu_custom_call.1} parent=1 // pred_check
      _
    $region15: #{tpu_custom_call.1} parent=1 // pred_check_branch
      %65 = sbr.rel (0) target = $region17
    $region16: #{tpu_custom_call.1} parent=1 // pred_region
      %67 = vsyncadd [#allocation9], 0
      %s68 = sshll.u32 %s3, 4
      %s69 = int_to_ptr.hbm [resolvable:$true] %s68
      %s70 = sshll.u32 [#allocation8], 4
      %s71 = int_to_ptr.vmem [resolvable:$true] %s70
      %76 = dma.hbm_to_vmem [thread:$0]  %s69, 4096, %s71, [#allocation9], 128, 128, 8
    $region17: #{tpu_custom_call.1} parent=1 // pred_fallthru
      _
    // Predicated region
    $region18: #{tpu_custom_call.1} parent=1 // pred_check
      _
    $region19: #{tpu_custom_call.1} parent=1 // pred_check_branch
      %78 = sbr.rel (0) target = $region21
    $region20: #{tpu_custom_call.1} parent=1 // pred_region
      _
    $region21: #{tpu_custom_call.1} parent=1 // pred_fallthru
      _
    // Predicated region
    $region22: #{tpu_custom_call.1} parent=1 // pred_check
      _
    $region23: #{tpu_custom_call.1} parent=1 // pred_check_branch
      %80 = sbr.rel (0) target = $region25
    $region24: #{tpu_custom_call.1} parent=1 // pred_region
      %82 = vsyncadd [#allocation9], 0
      %s83 = sshll.u32 %s5, 4
      %s84 = int_to_ptr.hbm [resolvable:$true] %s83
      %s85 = sshll.u32 [#allocation10], 4
      %s86 = int_to_ptr.vmem [resolvable:$true] %s85
      %91 = dma.hbm_to_vmem [thread:$0]  %s84, 32, %s86, [#allocation9], 16, 16, 1
    $region25: #{tpu_custom_call.1} parent=1 // pred_fallthru
      _
    // Predicated region
    $region26: #{tpu_custom_call.1} parent=1 // pred_check
      _
    $region27: #{tpu_custom_call.1} parent=1 // pred_check_branch
      %93 = sbr.rel (0) target = $region29
    $region28: #{tpu_custom_call.1} parent=1 // pred_region
      %95 = vsyncadd [#allocation12], 0
      %s96 = sshll.u32 %s6, 4
      %s97 = int_to_ptr.hbm [resolvable:$true] %s96
      %s98 = sshll.u32 [#allocation11], 4
      %s99 = int_to_ptr.vmem [resolvable:$true] %s98
      %104 = dma.hbm_to_vmem [thread:$0]  %s97, 32, %s99, [#allocation12], 16, 16, 1
    $region29: #{tpu_custom_call.1} parent=1 // pred_fallthru
      _
    // Predicated region
    $region30: #{tpu_custom_call.1} parent=1 // pred_check
      _
    $region31: #{tpu_custom_call.1} parent=1 // pred_check_branch
      %106 = sbr.rel (0) target = $region33
    $region32: #{tpu_custom_call.1} parent=1 // pred_region
      %108 = vsyncadd [#allocation12], 0
      %s109 = sshll.u32 %s7, 4
      %s110 = int_to_ptr.hbm [resolvable:$true] %s109
      %s111 = sshll.u32 [#allocation13], 4
      %s112 = int_to_ptr.vmem [resolvable:$true] %s111
      %117 = dma.hbm_to_vmem [thread:$0]  %s110, 32, %s112, [#allocation12], 16, 16, 1
    $region33: #{tpu_custom_call.1} parent=1 // pred_fallthru
      _
    // Predicated region
    $region34: #{tpu_custom_call.1} parent=1 // pred_check
      _
    $region35: #{tpu_custom_call.1} parent=1 // pred_check_branch
      %119 = sbr.rel (0) target = $region37
    $region36: #{tpu_custom_call.1} parent=1 // pred_region
      %121 = vsyncadd [#allocation15], 0
      %s122 = sshll.u32 %s8, 4
      %s123 = int_to_ptr.hbm [resolvable:$true] %s122
      %s124 = sshll.u32 [#allocation14], 4
      %s125 = int_to_ptr.vmem [resolvable:$true] %s124
      %130 = dma.hbm_to_vmem [thread:$0]  %s123, 32, %s125, [#allocation15], 16, 16, 1
    $region37: #{tpu_custom_call.1} parent=1 // pred_fallthru
      _
    // Predicated region
    $region38: #{tpu_custom_call.1} parent=1 // pred_check
      _
    $region39: #{tpu_custom_call.1} parent=1 // pred_check_branch
      %132 = sbr.rel (0) target = $region41
    $region40: #{tpu_custom_call.1} parent=1 // pred_region
      %134 = vsyncadd [#allocation15], 0
      %s135 = sshll.u32 %s9, 4
      %s136 = int_to_ptr.hbm [resolvable:$true] %s135
      %s137 = sshll.u32 [#allocation16], 4
      %s138 = int_to_ptr.vmem [resolvable:$true] %s137
      %143 = dma.hbm_to_vmem [thread:$0]  %s136, 8192, %s138, [#allocation15], 256, 256, 16
    $region41: #{tpu_custom_call.1} parent=1 // pred_fallthru
      _
    // Predicated region
    $region42: #{tpu_custom_call.1} parent=1 // pred_check
      _
    $region43: #{tpu_custom_call.1} parent=1 // pred_check_branch
      %145 = sbr.rel (0) target = $region45
    $region44: #{tpu_custom_call.1} parent=1 // pred_region
      _
    $region45: #{tpu_custom_call.1} parent=1 // pred_fallthru
      _
    // Predicated region
    $region46: #{tpu_custom_call.1} parent=1 // pred_check
      _
    $region47: #{tpu_custom_call.1} parent=1 // pred_check_branch
      %147 = sbr.rel (0) target = $region49
    $region48: #{tpu_custom_call.1} parent=1 // pred_region
      %149 = vsyncadd [#allocation18], 0
      %s150 = sshll.u32 %s11, 4
      %s151 = int_to_ptr.hbm [resolvable:$true] %s150
      %s152 = sshll.u32 [#allocation17], 4
      %s153 = int_to_ptr.vmem [resolvable:$true] %s152
      %158 = dma.hbm_to_vmem [thread:$0]  %s151, 8192, %s153, [#allocation18], 128, 128, 8
    $region49: #{tpu_custom_call.1} parent=1 // pred_fallthru
      _
    // Predicated region
    $region50: #{tpu_custom_call.1} parent=1 // pred_check
      _
    $region51: #{tpu_custom_call.1} parent=1 // pred_check_branch
      %160 = sbr.rel (0) target = $region53
    $region52: #{tpu_custom_call.1} parent=1 // pred_region
      _
    $region53: #{tpu_custom_call.1} parent=1 // pred_fallthru
      _
    // Predicated region
    $region54: #{tpu_custom_call.1} parent=1 // pred_check
      _
    $region55: #{tpu_custom_call.1} parent=1 // pred_check_branch
      %162 = sbr.rel (0) target = $region57
    $region56: #{tpu_custom_call.1} parent=1 // pred_region
      %164 = dma.done [#allocation3], 256
    $region57: #{tpu_custom_call.1} parent=1 // pred_fallthru
      _
    // Predicated region
    $region58: #{tpu_custom_call.1} parent=1 // pred_check
      _
    $region59: #{tpu_custom_call.1} parent=1 // pred_check_branch
      %166 = sbr.rel (0) target = $region61
    $region60: #{tpu_custom_call.1} parent=1 // pred_region
      %168 = dma.done [#allocation6], 12288
    $region61: #{tpu_custom_call.1} parent=1 // pred_fallthru
      _
    // Predicated region
    $region62: #{tpu_custom_call.1} parent=1 // pred_check
      _
    $region63: #{tpu_custom_call.1} parent=1 // pred_check_branch
      %170 = sbr.rel (0) target = $region65
    $region64: #{tpu_custom_call.1} parent=1 // pred_region
      %172 = dma.done [#allocation6], 96
    $region65: #{tpu_custom_call.1} parent=1 // pred_fallthru
      _
    // Predicated region
    $region66: #{tpu_custom_call.1} parent=1 // pred_check
      _
    $region67: #{tpu_custom_call.1} parent=1 // pred_check_branch
      %174 = sbr.rel (0) target = $region69
    $region68: #{tpu_custom_call.1} parent=1 // pred_region
      %176 = dma.done [#allocation9], 4096
    $region69: #{tpu_custom_call.1} parent=1 // pred_fallthru
      _
    // Predicated region
    $region70: #{tpu_custom_call.1} parent=1 // pred_check
      _
    $region71: #{tpu_custom_call.1} parent=1 // pred_check_branch
      %178 = sbr.rel (0) target = $region73
    $region72: #{tpu_custom_call.1} parent=1 // pred_region
      %180 = dma.done [#allocation9], 32
    $region73: #{tpu_custom_call.1} parent=1 // pred_fallthru
      _
    // Predicated region
    $region74: #{tpu_custom_call.1} parent=1 // pred_check
      _
    $region75: #{tpu_custom_call.1} parent=1 // pred_check_branch
      %182 = sbr.rel (0) target = $region77
    $region76: #{tpu_custom_call.1} parent=1 // pred_region
      %184 = dma.done [#allocation12], 32
    $region77: #{tpu_custom_call.1} parent=1 // pred_fallthru
      _
    // Predicated region
    $region78: #{tpu_custom_call.1} parent=1 // pred_check
      _
    $region79: #{tpu_custom_call.1} parent=1 // pred_check_branch
      %186 = sbr.rel (0) target = $region81
    $region80: #{tpu_custom_call.1} parent=1 // pred_region
      %188 = dma.done [#allocation12], 32
    $region81: #{tpu_custom_call.1} parent=1 // pred_fallthru
      _
    // Predicated region
    $region82: #{tpu_custom_call.1} parent=1 // pred_check
      _
    $region83: #{tpu_custom_call.1} parent=1 // pred_check_branch
      %190 = sbr.rel (0) target = $region85
    $region84: #{tpu_custom_call.1} parent=1 // pred_region
      %192 = dma.done [#allocation15], 32
    $region85: #{tpu_custom_call.1} parent=1 // pred_fallthru
      _
    // Predicated region
    $region86: #{tpu_custom_call.1} parent=1 // pred_check
      _
    $region87: #{tpu_custom_call.1} parent=1 // pred_check_branch
      %194 = sbr.rel (0) target = $region89
    $region88: #{tpu_custom_call.1} parent=1 // pred_region
      %196 = dma.done [#allocation15], 8192
    $region89: #{tpu_custom_call.1} parent=1 // pred_fallthru
      _
    // Predicated region
    $region90: #{tpu_custom_call.1} parent=1 // pred_check
      _
    $region91: #{tpu_custom_call.1} parent=1 // pred_check_branch
      %198 = sbr.rel (0) target = $region93
    $region92: #{tpu_custom_call.1} parent=1 // pred_region
      %200 = dma.done [#allocation18], 8192
    $region93: #{tpu_custom_call.1} parent=1 // pred_fallthru
      _
    %v201 = vld [vmem:[#allocation2] sm:$0xff]
    %v202 = vld [vmem:[#allocation2 + $0x8] sm:$0xff]
    %v203 = vlaneseq
    %v204 = vand.u32 %v203, 127
    %vm205 = vcmp.lt.s32.totalorder %v204, 9
    %v206 = vsel %vm205, 0.0, -1e+09
    %v207 = vld [vmem:[#allocation5] sm:$0xff]
    %v208 = vld [vmem:[#allocation5 + $0x8] sm:$0xff]
    %v209 = vld [vmem:[#allocation5 + $0x10] sm:$0xff]
    %v210 = vld [vmem:[#allocation5 + $0x18] sm:$0xff]
    %v211 = vld [vmem:[#allocation5 + $0x20] sm:$0xff]
    %v212 = vld [vmem:[#allocation5 + $0x28] sm:$0xff]
    %v213 = vld [vmem:[#allocation5 + $0x30] sm:$0xff]
    %v214 = vld [vmem:[#allocation5 + $0x38] sm:$0xff]
    %v215 = vld [vmem:[#allocation5 + $0x40] sm:$0xff]
    %v216 = vld [vmem:[#allocation5 + $0x48] sm:$0xff]
    %v217 = vld [vmem:[#allocation5 + $0x50] sm:$0xff]
    %v218 = vld [vmem:[#allocation5 + $0x58] sm:$0xff]
    %v219 = vld [vmem:[#allocation5 + $0x60] sm:$0xff]
    %v220 = vld [vmem:[#allocation5 + $0x68] sm:$0xff]
    %v221 = vld [vmem:[#allocation5 + $0x70] sm:$0xff]
    %v222 = vld [vmem:[#allocation5 + $0x78] sm:$0xff]
    %v223 = vld [vmem:[#allocation5 + $0x80] sm:$0xff]
    %v224 = vld [vmem:[#allocation5 + $0x88] sm:$0xff]
    %v225 = vld [vmem:[#allocation5 + $0x90] sm:$0xff]
    %v226 = vld [vmem:[#allocation5 + $0x98] sm:$0xff]
    %v227 = vld [vmem:[#allocation5 + $0xa0] sm:$0xff]
    %v228 = vld [vmem:[#allocation5 + $0xa8] sm:$0xff]
    %v229 = vld [vmem:[#allocation5 + $0xb0] sm:$0xff]
    %v230 = vld [vmem:[#allocation5 + $0xb8] sm:$0xff]
    %v231 = vld [vmem:[#allocation5 + $0xc0] sm:$0xff]
    %v232 = vld [vmem:[#allocation5 + $0xc8] sm:$0xff]
    %v233 = vld [vmem:[#allocation5 + $0xd0] sm:$0xff]
    %v234 = vld [vmem:[#allocation5 + $0xd8] sm:$0xff]
    %v235 = vld [vmem:[#allocation5 + $0xe0] sm:$0xff]
    %v236 = vld [vmem:[#allocation5 + $0xe8] sm:$0xff]
    %v237 = vld [vmem:[#allocation5 + $0xf0] sm:$0xff]
    %v238 = vld [vmem:[#allocation5 + $0xf8] sm:$0xff]
    %v239 = vld [vmem:[#allocation5 + $0x100] sm:$0xff]
    %v240 = vld [vmem:[#allocation5 + $0x108] sm:$0xff]
    %v241 = vld [vmem:[#allocation5 + $0x110] sm:$0xff]
    %v242 = vld [vmem:[#allocation5 + $0x118] sm:$0xff]
    %v243 = vld [vmem:[#allocation5 + $0x120] sm:$0xff]
    %v244 = vld [vmem:[#allocation5 + $0x128] sm:$0xff]
    %v245 = vld [vmem:[#allocation5 + $0x130] sm:$0xff]
    %v246 = vld [vmem:[#allocation5 + $0x138] sm:$0xff]
    %v247 = vld [vmem:[#allocation5 + $0x140] sm:$0xff]
    %v248 = vld [vmem:[#allocation5 + $0x148] sm:$0xff]
    %v249 = vld [vmem:[#allocation5 + $0x150] sm:$0xff]
    %v250 = vld [vmem:[#allocation5 + $0x158] sm:$0xff]
    %v251 = vld [vmem:[#allocation5 + $0x160] sm:$0xff]
    %v252 = vld [vmem:[#allocation5 + $0x168] sm:$0xff]
    %v253 = vld [vmem:[#allocation5 + $0x170] sm:$0xff]
    %v254 = vld [vmem:[#allocation5 + $0x178] sm:$0xff]
    %v255 = vld [vmem:[#allocation7] sm:$0x7]
    %v257 = vperm.slane %v255, 0
    %v258 = vperm.slane %v255, 1
    %v259 = vperm.slane %v255, 2
    %263 = vmatpush.msra.mxu0 %v252
    %264 = vmatpush.msra.mxu0 %v249
    %265 = vmatpush.msra.mxu0 %v246
    %266 = vmatpush.msra.mxu0 %v243
    %267 = vmatpush.msra.mxu0 %v240
    %268 = vmatpush.msra.mxu0 %v237
    %269 = vmatpush.msra.mxu0 %v234
    %270 = vmatpush.msra.mxu0 %v231
    %271 = vmatpush.msra.mxu0 %v228
    %272 = vmatpush.msra.mxu0 %v225
    %273 = vmatpush.msra.mxu0 %v222
    %274 = vmatpush.msra.mxu0 %v219
    %275 = vmatpush.msra.mxu0 %v216
    %276 = vmatpush.msra.mxu0 %v213
    %277 = vmatpush.msra.mxu0 %v210
    %278 = vmatpush.msra.mxu0 %v207
    %279 = vmatmul.f32.gmra.mxu0 %v201
    %v280 = vpop.f32.mrf.mxu0
    %v281 = vadd.f32 %v257, %v280
    %282 = vmatmul.f32.gmra.mxu0 0.0
    %v283 = vpop.f32.mrf.mxu0
    %v284 = vadd.f32 %v257, %v283
    %285 = vmatmul.f32.gmra.mxu0 %v202
    %v286 = vpop.f32.mrf.mxu0
    %v287 = vadd.f32 %v257, %v286
    %288 = vmatmul.f32.gmra.mxu0 0.0
    %v289 = vpop.f32.mrf.mxu0
    %v290 = vadd.f32 %v257, %v289
    %291 = vdwg.mxu0
    %292 = vmatpush.msra.mxu0 %v253
    %293 = vmatpush.msra.mxu0 %v250
    %294 = vmatpush.msra.mxu0 %v247
    %295 = vmatpush.msra.mxu0 %v244
    %296 = vmatpush.msra.mxu0 %v241
    %297 = vmatpush.msra.mxu0 %v238
    %298 = vmatpush.msra.mxu0 %v235
    %299 = vmatpush.msra.mxu0 %v232
    %300 = vmatpush.msra.mxu0 %v229
    %301 = vmatpush.msra.mxu0 %v226
    %302 = vmatpush.msra.mxu0 %v223
    %303 = vmatpush.msra.mxu0 %v220
    %304 = vmatpush.msra.mxu0 %v217
    %305 = vmatpush.msra.mxu0 %v214
    %306 = vmatpush.msra.mxu0 %v211
    %307 = vmatpush.msra.mxu0 %v208
    %308 = vmatmul.f32.gmra.mxu0 %v201
    %v309 = vpop.f32.mrf.mxu0
    %v310 = vadd.f32 %v258, %v309
    %311 = vmatmul.f32.gmra.mxu0 0.0
    %v312 = vpop.f32.mrf.mxu0
    %v313 = vadd.f32 %v258, %v312
    %314 = vmatmul.f32.gmra.mxu0 %v202
    %v315 = vpop.f32.mrf.mxu0
    %v316 = vadd.f32 %v258, %v315
    %317 = vmatmul.f32.gmra.mxu0 0.0
    %v318 = vpop.f32.mrf.mxu0
    %v319 = vadd.f32 %v258, %v318
    %320 = vdwg.mxu0
    %321 = vmatpush.msra.mxu0 %v254
    %322 = vmatpush.msra.mxu0 %v251
    %323 = vmatpush.msra.mxu0 %v248
    %324 = vmatpush.msra.mxu0 %v245
    %325 = vmatpush.msra.mxu0 %v242
    %326 = vmatpush.msra.mxu0 %v239
    %327 = vmatpush.msra.mxu0 %v236
    %328 = vmatpush.msra.mxu0 %v233
    %329 = vmatpush.msra.mxu0 %v230
    %330 = vmatpush.msra.mxu0 %v227
    %331 = vmatpush.msra.mxu0 %v224
    %332 = vmatpush.msra.mxu0 %v221
    %333 = vmatpush.msra.mxu0 %v218
    %334 = vmatpush.msra.mxu0 %v215
    %335 = vmatpush.msra.mxu0 %v212
    %336 = vmatpush.msra.mxu0 %v209
    %337 = vmatmul.f32.gmra.mxu0 %v201
    %v338 = vpop.f32.mrf.mxu0
    %v339 = vadd.f32 %v259, %v338
    %340 = vmatmul.f32.gmra.mxu0 0.0
    %v341 = vpop.f32.mrf.mxu0
    %v342 = vadd.f32 %v259, %v341
    %343 = vmatmul.f32.gmra.mxu0 %v202
    %v344 = vpop.f32.mrf.mxu0
    %v345 = vadd.f32 %v259, %v344
    %346 = vmatmul.f32.gmra.mxu0 0.0
    %v347 = vpop.f32.mrf.mxu0
    %v348 = vadd.f32 %v259, %v347
    %349 = vdwg.mxu0
    %vm350 = vcmask 261120
    %v352 = vsel %vm350, %v281, 0
    %v355 = vsel %vm350, %v284, 0
    %v358 = vsel %vm350, %v310, 0
    %v361 = vsel %vm350, %v313, 0
    %363 = vmatpush.xpose.msra.mxu0 0.0
    %364 = vmatpush.xpose.msra.mxu0 0.0
    %365 = vmatpush.xpose.msra.mxu0 0.0
    %366 = vmatpush.xpose.msra.mxu0 0.0
    %367 = vmatpush.xpose.msra.mxu0 0.0
    %368 = vmatpush.xpose.msra.mxu0 0.0
    %369 = vmatpush.xpose.msra.mxu0 0.0
    %370 = vmatpush.xpose.msra.mxu0 0.0
    %371 = vmatpush.xpose.msra.mxu0 0.0
    %372 = vmatpush.xpose.msra.mxu0 0.0
    %373 = vmatpush.xpose.msra.mxu0 0.0
    %374 = vmatpush.xpose.msra.mxu0 0.0
    %375 = vmatpush.xpose.msra.mxu0 0.0
    %376 = vmatpush.xpose.msra.mxu0 0.0
    %377 = vmatpush.xpose.msra.mxu0 %v361
    %378 = vmatpush.xpose.msra.mxu0 %v358
    %379 = vmatmul.f32.gmra.mxu0 %v352
    %v380 = vpop.f32.mrf.mxu0
    %v381 = vadd.f32 0.0, %v380
    %382 = vmatmul.f32.gmra.mxu0 %v355
    %v383 = vpop.f32.mrf.mxu0
    %v384 = vadd.f32 0.0, %v383
    %385 = vdwg.mxu0
    %v387 = vsel %vm350, %v287, 0
    %v390 = vsel %vm350, %v290, 0
    %v393 = vsel %vm350, %v316, 0
    %v396 = vsel %vm350, %v319, 0
    %398 = vmatpush.xpose.msra.mxu0 0.0
    %399 = vmatpush.xpose.msra.mxu0 0.0
    %400 = vmatpush.xpose.msra.mxu0 0.0
    %401 = vmatpush.xpose.msra.mxu0 0.0
    %402 = vmatpush.xpose.msra.mxu0 0.0
    %403 = vmatpush.xpose.msra.mxu0 0.0
    %404 = vmatpush.xpose.msra.mxu0 0.0
    %405 = vmatpush.xpose.msra.mxu0 0.0
    %406 = vmatpush.xpose.msra.mxu0 0.0
    %407 = vmatpush.xpose.msra.mxu0 0.0
    %408 = vmatpush.xpose.msra.mxu0 0.0
    %409 = vmatpush.xpose.msra.mxu0 0.0
    %410 = vmatpush.xpose.msra.mxu0 0.0
    %411 = vmatpush.xpose.msra.mxu0 0.0
    %412 = vmatpush.xpose.msra.mxu0 %v396
    %413 = vmatpush.xpose.msra.mxu0 %v393
    %414 = vmatmul.f32.gmra.mxu0 %v387
    %v415 = vpop.f32.mrf.mxu0
    %v416 = vadd.f32 0.0, %v415
    %417 = vmatmul.f32.gmra.mxu0 %v390
    %v418 = vpop.f32.mrf.mxu0
    %v419 = vadd.f32 0.0, %v418
    %420 = vdwg.mxu0
    %421 = vrot.lane.b32.xlu0 %v281, 96
    %v422 = vpop.permute.xlu0 %421
    %423 = vrot.lane.b32.xlu0 %v284, 96
    %v424 = vpop.permute.xlu0 %423
    %425 = vrot.lane.b32.xlu0 %v310, 96
    %v426 = vpop.permute.xlu0 %425
    %427 = vrot.lane.b32.xlu0 %v313, 96
    %v428 = vpop.permute.xlu0 %427
    %v429 = vsel %vm350, %v422, 0
    %v431 = vsel %vm350, %v424, 0
    %v433 = vsel %vm350, %v426, 0
    %v435 = vsel %vm350, %v428, 0
    %437 = vmatpush.xpose.msra.mxu0 0.0
    %438 = vmatpush.xpose.msra.mxu0 0.0
    %439 = vmatpush.xpose.msra.mxu0 0.0
    %440 = vmatpush.xpose.msra.mxu0 0.0
    %441 = vmatpush.xpose.msra.mxu0 0.0
    %442 = vmatpush.xpose.msra.mxu0 0.0
    %443 = vmatpush.xpose.msra.mxu0 0.0
    %444 = vmatpush.xpose.msra.mxu0 0.0
    %445 = vmatpush.xpose.msra.mxu0 0.0
    %446 = vmatpush.xpose.msra.mxu0 0.0
    %447 = vmatpush.xpose.msra.mxu0 0.0
    %448 = vmatpush.xpose.msra.mxu0 0.0
    %449 = vmatpush.xpose.msra.mxu0 0.0
    %450 = vmatpush.xpose.msra.mxu0 0.0
    %451 = vmatpush.xpose.msra.mxu0 %v435
    %452 = vmatpush.xpose.msra.mxu0 %v433
    %453 = vmatmul.f32.gmra.mxu0 %v429
    %v454 = vpop.f32.mrf.mxu0
    %v455 = vadd.f32 0.0, %v454
    %456 = vmatmul.f32.gmra.mxu0 %v431
    %v457 = vpop.f32.mrf.mxu0
    %v458 = vadd.f32 0.0, %v457
    %459 = vdwg.mxu0
    %460 = vrot.lane.b32.xlu0 %v287, 96
    %v461 = vpop.permute.xlu0 %460
    %462 = vrot.lane.b32.xlu0 %v290, 96
    %v463 = vpop.permute.xlu0 %462
    %464 = vrot.lane.b32.xlu0 %v316, 96
    %v465 = vpop.permute.xlu0 %464
    %466 = vrot.lane.b32.xlu0 %v319, 96
    %v467 = vpop.permute.xlu0 %466
    %v468 = vsel %vm350, %v461, 0
    %v470 = vsel %vm350, %v463, 0
    %v472 = vsel %vm350, %v465, 0
    %v474 = vsel %vm350, %v467, 0
    %476 = vmatpush.xpose.msra.mxu0 0.0
    %477 = vmatpush.xpose.msra.mxu0 0.0
    %478 = vmatpush.xpose.msra.mxu0 0.0
    %479 = vmatpush.xpose.msra.mxu0 0.0
    %480 = vmatpush.xpose.msra.mxu0 0.0
    %481 = vmatpush.xpose.msra.mxu0 0.0
    %482 = vmatpush.xpose.msra.mxu0 0.0
    %483 = vmatpush.xpose.msra.mxu0 0.0
    %484 = vmatpush.xpose.msra.mxu0 0.0
    %485 = vmatpush.xpose.msra.mxu0 0.0
    %486 = vmatpush.xpose.msra.mxu0 0.0
    %487 = vmatpush.xpose.msra.mxu0 0.0
    %488 = vmatpush.xpose.msra.mxu0 0.0
    %489 = vmatpush.xpose.msra.mxu0 0.0
    %490 = vmatpush.xpose.msra.mxu0 %v474
    %491 = vmatpush.xpose.msra.mxu0 %v472
    %492 = vmatmul.f32.gmra.mxu0 %v468
    %v493 = vpop.f32.mrf.mxu0
    %v494 = vadd.f32 0.0, %v493
    %495 = vmatmul.f32.gmra.mxu0 %v470
    %v496 = vpop.f32.mrf.mxu0
    %v497 = vadd.f32 0.0, %v496
    %498 = vdwg.mxu0
    %499 = vrot.lane.b32.xlu0 %v281, 64
    %v500 = vpop.permute.xlu0 %499
    %501 = vrot.lane.b32.xlu0 %v284, 64
    %v502 = vpop.permute.xlu0 %501
    %503 = vrot.lane.b32.xlu0 %v310, 64
    %v504 = vpop.permute.xlu0 %503
    %505 = vrot.lane.b32.xlu0 %v313, 64
    %v506 = vpop.permute.xlu0 %505
    %v507 = vsel %vm350, %v500, 0
    %v509 = vsel %vm350, %v502, 0
    %v511 = vsel %vm350, %v504, 0
    %v513 = vsel %vm350, %v506, 0
    %515 = vmatpush.xpose.msra.mxu0 0.0
    %516 = vmatpush.xpose.msra.mxu0 0.0
    %517 = vmatpush.xpose.msra.mxu0 0.0
    %518 = vmatpush.xpose.msra.mxu0 0.0
    %519 = vmatpush.xpose.msra.mxu0 0.0
    %520 = vmatpush.xpose.msra.mxu0 0.0
    %521 = vmatpush.xpose.msra.mxu0 0.0
    %522 = vmatpush.xpose.msra.mxu0 0.0
    %523 = vmatpush.xpose.msra.mxu0 0.0
    %524 = vmatpush.xpose.msra.mxu0 0.0
    %525 = vmatpush.xpose.msra.mxu0 0.0
    %526 = vmatpush.xpose.msra.mxu0 0.0
    %527 = vmatpush.xpose.msra.mxu0 0.0
    %528 = vmatpush.xpose.msra.mxu0 0.0
    %529 = vmatpush.xpose.msra.mxu0 %v513
    %530 = vmatpush.xpose.msra.mxu0 %v511
    %531 = vmatmul.f32.gmra.mxu0 %v507
    %v532 = vpop.f32.mrf.mxu0
    %v533 = vadd.f32 0.0, %v532
    %534 = vmatmul.f32.gmra.mxu0 %v509
    %v535 = vpop.f32.mrf.mxu0
    %v536 = vadd.f32 0.0, %v535
    %537 = vdwg.mxu0
    %538 = vrot.lane.b32.xlu0 %v287, 64
    %v539 = vpop.permute.xlu0 %538
    %540 = vrot.lane.b32.xlu0 %v290, 64
    %v541 = vpop.permute.xlu0 %540
    %542 = vrot.lane.b32.xlu0 %v316, 64
    %v543 = vpop.permute.xlu0 %542
    %544 = vrot.lane.b32.xlu0 %v319, 64
    %v545 = vpop.permute.xlu0 %544
    %v546 = vsel %vm350, %v539, 0
    %v548 = vsel %vm350, %v541, 0
    %v550 = vsel %vm350, %v543, 0
    %v552 = vsel %vm350, %v545, 0
    %554 = vmatpush.xpose.msra.mxu0 0.0
    %555 = vmatpush.xpose.msra.mxu0 0.0
    %556 = vmatpush.xpose.msra.mxu0 0.0
    %557 = vmatpush.xpose.msra.mxu0 0.0
    %558 = vmatpush.xpose.msra.mxu0 0.0
    %559 = vmatpush.xpose.msra.mxu0 0.0
    %560 = vmatpush.xpose.msra.mxu0 0.0
    %561 = vmatpush.xpose.msra.mxu0 0.0
    %562 = vmatpush.xpose.msra.mxu0 0.0
    %563 = vmatpush.xpose.msra.mxu0 0.0
    %564 = vmatpush.xpose.msra.mxu0 0.0
    %565 = vmatpush.xpose.msra.mxu0 0.0
    %566 = vmatpush.xpose.msra.mxu0 0.0
    %567 = vmatpush.xpose.msra.mxu0 0.0
    %568 = vmatpush.xpose.msra.mxu0 %v552
    %569 = vmatpush.xpose.msra.mxu0 %v550
    %570 = vmatmul.f32.gmra.mxu0 %v546
    %v571 = vpop.f32.mrf.mxu0
    %v572 = vadd.f32 0.0, %v571
    %573 = vmatmul.f32.gmra.mxu0 %v548
    %v574 = vpop.f32.mrf.mxu0
    %v575 = vadd.f32 0.0, %v574
    %576 = vdwg.mxu0
    %577 = vrot.lane.b32.xlu0 %v281, 32
    %v578 = vpop.permute.xlu0 %577
    %579 = vrot.lane.b32.xlu0 %v284, 32
    %v580 = vpop.permute.xlu0 %579
    %581 = vrot.lane.b32.xlu0 %v310, 32
    %v582 = vpop.permute.xlu0 %581
    %583 = vrot.lane.b32.xlu0 %v313, 32
    %v584 = vpop.permute.xlu0 %583
    %v585 = vsel %vm350, %v578, 0
    %v587 = vsel %vm350, %v580, 0
    %v589 = vsel %vm350, %v582, 0
    %v591 = vsel %vm350, %v584, 0
    %593 = vmatpush.xpose.msra.mxu0 0.0
    %594 = vmatpush.xpose.msra.mxu0 0.0
    %595 = vmatpush.xpose.msra.mxu0 0.0
    %596 = vmatpush.xpose.msra.mxu0 0.0
    %597 = vmatpush.xpose.msra.mxu0 0.0
    %598 = vmatpush.xpose.msra.mxu0 0.0
    %599 = vmatpush.xpose.msra.mxu0 0.0
    %600 = vmatpush.xpose.msra.mxu0 0.0
    %601 = vmatpush.xpose.msra.mxu0 0.0
    %602 = vmatpush.xpose.msra.mxu0 0.0
    %603 = vmatpush.xpose.msra.mxu0 0.0
    %604 = vmatpush.xpose.msra.mxu0 0.0
    %605 = vmatpush.xpose.msra.mxu0 0.0
    %606 = vmatpush.xpose.msra.mxu0 0.0
    %607 = vmatpush.xpose.msra.mxu0 %v591
    %608 = vmatpush.xpose.msra.mxu0 %v589
    %609 = vmatmul.f32.gmra.mxu0 %v585
    %v610 = vpop.f32.mrf.mxu0
    %v611 = vadd.f32 0.0, %v610
    %612 = vmatmul.f32.gmra.mxu0 %v587
    %v613 = vpop.f32.mrf.mxu0
    %v614 = vadd.f32 0.0, %v613
    %615 = vdwg.mxu0
    %616 = vrot.lane.b32.xlu0 %v287, 32
    %v617 = vpop.permute.xlu0 %616
    %618 = vrot.lane.b32.xlu0 %v290, 32
    %v619 = vpop.permute.xlu0 %618
    %620 = vrot.lane.b32.xlu0 %v316, 32
    %v621 = vpop.permute.xlu0 %620
    %622 = vrot.lane.b32.xlu0 %v319, 32
    %v623 = vpop.permute.xlu0 %622
    %v624 = vsel %vm350, %v617, 0
    %v626 = vsel %vm350, %v619, 0
    %v628 = vsel %vm350, %v621, 0
    %v630 = vsel %vm350, %v623, 0
    %632 = vmatpush.xpose.msra.mxu0 0.0
    %633 = vmatpush.xpose.msra.mxu0 0.0
    %634 = vmatpush.xpose.msra.mxu0 0.0
    %635 = vmatpush.xpose.msra.mxu0 0.0
    %636 = vmatpush.xpose.msra.mxu0 0.0
    %637 = vmatpush.xpose.msra.mxu0 0.0
    %638 = vmatpush.xpose.msra.mxu0 0.0
    %639 = vmatpush.xpose.msra.mxu0 0.0
    %640 = vmatpush.xpose.msra.mxu0 0.0
    %641 = vmatpush.xpose.msra.mxu0 0.0
    %642 = vmatpush.xpose.msra.mxu0 0.0
    %643 = vmatpush.xpose.msra.mxu0 0.0
    %644 = vmatpush.xpose.msra.mxu0 0.0
    %645 = vmatpush.xpose.msra.mxu0 0.0
    %646 = vmatpush.xpose.msra.mxu0 %v630
    %647 = vmatpush.xpose.msra.mxu0 %v628
    %648 = vmatmul.f32.gmra.mxu0 %v624
    %v649 = vpop.f32.mrf.mxu0
    %v650 = vadd.f32 0.0, %v649
    %651 = vmatmul.f32.gmra.mxu0 %v626
    %v652 = vpop.f32.mrf.mxu0
    %v653 = vadd.f32 0.0, %v652
    %654 = vdwg.mxu0
    %v655 = vadd.f32 %v381, %v206
    %v656 = vadd.f32 %v384, %v206
    %v657 = vadd.f32 %v416, %v206
    %v658 = vadd.f32 %v419, %v206
    %v659 = vadd.f32 %v455, %v206
    %v660 = vadd.f32 %v458, %v206
    %v661 = vadd.f32 %v494, %v206
    %v662 = vadd.f32 %v497, %v206
    %v663 = vadd.f32 %v533, %v206
    %v664 = vadd.f32 %v536, %v206
    %v665 = vadd.f32 %v572, %v206
    %v666 = vadd.f32 %v575, %v206
    %v667 = vadd.f32 %v611, %v206
    %v668 = vadd.f32 %v614, %v206
    %v669 = vadd.f32 %v650, %v206
    %v670 = vadd.f32 %v653, %v206
    %vm671 = vcmask 130048
    %v672 = vsel %vm671, %v655, -inf
    %673 = vmax.xlane.f32.xlu0 %v672
    %v674 = vpop.xlane.xlu0 %673
    %v675 = vsel %vm671, %v656, -inf
    %676 = vmax.xlane.f32.xlu0 %v675
    %v677 = vpop.xlane.xlu0 %676
    %v678 = vsel %vm671, %v657, -inf
    %679 = vmax.xlane.f32.xlu0 %v678
    %v680 = vpop.xlane.xlu0 %679
    %v681 = vsel %vm671, %v658, -inf
    %682 = vmax.xlane.f32.xlu0 %v681
    %v683 = vpop.xlane.xlu0 %682
    %v684 = vsel %vm671, %v659, -inf
    %685 = vmax.xlane.f32.xlu0 %v684
    %v686 = vpop.xlane.xlu0 %685
    %v687 = vsel %vm671, %v660, -inf
    %688 = vmax.xlane.f32.xlu0 %v687
    %v689 = vpop.xlane.xlu0 %688
    %v690 = vsel %vm671, %v661, -inf
    %691 = vmax.xlane.f32.xlu0 %v690
    %v692 = vpop.xlane.xlu0 %691
    %v693 = vsel %vm671, %v662, -inf
    %694 = vmax.xlane.f32.xlu0 %v693
    %v695 = vpop.xlane.xlu0 %694
    %v696 = vsel %vm671, %v663, -inf
    %697 = vmax.xlane.f32.xlu0 %v696
    %v698 = vpop.xlane.xlu0 %697
    %v699 = vsel %vm671, %v664, -inf
    %700 = vmax.xlane.f32.xlu0 %v699
    %v701 = vpop.xlane.xlu0 %700
    %v702 = vsel %vm671, %v665, -inf
    %703 = vmax.xlane.f32.xlu0 %v702
    %v704 = vpop.xlane.xlu0 %703
    %v705 = vsel %vm671, %v666, -inf
    %706 = vmax.xlane.f32.xlu0 %v705
    %v707 = vpop.xlane.xlu0 %706
    %v708 = vsel %vm671, %v667, -inf
    %709 = vmax.xlane.f32.xlu0 %v708
    %v710 = vpop.xlane.xlu0 %709
    %v711 = vsel %vm671, %v668, -inf
    %712 = vmax.xlane.f32.xlu0 %v711
    %v713 = vpop.xlane.xlu0 %712
    %v714 = vsel %vm671, %v669, -inf
    %715 = vmax.xlane.f32.xlu0 %v714
    %v716 = vpop.xlane.xlu0 %715
    %v717 = vsel %vm671, %v670, -inf
    %718 = vmax.xlane.f32.xlu0 %v717
    %v719 = vpop.xlane.xlu0 %718
    %v720 = vsub.f32 %v655, %v674
    %v721 = vsub.f32 %v656, %v677
    %v722 = vsub.f32 %v657, %v680
    %v723 = vsub.f32 %v658, %v683
    %v724 = vsub.f32 %v659, %v686
    %v725 = vsub.f32 %v660, %v689
    %v726 = vsub.f32 %v661, %v692
    %v727 = vsub.f32 %v662, %v695
    %v728 = vsub.f32 %v663, %v698
    %v729 = vsub.f32 %v664, %v701
    %v730 = vsub.f32 %v665, %v704
    %v731 = vsub.f32 %v666, %v707
    %v732 = vsub.f32 %v667, %v710
    %v733 = vsub.f32 %v668, %v713
    %v734 = vsub.f32 %v669, %v716
    %v735 = vsub.f32 %v670, %v719
    %v736 = vmul.f32 %v720, 1.442695
    %v737 = vpow.pop %v736
    %v738 = vmul.f32 %v721, 1.442695
    %v739 = vpow.pop %v738
    %v740 = vmul.f32 %v722, 1.442695
    %v741 = vpow.pop %v740
    %v742 = vmul.f32 %v723, 1.442695
    %v743 = vpow.pop %v742
    %v744 = vmul.f32 %v724, 1.442695
    %v745 = vpow.pop %v744
    %v746 = vmul.f32 %v725, 1.442695
    %v747 = vpow.pop %v746
    %v748 = vmul.f32 %v726, 1.442695
    %v749 = vpow.pop %v748
    %v750 = vmul.f32 %v727, 1.442695
    %v751 = vpow.pop %v750
    %v752 = vmul.f32 %v728, 1.442695
    %v753 = vpow.pop %v752
    %v754 = vmul.f32 %v729, 1.442695
    %v755 = vpow.pop %v754
    %v756 = vmul.f32 %v730, 1.442695
    %v757 = vpow.pop %v756
    %v758 = vmul.f32 %v731, 1.442695
    %v759 = vpow.pop %v758
    %v760 = vmul.f32 %v732, 1.442695
    %v761 = vpow.pop %v760
    %v762 = vmul.f32 %v733, 1.442695
    %v763 = vpow.pop %v762
    %v764 = vmul.f32 %v734, 1.442695
    %v765 = vpow.pop %v764
    %v766 = vmul.f32 %v735, 1.442695
    %v767 = vpow.pop %v766
    %v768 = vsel %vm671, %v737, 0.0
    %769 = vadd.xlane.f32.xlu0 %v768
    %v770 = vpop.xlane.xlu0 %769
    %v771 = vsel %vm671, %v739, 0.0
    %772 = vadd.xlane.f32.xlu0 %v771
    %v773 = vpop.xlane.xlu0 %772
    %v774 = vsel %vm671, %v741, 0.0
    %775 = vadd.xlane.f32.xlu0 %v774
    %v776 = vpop.xlane.xlu0 %775
    %v777 = vsel %vm671, %v743, 0.0
    %778 = vadd.xlane.f32.xlu0 %v777
    %v779 = vpop.xlane.xlu0 %778
    %v780 = vsel %vm671, %v745, 0.0
    %781 = vadd.xlane.f32.xlu0 %v780
    %v782 = vpop.xlane.xlu0 %781
    %v783 = vsel %vm671, %v747, 0.0
    %784 = vadd.xlane.f32.xlu0 %v783
    %v785 = vpop.xlane.xlu0 %784
    %v786 = vsel %vm671, %v749, 0.0
    %787 = vadd.xlane.f32.xlu0 %v786
    %v788 = vpop.xlane.xlu0 %787
    %v789 = vsel %vm671, %v751, 0.0
    %790 = vadd.xlane.f32.xlu0 %v789
    %v791 = vpop.xlane.xlu0 %790
    %v792 = vsel %vm671, %v753, 0.0
    %793 = vadd.xlane.f32.xlu0 %v792
    %v794 = vpop.xlane.xlu0 %793
    %v795 = vsel %vm671, %v755, 0.0
    %796 = vadd.xlane.f32.xlu0 %v795
    %v797 = vpop.xlane.xlu0 %796
    %v798 = vsel %vm671, %v757, 0.0
    %799 = vadd.xlane.f32.xlu0 %v798
    %v800 = vpop.xlane.xlu0 %799
    %v801 = vsel %vm671, %v759, 0.0
    %802 = vadd.xlane.f32.xlu0 %v801
    %v803 = vpop.xlane.xlu0 %802
    %v804 = vsel %vm671, %v761, 0.0
    %805 = vadd.xlane.f32.xlu0 %v804
    %v806 = vpop.xlane.xlu0 %805
    %v807 = vsel %vm671, %v763, 0.0
    %808 = vadd.xlane.f32.xlu0 %v807
    %v809 = vpop.xlane.xlu0 %808
    %v810 = vsel %vm671, %v765, 0.0
    %811 = vadd.xlane.f32.xlu0 %v810
    %v812 = vpop.xlane.xlu0 %811
    %v813 = vsel %vm671, %v767, 0.0
    %814 = vadd.xlane.f32.xlu0 %v813
    %v815 = vpop.xlane.xlu0 %814
    %v816 = vrcp.pop %v770
    %v817 = vmul.f32 %v770, %v816
    %v818 = vsub.f32 1.0, %v817
    %v819 = vmul.f32 %v816, %v818
    %v820 = vadd.f32 %v816, %v819
    %vm821 = vweird.f32 %v770
    %vm822 = vweird.f32 %v816
    %vm823 = vmor %vm821, %vm822
    %v824 = vsel %vm823, %v816, %v820
    %v825 = vand.u32 2147483647, %v770
    %vm826 = vcmp.eq.f32.partialorder %v825, 8.507059e+37
    %v827 = vand.u32 %v770, 2147483648
    %v828 = vor.u32 1.1754944e-38, %v827
    %v829 = vsel %vm826, %v828, %v824
    %v830 = vrcp.pop %v773
    %v831 = vmul.f32 %v773, %v830
    %v832 = vsub.f32 1.0, %v831
    %v833 = vmul.f32 %v830, %v832
    %v834 = vadd.f32 %v830, %v833
    %vm835 = vweird.f32 %v773
    %vm836 = vweird.f32 %v830
    %vm837 = vmor %vm835, %vm836
    %v838 = vsel %vm837, %v830, %v834
    %v839 = vand.u32 2147483647, %v773
    %vm840 = vcmp.eq.f32.partialorder %v839, 8.507059e+37
    %v841 = vand.u32 %v773, 2147483648
    %v842 = vor.u32 1.1754944e-38, %v841
    %v843 = vsel %vm840, %v842, %v838
    %v844 = vrcp.pop %v776
    %v845 = vmul.f32 %v776, %v844
    %v846 = vsub.f32 1.0, %v845
    %v847 = vmul.f32 %v844, %v846
    %v848 = vadd.f32 %v844, %v847
    %vm849 = vweird.f32 %v776
    %vm850 = vweird.f32 %v844
    %vm851 = vmor %vm849, %vm850
    %v852 = vsel %vm851, %v844, %v848
    %v853 = vand.u32 2147483647, %v776
    %vm854 = vcmp.eq.f32.partialorder %v853, 8.507059e+37
    %v855 = vand.u32 %v776, 2147483648
    %v856 = vor.u32 1.1754944e-38, %v855
    %v857 = vsel %vm854, %v856, %v852
    %v858 = vrcp.pop %v779
    %v859 = vmul.f32 %v779, %v858
    %v860 = vsub.f32 1.0, %v859
    %v861 = vmul.f32 %v858, %v860
    %v862 = vadd.f32 %v858, %v861
    %vm863 = vweird.f32 %v779
    %vm864 = vweird.f32 %v858
    %vm865 = vmor %vm863, %vm864
    %v866 = vsel %vm865, %v858, %v862
    %v867 = vand.u32 2147483647, %v779
    %vm868 = vcmp.eq.f32.partialorder %v867, 8.507059e+37
    %v869 = vand.u32 %v779, 2147483648
    %v870 = vor.u32 1.1754944e-38, %v869
    %v871 = vsel %vm868, %v870, %v866
    %v872 = vrcp.pop %v782
    %v873 = vmul.f32 %v782, %v872
    %v874 = vsub.f32 1.0, %v873
    %v875 = vmul.f32 %v872, %v874
    %v876 = vadd.f32 %v872, %v875
    %vm877 = vweird.f32 %v782
    %vm878 = vweird.f32 %v872
    %vm879 = vmor %vm877, %vm878
    %v880 = vsel %vm879, %v872, %v876
    %v881 = vand.u32 2147483647, %v782
    %vm882 = vcmp.eq.f32.partialorder %v881, 8.507059e+37
    %v883 = vand.u32 %v782, 2147483648
    %v884 = vor.u32 1.1754944e-38, %v883
    %v885 = vsel %vm882, %v884, %v880
    %v886 = vrcp.pop %v785
    %v887 = vmul.f32 %v785, %v886
    %v888 = vsub.f32 1.0, %v887
    %v889 = vmul.f32 %v886, %v888
    %v890 = vadd.f32 %v886, %v889
    %vm891 = vweird.f32 %v785
    %vm892 = vweird.f32 %v886
    %vm893 = vmor %vm891, %vm892
    %v894 = vsel %vm893, %v886, %v890
    %v895 = vand.u32 2147483647, %v785
    %vm896 = vcmp.eq.f32.partialorder %v895, 8.507059e+37
    %v897 = vand.u32 %v785, 2147483648
    %v898 = vor.u32 1.1754944e-38, %v897
    %v899 = vsel %vm896, %v898, %v894
    %v900 = vrcp.pop %v788
    %v901 = vmul.f32 %v788, %v900
    %v902 = vsub.f32 1.0, %v901
    %v903 = vmul.f32 %v900, %v902
    %v904 = vadd.f32 %v900, %v903
    %vm905 = vweird.f32 %v788
    %vm906 = vweird.f32 %v900
    %vm907 = vmor %vm905, %vm906
    %v908 = vsel %vm907, %v900, %v904
    %v909 = vand.u32 2147483647, %v788
    %vm910 = vcmp.eq.f32.partialorder %v909, 8.507059e+37
    %v911 = vand.u32 %v788, 2147483648
    %v912 = vor.u32 1.1754944e-38, %v911
    %v913 = vsel %vm910, %v912, %v908
    %v914 = vrcp.pop %v791
    %v915 = vmul.f32 %v791, %v914
    %v916 = vsub.f32 1.0, %v915
    %v917 = vmul.f32 %v914, %v916
    %v918 = vadd.f32 %v914, %v917
    %vm919 = vweird.f32 %v791
    %vm920 = vweird.f32 %v914
    %vm921 = vmor %vm919, %vm920
    %v922 = vsel %vm921, %v914, %v918
    %v923 = vand.u32 2147483647, %v791
    %vm924 = vcmp.eq.f32.partialorder %v923, 8.507059e+37
    %v925 = vand.u32 %v791, 2147483648
    %v926 = vor.u32 1.1754944e-38, %v925
    %v927 = vsel %vm924, %v926, %v922
    %v928 = vrcp.pop %v794
    %v929 = vmul.f32 %v794, %v928
    %v930 = vsub.f32 1.0, %v929
    %v931 = vmul.f32 %v928, %v930
    %v932 = vadd.f32 %v928, %v931
    %vm933 = vweird.f32 %v794
    %vm934 = vweird.f32 %v928
    %vm935 = vmor %vm933, %vm934
    %v936 = vsel %vm935, %v928, %v932
    %v937 = vand.u32 2147483647, %v794
    %vm938 = vcmp.eq.f32.partialorder %v937, 8.507059e+37
    %v939 = vand.u32 %v794, 2147483648
    %v940 = vor.u32 1.1754944e-38, %v939
    %v941 = vsel %vm938, %v940, %v936
    %v942 = vrcp.pop %v797
    %v943 = vmul.f32 %v797, %v942
    %v944 = vsub.f32 1.0, %v943
    %v945 = vmul.f32 %v942, %v944
    %v946 = vadd.f32 %v942, %v945
    %vm947 = vweird.f32 %v797
    %vm948 = vweird.f32 %v942
    %vm949 = vmor %vm947, %vm948
    %v950 = vsel %vm949, %v942, %v946
    %v951 = vand.u32 2147483647, %v797
    %vm952 = vcmp.eq.f32.partialorder %v951, 8.507059e+37
    %v953 = vand.u32 %v797, 2147483648
    %v954 = vor.u32 1.1754944e-38, %v953
    %v955 = vsel %vm952, %v954, %v950
    %v956 = vrcp.pop %v800
    %v957 = vmul.f32 %v800, %v956
    %v958 = vsub.f32 1.0, %v957
    %v959 = vmul.f32 %v956, %v958
    %v960 = vadd.f32 %v956, %v959
    %vm961 = vweird.f32 %v800
    %vm962 = vweird.f32 %v956
    %vm963 = vmor %vm961, %vm962
    %v964 = vsel %vm963, %v956, %v960
    %v965 = vand.u32 2147483647, %v800
    %vm966 = vcmp.eq.f32.partialorder %v965, 8.507059e+37
    %v967 = vand.u32 %v800, 2147483648
    %v968 = vor.u32 1.1754944e-38, %v967
    %v969 = vsel %vm966, %v968, %v964
    %v970 = vrcp.pop %v803
    %v971 = vmul.f32 %v803, %v970
    %v972 = vsub.f32 1.0, %v971
    %v973 = vmul.f32 %v970, %v972
    %v974 = vadd.f32 %v970, %v973
    %vm975 = vweird.f32 %v803
    %vm976 = vweird.f32 %v970
    %vm977 = vmor %vm975, %vm976
    %v978 = vsel %vm977, %v970, %v974
    %v979 = vand.u32 2147483647, %v803
    %vm980 = vcmp.eq.f32.partialorder %v979, 8.507059e+37
    %v981 = vand.u32 %v803, 2147483648
    %v982 = vor.u32 1.1754944e-38, %v981
    %v983 = vsel %vm980, %v982, %v978
    %v984 = vrcp.pop %v806
    %v985 = vmul.f32 %v806, %v984
    %v986 = vsub.f32 1.0, %v985
    %v987 = vmul.f32 %v984, %v986
    %v988 = vadd.f32 %v984, %v987
    %vm989 = vweird.f32 %v806
    %vm990 = vweird.f32 %v984
    %vm991 = vmor %vm989, %vm990
    %v992 = vsel %vm991, %v984, %v988
    %v993 = vand.u32 2147483647, %v806
    %vm994 = vcmp.eq.f32.partialorder %v993, 8.507059e+37
    %v995 = vand.u32 %v806, 2147483648
    %v996 = vor.u32 1.1754944e-38, %v995
    %v997 = vsel %vm994, %v996, %v992
    %v998 = vrcp.pop %v809
    %v999 = vmul.f32 %v809, %v998
    %v1000 = vsub.f32 1.0, %v999
    %v1001 = vmul.f32 %v998, %v1000
    %v1002 = vadd.f32 %v998, %v1001
    %vm1003 = vweird.f32 %v809
    %vm1004 = vweird.f32 %v998
    %vm1005 = vmor %vm1003, %vm1004
    %v1006 = vsel %vm1005, %v998, %v1002
    %v1007 = vand.u32 2147483647, %v809
    %vm1008 = vcmp.eq.f32.partialorder %v1007, 8.507059e+37
    %v1009 = vand.u32 %v809, 2147483648
    %v1010 = vor.u32 1.1754944e-38, %v1009
    %v1011 = vsel %vm1008, %v1010, %v1006
    %v1012 = vrcp.pop %v812
    %v1013 = vmul.f32 %v812, %v1012
    %v1014 = vsub.f32 1.0, %v1013
    %v1015 = vmul.f32 %v1012, %v1014
    %v1016 = vadd.f32 %v1012, %v1015
    %vm1017 = vweird.f32 %v812
    %vm1018 = vweird.f32 %v1012
    %vm1019 = vmor %vm1017, %vm1018
    %v1020 = vsel %vm1019, %v1012, %v1016
    %v1021 = vand.u32 2147483647, %v812
    %vm1022 = vcmp.eq.f32.partialorder %v1021, 8.507059e+37
    %v1023 = vand.u32 %v812, 2147483648
    %v1024 = vor.u32 1.1754944e-38, %v1023
    %v1025 = vsel %vm1022, %v1024, %v1020
    %v1026 = vrcp.pop %v815
    %v1027 = vmul.f32 %v815, %v1026
    %v1028 = vsub.f32 1.0, %v1027
    %v1029 = vmul.f32 %v1026, %v1028
    %v1030 = vadd.f32 %v1026, %v1029
    %vm1031 = vweird.f32 %v815
    %vm1032 = vweird.f32 %v1026
    %vm1033 = vmor %vm1031, %vm1032
    %v1034 = vsel %vm1033, %v1026, %v1030
    %v1035 = vand.u32 2147483647, %v815
    %vm1036 = vcmp.eq.f32.partialorder %v1035, 8.507059e+37
    %v1037 = vand.u32 %v815, 2147483648
    %v1038 = vor.u32 1.1754944e-38, %v1037
    %v1039 = vsel %vm1036, %v1038, %v1034
    %v1040 = vmul.f32 %v737, %v829
    %v1041 = vmul.f32 %v739, %v843
    %v1042 = vmul.f32 %v741, %v857
    %v1043 = vmul.f32 %v743, %v871
    %v1044 = vmul.f32 %v745, %v885
    %v1045 = vmul.f32 %v747, %v899
    %v1046 = vmul.f32 %v749, %v913
    %v1047 = vmul.f32 %v751, %v927
    %v1048 = vmul.f32 %v753, %v941
    %v1049 = vmul.f32 %v755, %v955
    %v1050 = vmul.f32 %v757, %v969
    %v1051 = vmul.f32 %v759, %v983
    %v1052 = vmul.f32 %v761, %v997
    %v1053 = vmul.f32 %v763, %v1011
    %v1054 = vmul.f32 %v765, %v1025
    %v1055 = vmul.f32 %v767, %v1039
    %v1057 = vsel %vm671, %v1040, 0
    %v1060 = vsel %vm671, %v1041, 0
    %1062 = vmatpush.msra.mxu0 0.0
    %1063 = vmatpush.msra.mxu0 0.0
    %1064 = vmatpush.msra.mxu0 0.0
    %1065 = vmatpush.msra.mxu0 0.0
    %1066 = vmatpush.msra.mxu0 0.0
    %1067 = vmatpush.msra.mxu0 0.0
    %1068 = vmatpush.msra.mxu0 0.0
    %1069 = vmatpush.msra.mxu0 0.0
    %1070 = vmatpush.msra.mxu0 0.0
    %1071 = vmatpush.msra.mxu0 0.0
    %1072 = vmatpush.msra.mxu0 0.0
    %1073 = vmatpush.msra.mxu0 0.0
    %1074 = vmatpush.msra.mxu0 0.0
    %1075 = vmatpush.msra.mxu0 0.0
    %1076 = vmatpush.msra.mxu0 %v342
    %1077 = vmatpush.msra.mxu0 %v339
    %1078 = vmatmul.f32.gmra.mxu0 %v1057
    %v1079 = vpop.f32.mrf.mxu0
    %v1080 = vadd.f32 0.0, %v1079
    %1081 = vmatmul.f32.gmra.mxu0 %v1060
    %v1082 = vpop.f32.mrf.mxu0
    %v1083 = vadd.f32 0.0, %v1082
    %1084 = vdwg.mxu0
    %v1086 = vsel %vm671, %v1042, 0
    %v1089 = vsel %vm671, %v1043, 0
    %1091 = vmatpush.msra.mxu0 0.0
    %1092 = vmatpush.msra.mxu0 0.0
    %1093 = vmatpush.msra.mxu0 0.0
    %1094 = vmatpush.msra.mxu0 0.0
    %1095 = vmatpush.msra.mxu0 0.0
    %1096 = vmatpush.msra.mxu0 0.0
    %1097 = vmatpush.msra.mxu0 0.0
    %1098 = vmatpush.msra.mxu0 0.0
    %1099 = vmatpush.msra.mxu0 0.0
    %1100 = vmatpush.msra.mxu0 0.0
    %1101 = vmatpush.msra.mxu0 0.0
    %1102 = vmatpush.msra.mxu0 0.0
    %1103 = vmatpush.msra.mxu0 0.0
    %1104 = vmatpush.msra.mxu0 0.0
    %1105 = vmatpush.msra.mxu0 %v348
    %1106 = vmatpush.msra.mxu0 %v345
    %1107 = vmatmul.f32.gmra.mxu0 %v1086
    %v1108 = vpop.f32.mrf.mxu0
    %v1109 = vadd.f32 0.0, %v1108
    %1110 = vmatmul.f32.gmra.mxu0 %v1089
    %v1111 = vpop.f32.mrf.mxu0
    %v1112 = vadd.f32 0.0, %v1111
    %1113 = vdwg.mxu0
    %1116 = vrot.lane.b32.xlu0 %v339, 96
    %v1117 = vpop.permute.xlu0 %1116
    %1118 = vrot.lane.b32.xlu0 %v342, 96
    %v1119 = vpop.permute.xlu0 %1118
    %v1123 = vsel %vm671, %v1044, 0
    %v1126 = vsel %vm671, %v1045, 0
    %1128 = vmatpush.msra.mxu0 0.0
    %1129 = vmatpush.msra.mxu0 0.0
    %1130 = vmatpush.msra.mxu0 0.0
    %1131 = vmatpush.msra.mxu0 0.0
    %1132 = vmatpush.msra.mxu0 0.0
    %1133 = vmatpush.msra.mxu0 0.0
    %1134 = vmatpush.msra.mxu0 0.0
    %1135 = vmatpush.msra.mxu0 0.0
    %1136 = vmatpush.msra.mxu0 0.0
    %1137 = vmatpush.msra.mxu0 0.0
    %1138 = vmatpush.msra.mxu0 0.0
    %1139 = vmatpush.msra.mxu0 0.0
    %1140 = vmatpush.msra.mxu0 0.0
    %1141 = vmatpush.msra.mxu0 0.0
    %1142 = vmatpush.msra.mxu0 %v1119
    %1143 = vmatpush.msra.mxu0 %v1117
    %1144 = vmatmul.f32.gmra.mxu0 %v1123
    %v1145 = vpop.f32.mrf.mxu0
    %v1146 = vadd.f32 0.0, %v1145
    %1147 = vmatmul.f32.gmra.mxu0 %v1126
    %v1148 = vpop.f32.mrf.mxu0
    %v1149 = vadd.f32 0.0, %v1148
    %1150 = vdwg.mxu0
    %1153 = vrot.lane.b32.xlu0 %v345, 96
    %v1154 = vpop.permute.xlu0 %1153
    %1155 = vrot.lane.b32.xlu0 %v348, 96
    %v1156 = vpop.permute.xlu0 %1155
    %v1160 = vsel %vm671, %v1046, 0
    %v1163 = vsel %vm671, %v1047, 0
    %1165 = vmatpush.msra.mxu0 0.0
    %1166 = vmatpush.msra.mxu0 0.0
    %1167 = vmatpush.msra.mxu0 0.0
    %1168 = vmatpush.msra.mxu0 0.0
    %1169 = vmatpush.msra.mxu0 0.0
    %1170 = vmatpush.msra.mxu0 0.0
    %1171 = vmatpush.msra.mxu0 0.0
    %1172 = vmatpush.msra.mxu0 0.0
    %1173 = vmatpush.msra.mxu0 0.0
    %1174 = vmatpush.msra.mxu0 0.0
    %1175 = vmatpush.msra.mxu0 0.0
    %1176 = vmatpush.msra.mxu0 0.0
    %1177 = vmatpush.msra.mxu0 0.0
    %1178 = vmatpush.msra.mxu0 0.0
    %1179 = vmatpush.msra.mxu0 %v1156
    %1180 = vmatpush.msra.mxu0 %v1154
    %1181 = vmatmul.f32.gmra.mxu0 %v1160
    %v1182 = vpop.f32.mrf.mxu0
    %v1183 = vadd.f32 0.0, %v1182
    %1184 = vmatmul.f32.gmra.mxu0 %v1163
    %v1185 = vpop.f32.mrf.mxu0
    %v1186 = vadd.f32 0.0, %v1185
    %1187 = vdwg.mxu0
    %1188 = vrot.lane.b32.xlu0 %v339, 64
    %v1189 = vpop.permute.xlu0 %1188
    %1190 = vrot.lane.b32.xlu0 %v342, 64
    %v1191 = vpop.permute.xlu0 %1190
    %v1195 = vsel %vm671, %v1048, 0
    %v1198 = vsel %vm671, %v1049, 0
    %1200 = vmatpush.msra.mxu0 0.0
    %1201 = vmatpush.msra.mxu0 0.0
    %1202 = vmatpush.msra.mxu0 0.0
    %1203 = vmatpush.msra.mxu0 0.0
    %1204 = vmatpush.msra.mxu0 0.0
    %1205 = vmatpush.msra.mxu0 0.0
    %1206 = vmatpush.msra.mxu0 0.0
    %1207 = vmatpush.msra.mxu0 0.0
    %1208 = vmatpush.msra.mxu0 0.0
    %1209 = vmatpush.msra.mxu0 0.0
    %1210 = vmatpush.msra.mxu0 0.0
    %1211 = vmatpush.msra.mxu0 0.0
    %1212 = vmatpush.msra.mxu0 0.0
    %1213 = vmatpush.msra.mxu0 0.0
    %1214 = vmatpush.msra.mxu0 %v1191
    %1215 = vmatpush.msra.mxu0 %v1189
    %1216 = vmatmul.f32.gmra.mxu0 %v1195
    %v1217 = vpop.f32.mrf.mxu0
    %v1218 = vadd.f32 0.0, %v1217
    %1219 = vmatmul.f32.gmra.mxu0 %v1198
    %v1220 = vpop.f32.mrf.mxu0
    %v1221 = vadd.f32 0.0, %v1220
    %1222 = vdwg.mxu0
    %1223 = vrot.lane.b32.xlu0 %v345, 64
    %v1224 = vpop.permute.xlu0 %1223
    %1225 = vrot.lane.b32.xlu0 %v348, 64
    %v1226 = vpop.permute.xlu0 %1225
    %v1230 = vsel %vm671, %v1050, 0
    %v1233 = vsel %vm671, %v1051, 0
    %1235 = vmatpush.msra.mxu0 0.0
    %1236 = vmatpush.msra.mxu0 0.0
    %1237 = vmatpush.msra.mxu0 0.0
    %1238 = vmatpush.msra.mxu0 0.0
    %1239 = vmatpush.msra.mxu0 0.0
    %1240 = vmatpush.msra.mxu0 0.0
    %1241 = vmatpush.msra.mxu0 0.0
    %1242 = vmatpush.msra.mxu0 0.0
    %1243 = vmatpush.msra.mxu0 0.0
    %1244 = vmatpush.msra.mxu0 0.0
    %1245 = vmatpush.msra.mxu0 0.0
    %1246 = vmatpush.msra.mxu0 0.0
    %1247 = vmatpush.msra.mxu0 0.0
    %1248 = vmatpush.msra.mxu0 0.0
    %1249 = vmatpush.msra.mxu0 %v1226
    %1250 = vmatpush.msra.mxu0 %v1224
    %1251 = vmatmul.f32.gmra.mxu0 %v1230
    %v1252 = vpop.f32.mrf.mxu0
    %v1253 = vadd.f32 0.0, %v1252
    %1254 = vmatmul.f32.gmra.mxu0 %v1233
    %v1255 = vpop.f32.mrf.mxu0
    %v1256 = vadd.f32 0.0, %v1255
    %1257 = vdwg.mxu0
    %1258 = vrot.lane.b32.xlu0 %v339, 32
    %v1259 = vpop.permute.xlu0 %1258
    %1260 = vrot.lane.b32.xlu0 %v342, 32
    %v1261 = vpop.permute.xlu0 %1260
    %v1265 = vsel %vm671, %v1052, 0
    %v1268 = vsel %vm671, %v1053, 0
    %1270 = vmatpush.msra.mxu0 0.0
    %1271 = vmatpush.msra.mxu0 0.0
    %1272 = vmatpush.msra.mxu0 0.0
    %1273 = vmatpush.msra.mxu0 0.0
    %1274 = vmatpush.msra.mxu0 0.0
    %1275 = vmatpush.msra.mxu0 0.0
    %1276 = vmatpush.msra.mxu0 0.0
    %1277 = vmatpush.msra.mxu0 0.0
    %1278 = vmatpush.msra.mxu0 0.0
    %1279 = vmatpush.msra.mxu0 0.0
    %1280 = vmatpush.msra.mxu0 0.0
    %1281 = vmatpush.msra.mxu0 0.0
    %1282 = vmatpush.msra.mxu0 0.0
    %1283 = vmatpush.msra.mxu0 0.0
    %1284 = vmatpush.msra.mxu0 %v1261
    %1285 = vmatpush.msra.mxu0 %v1259
    %1286 = vmatmul.f32.gmra.mxu0 %v1265
    %v1287 = vpop.f32.mrf.mxu0
    %v1288 = vadd.f32 0.0, %v1287
    %1289 = vmatmul.f32.gmra.mxu0 %v1268
    %v1290 = vpop.f32.mrf.mxu0
    %v1291 = vadd.f32 0.0, %v1290
    %1292 = vdwg.mxu0
    %1293 = vrot.lane.b32.xlu0 %v345, 32
    %v1294 = vpop.permute.xlu0 %1293
    %1295 = vrot.lane.b32.xlu0 %v348, 32
    %v1296 = vpop.permute.xlu0 %1295
    %v1300 = vsel %vm671, %v1054, 0
    %v1303 = vsel %vm671, %v1055, 0
    %1305 = vmatpush.msra.mxu0 0.0
    %1306 = vmatpush.msra.mxu0 0.0
    %1307 = vmatpush.msra.mxu0 0.0
    %1308 = vmatpush.msra.mxu0 0.0
    %1309 = vmatpush.msra.mxu0 0.0
    %1310 = vmatpush.msra.mxu0 0.0
    %1311 = vmatpush.msra.mxu0 0.0
    %1312 = vmatpush.msra.mxu0 0.0
    %1313 = vmatpush.msra.mxu0 0.0
    %1314 = vmatpush.msra.mxu0 0.0
    %1315 = vmatpush.msra.mxu0 0.0
    %1316 = vmatpush.msra.mxu0 0.0
    %1317 = vmatpush.msra.mxu0 0.0
    %1318 = vmatpush.msra.mxu0 0.0
    %1319 = vmatpush.msra.mxu0 %v1296
    %1320 = vmatpush.msra.mxu0 %v1294
    %1321 = vmatmul.f32.gmra.mxu0 %v1300
    %v1322 = vpop.f32.mrf.mxu0
    %v1323 = vadd.f32 0.0, %v1322
    %1324 = vmatmul.f32.gmra.mxu0 %v1303
    %v1325 = vpop.f32.mrf.mxu0
    %v1326 = vadd.f32 0.0, %v1325
    %1327 = vdwg.mxu0
    %1332 = vrot.lane.b32.xlu0 %v1146, 32
    %v1333 = vpop.permute.xlu0 %1332
    %1334 = vrot.lane.b32.xlu0 %v1149, 32
    %v1335 = vpop.permute.xlu0 %1334
    %1336 = vrot.lane.b32.xlu0 %v1183, 32
    %v1337 = vpop.permute.xlu0 %1336
    %1338 = vrot.lane.b32.xlu0 %v1186, 32
    %v1339 = vpop.permute.xlu0 %1338
    %1348 = vrot.lane.b32.xlu0 %v1218, 64
    %v1349 = vpop.permute.xlu0 %1348
    %1350 = vrot.lane.b32.xlu0 %v1221, 64
    %v1351 = vpop.permute.xlu0 %1350
    %1352 = vrot.lane.b32.xlu0 %v1253, 64
    %v1353 = vpop.permute.xlu0 %1352
    %1354 = vrot.lane.b32.xlu0 %v1256, 64
    %v1355 = vpop.permute.xlu0 %1354
    %1364 = vrot.lane.b32.xlu0 %v1288, 96
    %v1365 = vpop.permute.xlu0 %1364
    %1366 = vrot.lane.b32.xlu0 %v1291, 96
    %v1367 = vpop.permute.xlu0 %1366
    %1368 = vrot.lane.b32.xlu0 %v1323, 96
    %v1369 = vpop.permute.xlu0 %1368
    %1370 = vrot.lane.b32.xlu0 %v1326, 96
    %v1371 = vpop.permute.xlu0 %1370
    %v1376 = vsel %vm350, %v1080, %v1333
    %v1377 = vsel %vm350, %v1083, %v1335
    %v1378 = vsel %vm350, %v1109, %v1337
    %v1379 = vsel %vm350, %v1112, %v1339
    %vm1380 = vcmask 523264
    %v1381 = vsel %vm1380, %v1376, %v1349
    %v1382 = vsel %vm1380, %v1377, %v1351
    %v1383 = vsel %vm1380, %v1378, %v1353
    %v1384 = vsel %vm1380, %v1379, %v1355
    %vm1385 = vcmask 785408
    %v1386 = vsel %vm1385, %v1381, %v1365
    %v1387 = vsel %vm1385, %v1382, %v1367
    %v1388 = vsel %vm1385, %v1383, %v1369
    %v1389 = vsel %vm1385, %v1384, %v1371
    %v1390 = vld [vmem:[#allocation8] sm:$0xff]
    %v1391 = vld [vmem:[#allocation8 + $0x8] sm:$0xff]
    %v1392 = vld [vmem:[#allocation8 + $0x10] sm:$0xff]
    %v1393 = vld [vmem:[#allocation8 + $0x18] sm:$0xff]
    %v1394 = vld [vmem:[#allocation8 + $0x20] sm:$0xff]
    %v1395 = vld [vmem:[#allocation8 + $0x28] sm:$0xff]
    %v1396 = vld [vmem:[#allocation8 + $0x30] sm:$0xff]
    %v1397 = vld [vmem:[#allocation8 + $0x38] sm:$0xff]
    %v1398 = vld [vmem:[#allocation8 + $0x40] sm:$0xff]
    %v1399 = vld [vmem:[#allocation8 + $0x48] sm:$0xff]
    %v1400 = vld [vmem:[#allocation8 + $0x50] sm:$0xff]
    %v1401 = vld [vmem:[#allocation8 + $0x58] sm:$0xff]
    %v1402 = vld [vmem:[#allocation8 + $0x60] sm:$0xff]
    %v1403 = vld [vmem:[#allocation8 + $0x68] sm:$0xff]
    %v1404 = vld [vmem:[#allocation8 + $0x70] sm:$0xff]
    %v1405 = vld [vmem:[#allocation8 + $0x78] sm:$0xff]
    %v1406 = vld [vmem:[%s4] sm:$0x1]
    %v1408 = vperm.slane %v1406, 0
    %1410 = vmatpush.msra.mxu0 %v1405
    %1411 = vmatpush.msra.mxu0 %v1404
    %1412 = vmatpush.msra.mxu0 %v1403
    %1413 = vmatpush.msra.mxu0 %v1402
    %1414 = vmatpush.msra.mxu0 %v1401
    %1415 = vmatpush.msra.mxu0 %v1400
    %1416 = vmatpush.msra.mxu0 %v1399
    %1417 = vmatpush.msra.mxu0 %v1398
    %1418 = vmatpush.msra.mxu0 %v1397
    %1419 = vmatpush.msra.mxu0 %v1396
    %1420 = vmatpush.msra.mxu0 %v1395
    %1421 = vmatpush.msra.mxu0 %v1394
    %1422 = vmatpush.msra.mxu0 %v1393
    %1423 = vmatpush.msra.mxu0 %v1392
    %1424 = vmatpush.msra.mxu0 %v1391
    %1425 = vmatpush.msra.mxu0 %v1390
    %1426 = vmatmul.f32.gmra.mxu0 %v1386
    %v1427 = vpop.f32.mrf.mxu0
    %v1428 = vadd.f32 %v1408, %v1427
    %1429 = vmatmul.f32.gmra.mxu0 %v1387
    %v1430 = vpop.f32.mrf.mxu0
    %v1431 = vadd.f32 %v1408, %v1430
    %1432 = vmatmul.f32.gmra.mxu0 %v1388
    %v1433 = vpop.f32.mrf.mxu0
    %v1434 = vadd.f32 %v1408, %v1433
    %1435 = vmatmul.f32.gmra.mxu0 %v1389
    %v1436 = vpop.f32.mrf.mxu0
    %v1437 = vadd.f32 %v1408, %v1436
    %1438 = vdwg.mxu0
    %v1439 = vadd.f32 %v201, %v1428
    %v1440 = vadd.f32 %v1431, 0.0
    %v1441 = vadd.f32 %v202, %v1434
    %v1442 = vadd.f32 %v1437, 0.0
    %v1443 = vld [vmem:[#allocation10] sm:$0x1]
    %v1444 = vld [vmem:[#allocation11] sm:$0x1]
    %1445 = vadd.xlane.f32.xlu0 %v1439
    %v1446 = vpop.xlane.xlu0 %1445
    %1447 = vadd.xlane.f32.xlu0 %v1440
    %v1448 = vpop.xlane.xlu0 %1447
    %1449 = vadd.xlane.f32.xlu0 %v1441
    %v1450 = vpop.xlane.xlu0 %1449
    %1451 = vadd.xlane.f32.xlu0 %v1442
    %v1452 = vpop.xlane.xlu0 %1451
    %v1453 = vrcp.pop 128.0
    %v1454 = vmul.f32 128.0, %v1453
    %v1455 = vsub.f32 1.0, %v1454
    %v1456 = vmul.f32 %v1453, %v1455
    %v1457 = vadd.f32 %v1453, %v1456
    %vm1458 = vweird.f32 %v1453
    %v1459 = vsel %vm1458, %v1453, %v1457
    %v1460 = vmul.f32 %v1446, %v1459
    %v1461 = vmul.f32 %v1448, %v1459
    %v1462 = vmul.f32 %v1450, %v1459
    %v1463 = vmul.f32 %v1452, %v1459
    %v1464 = vmul.f32 %v1439, %v1439
    %v1465 = vmul.f32 %v1440, %v1440
    %v1466 = vmul.f32 %v1441, %v1441
    %v1467 = vmul.f32 %v1442, %v1442
    %1468 = vadd.xlane.f32.xlu0 %v1464
    %v1469 = vpop.xlane.xlu0 %1468
    %1470 = vadd.xlane.f32.xlu0 %v1465
    %v1471 = vpop.xlane.xlu0 %1470
    %1472 = vadd.xlane.f32.xlu0 %v1466
    %v1473 = vpop.xlane.xlu0 %1472
    %1474 = vadd.xlane.f32.xlu0 %v1467
    %v1475 = vpop.xlane.xlu0 %1474
    %v1476 = vmul.f32 %v1469, %v1459
    %v1477 = vmul.f32 %v1471, %v1459
    %v1478 = vmul.f32 %v1473, %v1459
    %v1479 = vmul.f32 %v1475, %v1459
    %v1480 = vmul.f32 %v1460, %v1460
    %v1481 = vmul.f32 %v1461, %v1461
    %v1482 = vmul.f32 %v1462, %v1462
    %v1483 = vmul.f32 %v1463, %v1463
    %v1484 = vsub.f32 %v1476, %v1480
    %v1485 = vsub.f32 %v1477, %v1481
    %v1486 = vsub.f32 %v1478, %v1482
    %v1487 = vsub.f32 %v1479, %v1483
    %v1488 = vsub.f32 %v1439, %v1460
    %v1489 = vsub.f32 %v1440, %v1461
    %v1490 = vsub.f32 %v1441, %v1462
    %v1491 = vsub.f32 %v1442, %v1463
    %v1492 = vadd.f32 %v1484, 1e-05
    %v1493 = vadd.f32 %v1485, 1e-05
    %v1494 = vadd.f32 %v1486, 1e-05
    %v1495 = vadd.f32 %v1487, 1e-05
    %v1496 = vrsqrt.pop %v1492
    %v1497 = vmul.f32 %v1496, %v1492
    %v1498 = vmul.f32 %v1497, %v1496
    %v1499 = vmul.f32 0.5, %v1498
    %v1500 = vsub.f32 1.5, %v1499
    %v1501 = vmul.f32 %v1496, %v1500
    %vm1502 = vweird.f32 %v1492
    %vm1503 = vweird.f32 %v1496
    %vm1504 = vmor %vm1502, %vm1503
    %v1505 = vsel %vm1504, %v1496, %v1501
    %v1506 = vrsqrt.pop %v1493
    %v1507 = vmul.f32 %v1506, %v1493
    %v1508 = vmul.f32 %v1507, %v1506
    %v1509 = vmul.f32 0.5, %v1508
    %v1510 = vsub.f32 1.5, %v1509
    %v1511 = vmul.f32 %v1506, %v1510
    %vm1512 = vweird.f32 %v1493
    %vm1513 = vweird.f32 %v1506
    %vm1514 = vmor %vm1512, %vm1513
    %v1515 = vsel %vm1514, %v1506, %v1511
    %v1516 = vrsqrt.pop %v1494
    %v1517 = vmul.f32 %v1516, %v1494
    %v1518 = vmul.f32 %v1517, %v1516
    %v1519 = vmul.f32 0.5, %v1518
    %v1520 = vsub.f32 1.5, %v1519
    %v1521 = vmul.f32 %v1516, %v1520
    %vm1522 = vweird.f32 %v1494
    %vm1523 = vweird.f32 %v1516
    %vm1524 = vmor %vm1522, %vm1523
    %v1525 = vsel %vm1524, %v1516, %v1521
    %v1526 = vrsqrt.pop %v1495
    %v1527 = vmul.f32 %v1526, %v1495
    %v1528 = vmul.f32 %v1527, %v1526
    %v1529 = vmul.f32 0.5, %v1528
    %v1530 = vsub.f32 1.5, %v1529
    %v1531 = vmul.f32 %v1526, %v1530
    %vm1532 = vweird.f32 %v1495
    %vm1533 = vweird.f32 %v1526
    %vm1534 = vmor %vm1532, %vm1533
    %v1535 = vsel %vm1534, %v1526, %v1531
    %v1536 = vmul.f32 %v1488, %v1505
    %v1537 = vmul.f32 %v1489, %v1515
    %v1538 = vmul.f32 %v1490, %v1525
    %v1539 = vmul.f32 %v1491, %v1535
    %v1541 = vperm.slane %v1443, 0
    %v1543 = vmul.f32 %v1536, %v1541
    %v1544 = vmul.f32 %v1537, %v1541
    %v1545 = vmul.f32 %v1538, %v1541
    %v1546 = vmul.f32 %v1539, %v1541
    %v1548 = vperm.slane %v1444, 0
    %v1550 = vadd.f32 %v1543, %v1548
    %v1551 = vadd.f32 %v1544, %v1548
    %v1552 = vadd.f32 %v1545, %v1548
    %v1553 = vadd.f32 %v1546, %v1548
    %v1554 = vld [vmem:[#allocation16] sm:$0xff]
    %v1555 = vld [vmem:[#allocation16 + $0x8] sm:$0xff]
    %v1556 = vld [vmem:[#allocation16 + $0x10] sm:$0xff]
    %v1557 = vld [vmem:[#allocation16 + $0x18] sm:$0xff]
    %v1558 = vld [vmem:[#allocation16 + $0x20] sm:$0xff]
    %v1559 = vld [vmem:[#allocation16 + $0x28] sm:$0xff]
    %v1560 = vld [vmem:[#allocation16 + $0x30] sm:$0xff]
    %v1561 = vld [vmem:[#allocation16 + $0x38] sm:$0xff]
    %v1562 = vld [vmem:[#allocation16 + $0x40] sm:$0xff]
    %v1563 = vld [vmem:[#allocation16 + $0x48] sm:$0xff]
    %v1564 = vld [vmem:[#allocation16 + $0x50] sm:$0xff]
    %v1565 = vld [vmem:[#allocation16 + $0x58] sm:$0xff]
    %v1566 = vld [vmem:[#allocation16 + $0x60] sm:$0xff]
    %v1567 = vld [vmem:[#allocation16 + $0x68] sm:$0xff]
    %v1568 = vld [vmem:[#allocation16 + $0x70] sm:$0xff]
    %v1569 = vld [vmem:[#allocation16 + $0x78] sm:$0xff]
    %v1570 = vld [vmem:[#allocation16 + $0x80] sm:$0xff]
    %v1571 = vld [vmem:[#allocation16 + $0x88] sm:$0xff]
    %v1572 = vld [vmem:[#allocation16 + $0x90] sm:$0xff]
    %v1573 = vld [vmem:[#allocation16 + $0x98] sm:$0xff]
    %v1574 = vld [vmem:[#allocation16 + $0xa0] sm:$0xff]
    %v1575 = vld [vmem:[#allocation16 + $0xa8] sm:$0xff]
    %v1576 = vld [vmem:[#allocation16 + $0xb0] sm:$0xff]
    %v1577 = vld [vmem:[#allocation16 + $0xb8] sm:$0xff]
    %v1578 = vld [vmem:[#allocation16 + $0xc0] sm:$0xff]
    %v1579 = vld [vmem:[#allocation16 + $0xc8] sm:$0xff]
    %v1580 = vld [vmem:[#allocation16 + $0xd0] sm:$0xff]
    %v1581 = vld [vmem:[#allocation16 + $0xd8] sm:$0xff]
    %v1582 = vld [vmem:[#allocation16 + $0xe0] sm:$0xff]
    %v1583 = vld [vmem:[#allocation16 + $0xe8] sm:$0xff]
    %v1584 = vld [vmem:[#allocation16 + $0xf0] sm:$0xff]
    %v1585 = vld [vmem:[#allocation16 + $0xf8] sm:$0xff]
    %v1586 = vld [vmem:[%s10] sm:$0x3]
    %v1588 = vperm.slane %v1586, 0
    %v1589 = vperm.slane %v1586, 1
    %1592 = vmatpush.msra.mxu0 %v1584
    %1593 = vmatpush.msra.mxu0 %v1582
    %1594 = vmatpush.msra.mxu0 %v1580
    %1595 = vmatpush.msra.mxu0 %v1578
    %1596 = vmatpush.msra.mxu0 %v1576
    %1597 = vmatpush.msra.mxu0 %v1574
    %1598 = vmatpush.msra.mxu0 %v1572
    %1599 = vmatpush.msra.mxu0 %v1570
    %1600 = vmatpush.msra.mxu0 %v1568
    %1601 = vmatpush.msra.mxu0 %v1566
    %1602 = vmatpush.msra.mxu0 %v1564
    %1603 = vmatpush.msra.mxu0 %v1562
    %1604 = vmatpush.msra.mxu0 %v1560
    %1605 = vmatpush.msra.mxu0 %v1558
    %1606 = vmatpush.msra.mxu0 %v1556
    %1607 = vmatpush.msra.mxu0 %v1554
    %1608 = vmatmul.f32.gmra.mxu0 %v1550
    %v1609 = vpop.f32.mrf.mxu0
    %v1610 = vadd.f32 %v1588, %v1609
    %1611 = vmatmul.f32.gmra.mxu0 %v1551
    %v1612 = vpop.f32.mrf.mxu0
    %v1613 = vadd.f32 %v1588, %v1612
    %1614 = vmatmul.f32.gmra.mxu0 %v1552
    %v1615 = vpop.f32.mrf.mxu0
    %v1616 = vadd.f32 %v1588, %v1615
    %1617 = vmatmul.f32.gmra.mxu0 %v1553
    %v1618 = vpop.f32.mrf.mxu0
    %v1619 = vadd.f32 %v1588, %v1618
    %1620 = vdwg.mxu0
    %1621 = vmatpush.msra.mxu0 %v1585
    %1622 = vmatpush.msra.mxu0 %v1583
    %1623 = vmatpush.msra.mxu0 %v1581
    %1624 = vmatpush.msra.mxu0 %v1579
    %1625 = vmatpush.msra.mxu0 %v1577
    %1626 = vmatpush.msra.mxu0 %v1575
    %1627 = vmatpush.msra.mxu0 %v1573
    %1628 = vmatpush.msra.mxu0 %v1571
    %1629 = vmatpush.msra.mxu0 %v1569
    %1630 = vmatpush.msra.mxu0 %v1567
    %1631 = vmatpush.msra.mxu0 %v1565
    %1632 = vmatpush.msra.mxu0 %v1563
    %1633 = vmatpush.msra.mxu0 %v1561
    %1634 = vmatpush.msra.mxu0 %v1559
    %1635 = vmatpush.msra.mxu0 %v1557
    %1636 = vmatpush.msra.mxu0 %v1555
    %1637 = vmatmul.f32.gmra.mxu0 %v1550
    %v1638 = vpop.f32.mrf.mxu0
    %v1639 = vadd.f32 %v1589, %v1638
    %1640 = vmatmul.f32.gmra.mxu0 %v1551
    %v1641 = vpop.f32.mrf.mxu0
    %v1642 = vadd.f32 %v1589, %v1641
    %1643 = vmatmul.f32.gmra.mxu0 %v1552
    %v1644 = vpop.f32.mrf.mxu0
    %v1645 = vadd.f32 %v1589, %v1644
    %1646 = vmatmul.f32.gmra.mxu0 %v1553
    %v1647 = vpop.f32.mrf.mxu0
    %v1648 = vadd.f32 %v1589, %v1647
    %1649 = vdwg.mxu0
    %v1650 = vmax.f32 %v1610, 0.0
    %v1651 = vmax.f32 %v1639, 0.0
    %v1652 = vmax.f32 %v1613, 0.0
    %v1653 = vmax.f32 %v1642, 0.0
    %v1654 = vmax.f32 %v1616, 0.0
    %v1655 = vmax.f32 %v1645, 0.0
    %v1656 = vmax.f32 %v1619, 0.0
    %v1657 = vmax.f32 %v1648, 0.0
    %v1658 = vld [vmem:[#allocation17] sm:$0xff]
    %v1659 = vld [vmem:[#allocation17 + $0x8] sm:$0xff]
    %v1660 = vld [vmem:[#allocation17 + $0x10] sm:$0xff]
    %v1661 = vld [vmem:[#allocation17 + $0x18] sm:$0xff]
    %v1662 = vld [vmem:[#allocation17 + $0x20] sm:$0xff]
    %v1663 = vld [vmem:[#allocation17 + $0x28] sm:$0xff]
    %v1664 = vld [vmem:[#allocation17 + $0x30] sm:$0xff]
    %v1665 = vld [vmem:[#allocation17 + $0x38] sm:$0xff]
    %v1666 = vld [vmem:[#allocation17 + $0x40] sm:$0xff]
    %v1667 = vld [vmem:[#allocation17 + $0x48] sm:$0xff]
    %v1668 = vld [vmem:[#allocation17 + $0x50] sm:$0xff]
    %v1669 = vld [vmem:[#allocation17 + $0x58] sm:$0xff]
    %v1670 = vld [vmem:[#allocation17 + $0x60] sm:$0xff]
    %v1671 = vld [vmem:[#allocation17 + $0x68] sm:$0xff]
    %v1672 = vld [vmem:[#allocation17 + $0x70] sm:$0xff]
    %v1673 = vld [vmem:[#allocation17 + $0x78] sm:$0xff]
    %v1674 = vld [vmem:[#allocation17 + $0x80] sm:$0xff]
    %v1675 = vld [vmem:[#allocation17 + $0x88] sm:$0xff]
    %v1676 = vld [vmem:[#allocation17 + $0x90] sm:$0xff]
    %v1677 = vld [vmem:[#allocation17 + $0x98] sm:$0xff]
    %v1678 = vld [vmem:[#allocation17 + $0xa0] sm:$0xff]
    %v1679 = vld [vmem:[#allocation17 + $0xa8] sm:$0xff]
    %v1680 = vld [vmem:[#allocation17 + $0xb0] sm:$0xff]
    %v1681 = vld [vmem:[#allocation17 + $0xb8] sm:$0xff]
    %v1682 = vld [vmem:[#allocation17 + $0xc0] sm:$0xff]
    %v1683 = vld [vmem:[#allocation17 + $0xc8] sm:$0xff]
    %v1684 = vld [vmem:[#allocation17 + $0xd0] sm:$0xff]
    %v1685 = vld [vmem:[#allocation17 + $0xd8] sm:$0xff]
    %v1686 = vld [vmem:[#allocation17 + $0xe0] sm:$0xff]
    %v1687 = vld [vmem:[#allocation17 + $0xe8] sm:$0xff]
    %v1688 = vld [vmem:[#allocation17 + $0xf0] sm:$0xff]
    %v1689 = vld [vmem:[#allocation17 + $0xf8] sm:$0xff]
    %v1690 = vld [vmem:[%s12] sm:$0x1]
    %v1692 = vperm.slane %v1690, 0
    %1694 = vmatpush.msra.mxu0 %v1673
    %1695 = vmatpush.msra.mxu0 %v1672
    %1696 = vmatpush.msra.mxu0 %v1671
    %1697 = vmatpush.msra.mxu0 %v1670
    %1698 = vmatpush.msra.mxu0 %v1669
    %1699 = vmatpush.msra.mxu0 %v1668
    %1700 = vmatpush.msra.mxu0 %v1667
    %1701 = vmatpush.msra.mxu0 %v1666
    %1702 = vmatpush.msra.mxu0 %v1665
    %1703 = vmatpush.msra.mxu0 %v1664
    %1704 = vmatpush.msra.mxu0 %v1663
    %1705 = vmatpush.msra.mxu0 %v1662
    %1706 = vmatpush.msra.mxu0 %v1661
    %1707 = vmatpush.msra.mxu0 %v1660
    %1708 = vmatpush.msra.mxu0 %v1659
    %1709 = vmatpush.msra.mxu0 %v1658
    %1710 = vmatmul.f32.gmra.mxu0 %v1650
    %v1711 = vpop.f32.mrf.mxu0
    %v1712 = vadd.f32 %v1692, %v1711
    %1713 = vmatmul.f32.gmra.mxu0 %v1652
    %v1714 = vpop.f32.mrf.mxu0
    %v1715 = vadd.f32 %v1692, %v1714
    %1716 = vmatmul.f32.gmra.mxu0 %v1654
    %v1717 = vpop.f32.mrf.mxu0
    %v1718 = vadd.f32 %v1692, %v1717
    %1719 = vmatmul.f32.gmra.mxu0 %v1656
    %v1720 = vpop.f32.mrf.mxu0
    %v1721 = vadd.f32 %v1692, %v1720
    %1722 = vdwg.mxu0
    %1723 = vmatpush.msra.mxu0 %v1689
    %1724 = vmatpush.msra.mxu0 %v1688
    %1725 = vmatpush.msra.mxu0 %v1687
    %1726 = vmatpush.msra.mxu0 %v1686
    %1727 = vmatpush.msra.mxu0 %v1685
    %1728 = vmatpush.msra.mxu0 %v1684
    %1729 = vmatpush.msra.mxu0 %v1683
    %1730 = vmatpush.msra.mxu0 %v1682
    %1731 = vmatpush.msra.mxu0 %v1681
    %1732 = vmatpush.msra.mxu0 %v1680
    %1733 = vmatpush.msra.mxu0 %v1679
    %1734 = vmatpush.msra.mxu0 %v1678
    %1735 = vmatpush.msra.mxu0 %v1677
    %1736 = vmatpush.msra.mxu0 %v1676
    %1737 = vmatpush.msra.mxu0 %v1675
    %1738 = vmatpush.msra.mxu0 %v1674
    %1739 = vmatmul.f32.gmra.mxu0 %v1651
    %v1740 = vpop.f32.mrf.mxu0
    %v1741 = vadd.f32 %v1712, %v1740
    %1742 = vmatmul.f32.gmra.mxu0 %v1653
    %v1743 = vpop.f32.mrf.mxu0
    %v1744 = vadd.f32 %v1715, %v1743
    %1745 = vmatmul.f32.gmra.mxu0 %v1655
    %v1746 = vpop.f32.mrf.mxu0
    %v1747 = vadd.f32 %v1718, %v1746
    %1748 = vmatmul.f32.gmra.mxu0 %v1657
    %v1749 = vpop.f32.mrf.mxu0
    %v1750 = vadd.f32 %v1721, %v1749
    %1751 = vdwg.mxu0
    %v1752 = vadd.f32 %v1550, %v1741
    %v1753 = vadd.f32 %v1551, %v1744
    %v1754 = vadd.f32 %v1552, %v1747
    %v1755 = vadd.f32 %v1553, %v1750
    %v1756 = vld [vmem:[#allocation13] sm:$0x1]
    %v1757 = vld [vmem:[#allocation14] sm:$0x1]
    %1758 = vadd.xlane.f32.xlu0 %v1752
    %v1759 = vpop.xlane.xlu0 %1758
    %1760 = vadd.xlane.f32.xlu0 %v1753
    %v1761 = vpop.xlane.xlu0 %1760
    %1762 = vadd.xlane.f32.xlu0 %v1754
    %v1763 = vpop.xlane.xlu0 %1762
    %1764 = vadd.xlane.f32.xlu0 %v1755
    %v1765 = vpop.xlane.xlu0 %1764
    %v1766 = vmul.f32 %v1759, %v1459
    %v1767 = vmul.f32 %v1761, %v1459
    %v1768 = vmul.f32 %v1763, %v1459
    %v1769 = vmul.f32 %v1765, %v1459
    %v1770 = vmul.f32 %v1752, %v1752
    %v1771 = vmul.f32 %v1753, %v1753
    %v1772 = vmul.f32 %v1754, %v1754
    %v1773 = vmul.f32 %v1755, %v1755
    %1774 = vadd.xlane.f32.xlu0 %v1770
    %v1775 = vpop.xlane.xlu0 %1774
    %1776 = vadd.xlane.f32.xlu0 %v1771
    %v1777 = vpop.xlane.xlu0 %1776
    %1778 = vadd.xlane.f32.xlu0 %v1772
    %v1779 = vpop.xlane.xlu0 %1778
    %1780 = vadd.xlane.f32.xlu0 %v1773
    %v1781 = vpop.xlane.xlu0 %1780
    %v1782 = vmul.f32 %v1775, %v1459
    %v1783 = vmul.f32 %v1777, %v1459
    %v1784 = vmul.f32 %v1779, %v1459
    %v1785 = vmul.f32 %v1781, %v1459
    %v1786 = vmul.f32 %v1766, %v1766
    %v1787 = vmul.f32 %v1767, %v1767
    %v1788 = vmul.f32 %v1768, %v1768
    %v1789 = vmul.f32 %v1769, %v1769
    %v1790 = vsub.f32 %v1782, %v1786
    %v1791 = vsub.f32 %v1783, %v1787
    %v1792 = vsub.f32 %v1784, %v1788
    %v1793 = vsub.f32 %v1785, %v1789
    %v1794 = vsub.f32 %v1752, %v1766
    %v1795 = vsub.f32 %v1753, %v1767
    %v1796 = vsub.f32 %v1754, %v1768
    %v1797 = vsub.f32 %v1755, %v1769
    %v1798 = vadd.f32 %v1790, 1e-05
    %v1799 = vadd.f32 %v1791, 1e-05
    %v1800 = vadd.f32 %v1792, 1e-05
    %v1801 = vadd.f32 %v1793, 1e-05
    %v1802 = vrsqrt.pop %v1798
    %v1803 = vmul.f32 %v1802, %v1798
    %v1804 = vmul.f32 %v1803, %v1802
    %v1805 = vmul.f32 0.5, %v1804
    %v1806 = vsub.f32 1.5, %v1805
    %v1807 = vmul.f32 %v1802, %v1806
    %vm1808 = vweird.f32 %v1798
    %vm1809 = vweird.f32 %v1802
    %vm1810 = vmor %vm1808, %vm1809
    %v1811 = vsel %vm1810, %v1802, %v1807
    %v1812 = vrsqrt.pop %v1799
    %v1813 = vmul.f32 %v1812, %v1799
    %v1814 = vmul.f32 %v1813, %v1812
    %v1815 = vmul.f32 0.5, %v1814
    %v1816 = vsub.f32 1.5, %v1815
    %v1817 = vmul.f32 %v1812, %v1816
    %vm1818 = vweird.f32 %v1799
    %vm1819 = vweird.f32 %v1812
    %vm1820 = vmor %vm1818, %vm1819
    %v1821 = vsel %vm1820, %v1812, %v1817
    %v1822 = vrsqrt.pop %v1800
    %v1823 = vmul.f32 %v1822, %v1800
    %v1824 = vmul.f32 %v1823, %v1822
    %v1825 = vmul.f32 0.5, %v1824
    %v1826 = vsub.f32 1.5, %v1825
    %v1827 = vmul.f32 %v1822, %v1826
    %vm1828 = vweird.f32 %v1800
    %vm1829 = vweird.f32 %v1822
    %vm1830 = vmor %vm1828, %vm1829
    %v1831 = vsel %vm1830, %v1822, %v1827
    %v1832 = vrsqrt.pop %v1801
    %v1833 = vmul.f32 %v1832, %v1801
    %v1834 = vmul.f32 %v1833, %v1832
    %v1835 = vmul.f32 0.5, %v1834
    %v1836 = vsub.f32 1.5, %v1835
    %v1837 = vmul.f32 %v1832, %v1836
    %vm1838 = vweird.f32 %v1801
    %vm1839 = vweird.f32 %v1832
    %vm1840 = vmor %vm1838, %vm1839
    %v1841 = vsel %vm1840, %v1832, %v1837
    %v1842 = vmul.f32 %v1794, %v1811
    %v1843 = vmul.f32 %v1795, %v1821
    %v1844 = vmul.f32 %v1796, %v1831
    %v1845 = vmul.f32 %v1797, %v1841
    %v1847 = vperm.slane %v1756, 0
    %v1849 = vmul.f32 %v1842, %v1847
    %v1850 = vmul.f32 %v1843, %v1847
    %v1851 = vmul.f32 %v1844, %v1847
    %v1852 = vmul.f32 %v1845, %v1847
    %v1854 = vperm.slane %v1757, 0
    %v1856 = vadd.f32 %v1849, %v1854
    %v1857 = vadd.f32 %v1850, %v1854
    %v1858 = vadd.f32 %v1851, %v1854
    %v1859 = vadd.f32 %v1852, %v1854
    %s1860 = scalar_lea.vmem [#allocation5], 384
    %v1861 = vld [vmem:[%s1860] sm:$0xff]
    %v1862 = vld [vmem:[%s1860 + $0x8] sm:$0xff]
    %v1863 = vld [vmem:[%s1860 + $0x10] sm:$0xff]
    %v1864 = vld [vmem:[%s1860 + $0x18] sm:$0xff]
    %v1865 = vld [vmem:[%s1860 + $0x20] sm:$0xff]
    %v1866 = vld [vmem:[%s1860 + $0x28] sm:$0xff]
    %v1867 = vld [vmem:[%s1860 + $0x30] sm:$0xff]
    %v1868 = vld [vmem:[%s1860 + $0x38] sm:$0xff]
    %v1869 = vld [vmem:[%s1860 + $0x40] sm:$0xff]
    %v1870 = vld [vmem:[%s1860 + $0x48] sm:$0xff]
    %v1871 = vld [vmem:[%s1860 + $0x50] sm:$0xff]
    %v1872 = vld [vmem:[%s1860 + $0x58] sm:$0xff]
    %v1873 = vld [vmem:[%s1860 + $0x60] sm:$0xff]
    %v1874 = vld [vmem:[%s1860 + $0x68] sm:$0xff]
    %v1875 = vld [vmem:[%s1860 + $0x70] sm:$0xff]
    %v1876 = vld [vmem:[%s1860 + $0x78] sm:$0xff]
    %v1877 = vld [vmem:[%s1860 + $0x80] sm:$0xff]
    %v1878 = vld [vmem:[%s1860 + $0x88] sm:$0xff]
    %v1879 = vld [vmem:[%s1860 + $0x90] sm:$0xff]
    %v1880 = vld [vmem:[%s1860 + $0x98] sm:$0xff]
    %v1881 = vld [vmem:[%s1860 + $0xa0] sm:$0xff]
    %v1882 = vld [vmem:[%s1860 + $0xa8] sm:$0xff]
    %v1883 = vld [vmem:[%s1860 + $0xb0] sm:$0xff]
    %v1884 = vld [vmem:[%s1860 + $0xb8] sm:$0xff]
    %v1885 = vld [vmem:[%s1860 + $0xc0] sm:$0xff]
    %v1886 = vld [vmem:[%s1860 + $0xc8] sm:$0xff]
    %v1887 = vld [vmem:[%s1860 + $0xd0] sm:$0xff]
    %v1888 = vld [vmem:[%s1860 + $0xd8] sm:$0xff]
    %v1889 = vld [vmem:[%s1860 + $0xe0] sm:$0xff]
    %v1890 = vld [vmem:[%s1860 + $0xe8] sm:$0xff]
    %v1891 = vld [vmem:[%s1860 + $0xf0] sm:$0xff]
    %v1892 = vld [vmem:[%s1860 + $0xf8] sm:$0xff]
    %v1893 = vld [vmem:[%s1860 + $0x100] sm:$0xff]
    %v1894 = vld [vmem:[%s1860 + $0x108] sm:$0xff]
    %v1895 = vld [vmem:[%s1860 + $0x110] sm:$0xff]
    %v1896 = vld [vmem:[%s1860 + $0x118] sm:$0xff]
    %v1897 = vld [vmem:[%s1860 + $0x120] sm:$0xff]
    %v1898 = vld [vmem:[%s1860 + $0x128] sm:$0xff]
    %v1899 = vld [vmem:[%s1860 + $0x130] sm:$0xff]
    %v1900 = vld [vmem:[%s1860 + $0x138] sm:$0xff]
    %v1901 = vld [vmem:[%s1860 + $0x140] sm:$0xff]
    %v1902 = vld [vmem:[%s1860 + $0x148] sm:$0xff]
    %v1903 = vld [vmem:[%s1860 + $0x150] sm:$0xff]
    %v1904 = vld [vmem:[%s1860 + $0x158] sm:$0xff]
    %v1905 = vld [vmem:[%s1860 + $0x160] sm:$0xff]
    %v1906 = vld [vmem:[%s1860 + $0x168] sm:$0xff]
    %v1907 = vld [vmem:[%s1860 + $0x170] sm:$0xff]
    %v1908 = vld [vmem:[%s1860 + $0x178] sm:$0xff]
    %s1909 = scalar_lea.vmem [#allocation7], 3
    %v1910 = vld [vmem:[%s1909] sm:$0x7]
    %v1912 = vperm.slane %v1910, 0
    %v1913 = vperm.slane %v1910, 1
    %v1914 = vperm.slane %v1910, 2
    %1918 = vmatpush.msra.mxu0 %v1906
    %1919 = vmatpush.msra.mxu0 %v1903
    %1920 = vmatpush.msra.mxu0 %v1900
    %1921 = vmatpush.msra.mxu0 %v1897
    %1922 = vmatpush.msra.mxu0 %v1894
    %1923 = vmatpush.msra.mxu0 %v1891
    %1924 = vmatpush.msra.mxu0 %v1888
    %1925 = vmatpush.msra.mxu0 %v1885
    %1926 = vmatpush.msra.mxu0 %v1882
    %1927 = vmatpush.msra.mxu0 %v1879
    %1928 = vmatpush.msra.mxu0 %v1876
    %1929 = vmatpush.msra.mxu0 %v1873
    %1930 = vmatpush.msra.mxu0 %v1870
    %1931 = vmatpush.msra.mxu0 %v1867
    %1932 = vmatpush.msra.mxu0 %v1864
    %1933 = vmatpush.msra.mxu0 %v1861
    %1934 = vmatmul.f32.gmra.mxu0 %v1856
    %v1935 = vpop.f32.mrf.mxu0
    %v1936 = vadd.f32 %v1912, %v1935
    %1937 = vmatmul.f32.gmra.mxu0 %v1857
    %v1938 = vpop.f32.mrf.mxu0
    %v1939 = vadd.f32 %v1912, %v1938
    %1940 = vmatmul.f32.gmra.mxu0 %v1858
    %v1941 = vpop.f32.mrf.mxu0
    %v1942 = vadd.f32 %v1912, %v1941
    %1943 = vmatmul.f32.gmra.mxu0 %v1859
    %v1944 = vpop.f32.mrf.mxu0
    %v1945 = vadd.f32 %v1912, %v1944
    %1946 = vdwg.mxu0
    %1947 = vmatpush.msra.mxu0 %v1907
    %1948 = vmatpush.msra.mxu0 %v1904
    %1949 = vmatpush.msra.mxu0 %v1901
    %1950 = vmatpush.msra.mxu0 %v1898
    %1951 = vmatpush.msra.mxu0 %v1895
    %1952 = vmatpush.msra.mxu0 %v1892
    %1953 = vmatpush.msra.mxu0 %v1889
    %1954 = vmatpush.msra.mxu0 %v1886
    %1955 = vmatpush.msra.mxu0 %v1883
    %1956 = vmatpush.msra.mxu0 %v1880
    %1957 = vmatpush.msra.mxu0 %v1877
    %1958 = vmatpush.msra.mxu0 %v1874
    %1959 = vmatpush.msra.mxu0 %v1871
    %1960 = vmatpush.msra.mxu0 %v1868
    %1961 = vmatpush.msra.mxu0 %v1865
    %1962 = vmatpush.msra.mxu0 %v1862
    %1963 = vmatmul.f32.gmra.mxu0 %v1856
    %v1964 = vpop.f32.mrf.mxu0
    %v1965 = vadd.f32 %v1913, %v1964
    %1966 = vmatmul.f32.gmra.mxu0 %v1857
    %v1967 = vpop.f32.mrf.mxu0
    %v1968 = vadd.f32 %v1913, %v1967
    %1969 = vmatmul.f32.gmra.mxu0 %v1858
    %v1970 = vpop.f32.mrf.mxu0
    %v1971 = vadd.f32 %v1913, %v1970
    %1972 = vmatmul.f32.gmra.mxu0 %v1859
    %v1973 = vpop.f32.mrf.mxu0
    %v1974 = vadd.f32 %v1913, %v1973
    %1975 = vdwg.mxu0
    %1976 = vmatpush.msra.mxu0 %v1908
    %1977 = vmatpush.msra.mxu0 %v1905
    %1978 = vmatpush.msra.mxu0 %v1902
    %1979 = vmatpush.msra.mxu0 %v1899
    %1980 = vmatpush.msra.mxu0 %v1896
    %1981 = vmatpush.msra.mxu0 %v1893
    %1982 = vmatpush.msra.mxu0 %v1890
    %1983 = vmatpush.msra.mxu0 %v1887
    %1984 = vmatpush.msra.mxu0 %v1884
    %1985 = vmatpush.msra.mxu0 %v1881
    %1986 = vmatpush.msra.mxu0 %v1878
    %1987 = vmatpush.msra.mxu0 %v1875
    %1988 = vmatpush.msra.mxu0 %v1872
    %1989 = vmatpush.msra.mxu0 %v1869
    %1990 = vmatpush.msra.mxu0 %v1866
    %1991 = vmatpush.msra.mxu0 %v1863
    %1992 = vmatmul.f32.gmra.mxu0 %v1856
    %v1993 = vpop.f32.mrf.mxu0
    %v1994 = vadd.f32 %v1914, %v1993
    %1995 = vmatmul.f32.gmra.mxu0 %v1857
    %v1996 = vpop.f32.mrf.mxu0
    %v1997 = vadd.f32 %v1914, %v1996
    %1998 = vmatmul.f32.gmra.mxu0 %v1858
    %v1999 = vpop.f32.mrf.mxu0
    %v2000 = vadd.f32 %v1914, %v1999
    %2001 = vmatmul.f32.gmra.mxu0 %v1859
    %v2002 = vpop.f32.mrf.mxu0
    %v2003 = vadd.f32 %v1914, %v2002
    %2004 = vdwg.mxu0
    %v2006 = vsel %vm350, %v1936, 0
    %v2009 = vsel %vm350, %v1939, 0
    %v2012 = vsel %vm350, %v1965, 0
    %v2015 = vsel %vm350, %v1968, 0
    %2017 = vmatpush.xpose.msra.mxu0 0.0
    %2018 = vmatpush.xpose.msra.mxu0 0.0
    %2019 = vmatpush.xpose.msra.mxu0 0.0
    %2020 = vmatpush.xpose.msra.mxu0 0.0
    %2021 = vmatpush.xpose.msra.mxu0 0.0
    %2022 = vmatpush.xpose.msra.mxu0 0.0
    %2023 = vmatpush.xpose.msra.mxu0 0.0
    %2024 = vmatpush.xpose.msra.mxu0 0.0
    %2025 = vmatpush.xpose.msra.mxu0 0.0
    %2026 = vmatpush.xpose.msra.mxu0 0.0
    %2027 = vmatpush.xpose.msra.mxu0 0.0
    %2028 = vmatpush.xpose.msra.mxu0 0.0
    %2029 = vmatpush.xpose.msra.mxu0 0.0
    %2030 = vmatpush.xpose.msra.mxu0 0.0
    %2031 = vmatpush.xpose.msra.mxu0 %v2015
    %2032 = vmatpush.xpose.msra.mxu0 %v2012
    %2033 = vmatmul.f32.gmra.mxu0 %v2006
    %v2034 = vpop.f32.mrf.mxu0
    %v2035 = vadd.f32 0.0, %v2034
    %2036 = vmatmul.f32.gmra.mxu0 %v2009
    %v2037 = vpop.f32.mrf.mxu0
    %v2038 = vadd.f32 0.0, %v2037
    %2039 = vdwg.mxu0
    %v2041 = vsel %vm350, %v1942, 0
    %v2044 = vsel %vm350, %v1945, 0
    %v2047 = vsel %vm350, %v1971, 0
    %v2050 = vsel %vm350, %v1974, 0
    %2052 = vmatpush.xpose.msra.mxu0 0.0
    %2053 = vmatpush.xpose.msra.mxu0 0.0
    %2054 = vmatpush.xpose.msra.mxu0 0.0
    %2055 = vmatpush.xpose.msra.mxu0 0.0
    %2056 = vmatpush.xpose.msra.mxu0 0.0
    %2057 = vmatpush.xpose.msra.mxu0 0.0
    %2058 = vmatpush.xpose.msra.mxu0 0.0
    %2059 = vmatpush.xpose.msra.mxu0 0.0
    %2060 = vmatpush.xpose.msra.mxu0 0.0
    %2061 = vmatpush.xpose.msra.mxu0 0.0
    %2062 = vmatpush.xpose.msra.mxu0 0.0
    %2063 = vmatpush.xpose.msra.mxu0 0.0
    %2064 = vmatpush.xpose.msra.mxu0 0.0
    %2065 = vmatpush.xpose.msra.mxu0 0.0
    %2066 = vmatpush.xpose.msra.mxu0 %v2050
    %2067 = vmatpush.xpose.msra.mxu0 %v2047
    %2068 = vmatmul.f32.gmra.mxu0 %v2041
    %v2069 = vpop.f32.mrf.mxu0
    %v2070 = vadd.f32 0.0, %v2069
    %2071 = vmatmul.f32.gmra.mxu0 %v2044
    %v2072 = vpop.f32.mrf.mxu0
    %v2073 = vadd.f32 0.0, %v2072
    %2074 = vdwg.mxu0
    %2075 = vrot.lane.b32.xlu0 %v1936, 96
    %v2076 = vpop.permute.xlu0 %2075
    %2077 = vrot.lane.b32.xlu0 %v1939, 96
    %v2078 = vpop.permute.xlu0 %2077
    %2079 = vrot.lane.b32.xlu0 %v1965, 96
    %v2080 = vpop.permute.xlu0 %2079
    %2081 = vrot.lane.b32.xlu0 %v1968, 96
    %v2082 = vpop.permute.xlu0 %2081
    %v2083 = vsel %vm350, %v2076, 0
    %v2085 = vsel %vm350, %v2078, 0
    %v2087 = vsel %vm350, %v2080, 0
    %v2089 = vsel %vm350, %v2082, 0
    %2091 = vmatpush.xpose.msra.mxu0 0.0
    %2092 = vmatpush.xpose.msra.mxu0 0.0
    %2093 = vmatpush.xpose.msra.mxu0 0.0
    %2094 = vmatpush.xpose.msra.mxu0 0.0
    %2095 = vmatpush.xpose.msra.mxu0 0.0
    %2096 = vmatpush.xpose.msra.mxu0 0.0
    %2097 = vmatpush.xpose.msra.mxu0 0.0
    %2098 = vmatpush.xpose.msra.mxu0 0.0
    %2099 = vmatpush.xpose.msra.mxu0 0.0
    %2100 = vmatpush.xpose.msra.mxu0 0.0
    %2101 = vmatpush.xpose.msra.mxu0 0.0
    %2102 = vmatpush.xpose.msra.mxu0 0.0
    %2103 = vmatpush.xpose.msra.mxu0 0.0
    %2104 = vmatpush.xpose.msra.mxu0 0.0
    %2105 = vmatpush.xpose.msra.mxu0 %v2089
    %2106 = vmatpush.xpose.msra.mxu0 %v2087
    %2107 = vmatmul.f32.gmra.mxu0 %v2083
    %v2108 = vpop.f32.mrf.mxu0
    %v2109 = vadd.f32 0.0, %v2108
    %2110 = vmatmul.f32.gmra.mxu0 %v2085
    %v2111 = vpop.f32.mrf.mxu0
    %v2112 = vadd.f32 0.0, %v2111
    %2113 = vdwg.mxu0
    %2114 = vrot.lane.b32.xlu0 %v1942, 96
    %v2115 = vpop.permute.xlu0 %2114
    %2116 = vrot.lane.b32.xlu0 %v1945, 96
    %v2117 = vpop.permute.xlu0 %2116
    %2118 = vrot.lane.b32.xlu0 %v1971, 96
    %v2119 = vpop.permute.xlu0 %2118
    %2120 = vrot.lane.b32.xlu0 %v1974, 96
    %v2121 = vpop.permute.xlu0 %2120
    %v2122 = vsel %vm350, %v2115, 0
    %v2124 = vsel %vm350, %v2117, 0
    %v2126 = vsel %vm350, %v2119, 0
    %v2128 = vsel %vm350, %v2121, 0
    %2130 = vmatpush.xpose.msra.mxu0 0.0
    %2131 = vmatpush.xpose.msra.mxu0 0.0
    %2132 = vmatpush.xpose.msra.mxu0 0.0
    %2133 = vmatpush.xpose.msra.mxu0 0.0
    %2134 = vmatpush.xpose.msra.mxu0 0.0
    %2135 = vmatpush.xpose.msra.mxu0 0.0
    %2136 = vmatpush.xpose.msra.mxu0 0.0
    %2137 = vmatpush.xpose.msra.mxu0 0.0
    %2138 = vmatpush.xpose.msra.mxu0 0.0
    %2139 = vmatpush.xpose.msra.mxu0 0.0
    %2140 = vmatpush.xpose.msra.mxu0 0.0
    %2141 = vmatpush.xpose.msra.mxu0 0.0
    %2142 = vmatpush.xpose.msra.mxu0 0.0
    %2143 = vmatpush.xpose.msra.mxu0 0.0
    %2144 = vmatpush.xpose.msra.mxu0 %v2128
    %2145 = vmatpush.xpose.msra.mxu0 %v2126
    %2146 = vmatmul.f32.gmra.mxu0 %v2122
    %v2147 = vpop.f32.mrf.mxu0
    %v2148 = vadd.f32 0.0, %v2147
    %2149 = vmatmul.f32.gmra.mxu0 %v2124
    %v2150 = vpop.f32.mrf.mxu0
    %v2151 = vadd.f32 0.0, %v2150
    %2152 = vdwg.mxu0
    %2153 = vrot.lane.b32.xlu0 %v1936, 64
    %v2154 = vpop.permute.xlu0 %2153
    %2155 = vrot.lane.b32.xlu0 %v1939, 64
    %v2156 = vpop.permute.xlu0 %2155
    %2157 = vrot.lane.b32.xlu0 %v1965, 64
    %v2158 = vpop.permute.xlu0 %2157
    %2159 = vrot.lane.b32.xlu0 %v1968, 64
    %v2160 = vpop.permute.xlu0 %2159
    %v2161 = vsel %vm350, %v2154, 0
    %v2163 = vsel %vm350, %v2156, 0
    %v2165 = vsel %vm350, %v2158, 0
    %v2167 = vsel %vm350, %v2160, 0
    %2169 = vmatpush.xpose.msra.mxu0 0.0
    %2170 = vmatpush.xpose.msra.mxu0 0.0
    %2171 = vmatpush.xpose.msra.mxu0 0.0
    %2172 = vmatpush.xpose.msra.mxu0 0.0
    %2173 = vmatpush.xpose.msra.mxu0 0.0
    %2174 = vmatpush.xpose.msra.mxu0 0.0
    %2175 = vmatpush.xpose.msra.mxu0 0.0
    %2176 = vmatpush.xpose.msra.mxu0 0.0
    %2177 = vmatpush.xpose.msra.mxu0 0.0
    %2178 = vmatpush.xpose.msra.mxu0 0.0
    %2179 = vmatpush.xpose.msra.mxu0 0.0
    %2180 = vmatpush.xpose.msra.mxu0 0.0
    %2181 = vmatpush.xpose.msra.mxu0 0.0
    %2182 = vmatpush.xpose.msra.mxu0 0.0
    %2183 = vmatpush.xpose.msra.mxu0 %v2167
    %2184 = vmatpush.xpose.msra.mxu0 %v2165
    %2185 = vmatmul.f32.gmra.mxu0 %v2161
    %v2186 = vpop.f32.mrf.mxu0
    %v2187 = vadd.f32 0.0, %v2186
    %2188 = vmatmul.f32.gmra.mxu0 %v2163
    %v2189 = vpop.f32.mrf.mxu0
    %v2190 = vadd.f32 0.0, %v2189
    %2191 = vdwg.mxu0
    %2192 = vrot.lane.b32.xlu0 %v1942, 64
    %v2193 = vpop.permute.xlu0 %2192
    %2194 = vrot.lane.b32.xlu0 %v1945, 64
    %v2195 = vpop.permute.xlu0 %2194
    %2196 = vrot.lane.b32.xlu0 %v1971, 64
    %v2197 = vpop.permute.xlu0 %2196
    %2198 = vrot.lane.b32.xlu0 %v1974, 64
    %v2199 = vpop.permute.xlu0 %2198
    %v2200 = vsel %vm350, %v2193, 0
    %v2202 = vsel %vm350, %v2195, 0
    %v2204 = vsel %vm350, %v2197, 0
    %v2206 = vsel %vm350, %v2199, 0
    %2208 = vmatpush.xpose.msra.mxu0 0.0
    %2209 = vmatpush.xpose.msra.mxu0 0.0
    %2210 = vmatpush.xpose.msra.mxu0 0.0
    %2211 = vmatpush.xpose.msra.mxu0 0.0
    %2212 = vmatpush.xpose.msra.mxu0 0.0
    %2213 = vmatpush.xpose.msra.mxu0 0.0
    %2214 = vmatpush.xpose.msra.mxu0 0.0
    %2215 = vmatpush.xpose.msra.mxu0 0.0
    %2216 = vmatpush.xpose.msra.mxu0 0.0
    %2217 = vmatpush.xpose.msra.mxu0 0.0
    %2218 = vmatpush.xpose.msra.mxu0 0.0
    %2219 = vmatpush.xpose.msra.mxu0 0.0
    %2220 = vmatpush.xpose.msra.mxu0 0.0
    %2221 = vmatpush.xpose.msra.mxu0 0.0
    %2222 = vmatpush.xpose.msra.mxu0 %v2206
    %2223 = vmatpush.xpose.msra.mxu0 %v2204
    %2224 = vmatmul.f32.gmra.mxu0 %v2200
    %v2225 = vpop.f32.mrf.mxu0
    %v2226 = vadd.f32 0.0, %v2225
    %2227 = vmatmul.f32.gmra.mxu0 %v2202
    %v2228 = vpop.f32.mrf.mxu0
    %v2229 = vadd.f32 0.0, %v2228
    %2230 = vdwg.mxu0
    %2231 = vrot.lane.b32.xlu0 %v1936, 32
    %v2232 = vpop.permute.xlu0 %2231
    %2233 = vrot.lane.b32.xlu0 %v1939, 32
    %v2234 = vpop.permute.xlu0 %2233
    %2235 = vrot.lane.b32.xlu0 %v1965, 32
    %v2236 = vpop.permute.xlu0 %2235
    %2237 = vrot.lane.b32.xlu0 %v1968, 32
    %v2238 = vpop.permute.xlu0 %2237
    %v2239 = vsel %vm350, %v2232, 0
    %v2241 = vsel %vm350, %v2234, 0
    %v2243 = vsel %vm350, %v2236, 0
    %v2245 = vsel %vm350, %v2238, 0
    %2247 = vmatpush.xpose.msra.mxu0 0.0
    %2248 = vmatpush.xpose.msra.mxu0 0.0
    %2249 = vmatpush.xpose.msra.mxu0 0.0
    %2250 = vmatpush.xpose.msra.mxu0 0.0
    %2251 = vmatpush.xpose.msra.mxu0 0.0
    %2252 = vmatpush.xpose.msra.mxu0 0.0
    %2253 = vmatpush.xpose.msra.mxu0 0.0
    %2254 = vmatpush.xpose.msra.mxu0 0.0
    %2255 = vmatpush.xpose.msra.mxu0 0.0
    %2256 = vmatpush.xpose.msra.mxu0 0.0
    %2257 = vmatpush.xpose.msra.mxu0 0.0
    %2258 = vmatpush.xpose.msra.mxu0 0.0
    %2259 = vmatpush.xpose.msra.mxu0 0.0
    %2260 = vmatpush.xpose.msra.mxu0 0.0
    %2261 = vmatpush.xpose.msra.mxu0 %v2245
    %2262 = vmatpush.xpose.msra.mxu0 %v2243
    %2263 = vmatmul.f32.gmra.mxu0 %v2239
    %v2264 = vpop.f32.mrf.mxu0
    %v2265 = vadd.f32 0.0, %v2264
    %2266 = vmatmul.f32.gmra.mxu0 %v2241
    %v2267 = vpop.f32.mrf.mxu0
    %v2268 = vadd.f32 0.0, %v2267
    %2269 = vdwg.mxu0
    %2270 = vrot.lane.b32.xlu0 %v1942, 32
    %v2271 = vpop.permute.xlu0 %2270
    %2272 = vrot.lane.b32.xlu0 %v1945, 32
    %v2273 = vpop.permute.xlu0 %2272
    %2274 = vrot.lane.b32.xlu0 %v1971, 32
    %v2275 = vpop.permute.xlu0 %2274
    %2276 = vrot.lane.b32.xlu0 %v1974, 32
    %v2277 = vpop.permute.xlu0 %2276
    %v2278 = vsel %vm350, %v2271, 0
    %v2280 = vsel %vm350, %v2273, 0
    %v2282 = vsel %vm350, %v2275, 0
    %v2284 = vsel %vm350, %v2277, 0
    %2286 = vmatpush.xpose.msra.mxu0 0.0
    %2287 = vmatpush.xpose.msra.mxu0 0.0
    %2288 = vmatpush.xpose.msra.mxu0 0.0
    %2289 = vmatpush.xpose.msra.mxu0 0.0
    %2290 = vmatpush.xpose.msra.mxu0 0.0
    %2291 = vmatpush.xpose.msra.mxu0 0.0
    %2292 = vmatpush.xpose.msra.mxu0 0.0
    %2293 = vmatpush.xpose.msra.mxu0 0.0
    %2294 = vmatpush.xpose.msra.mxu0 0.0
    %2295 = vmatpush.xpose.msra.mxu0 0.0
    %2296 = vmatpush.xpose.msra.mxu0 0.0
    %2297 = vmatpush.xpose.msra.mxu0 0.0
    %2298 = vmatpush.xpose.msra.mxu0 0.0
    %2299 = vmatpush.xpose.msra.mxu0 0.0
    %2300 = vmatpush.xpose.msra.mxu0 %v2284
    %2301 = vmatpush.xpose.msra.mxu0 %v2282
    %2302 = vmatmul.f32.gmra.mxu0 %v2278
    %v2303 = vpop.f32.mrf.mxu0
    %v2304 = vadd.f32 0.0, %v2303
    %2305 = vmatmul.f32.gmra.mxu0 %v2280
    %v2306 = vpop.f32.mrf.mxu0
    %v2307 = vadd.f32 0.0, %v2306
    %2308 = vdwg.mxu0
    %v2309 = vadd.f32 %v2035, %v206
    %v2310 = vadd.f32 %v2038, %v206
    %v2311 = vadd.f32 %v2070, %v206
    %v2312 = vadd.f32 %v2073, %v206
    %v2313 = vadd.f32 %v2109, %v206
    %v2314 = vadd.f32 %v2112, %v206
    %v2315 = vadd.f32 %v2148, %v206
    %v2316 = vadd.f32 %v2151, %v206
    %v2317 = vadd.f32 %v2187, %v206
    %v2318 = vadd.f32 %v2190, %v206
    %v2319 = vadd.f32 %v2226, %v206
    %v2320 = vadd.f32 %v2229, %v206
    %v2321 = vadd.f32 %v2265, %v206
    %v2322 = vadd.f32 %v2268, %v206
    %v2323 = vadd.f32 %v2304, %v206
    %v2324 = vadd.f32 %v2307, %v206
    %v2325 = vsel %vm671, %v2309, -inf
    %2326 = vmax.xlane.f32.xlu0 %v2325
    %v2327 = vpop.xlane.xlu0 %2326
    %v2328 = vsel %vm671, %v2310, -inf
    %2329 = vmax.xlane.f32.xlu0 %v2328
    %v2330 = vpop.xlane.xlu0 %2329
    %v2331 = vsel %vm671, %v2311, -inf
    %2332 = vmax.xlane.f32.xlu0 %v2331
    %v2333 = vpop.xlane.xlu0 %2332
    %v2334 = vsel %vm671, %v2312, -inf
    %2335 = vmax.xlane.f32.xlu0 %v2334
    %v2336 = vpop.xlane.xlu0 %2335
    %v2337 = vsel %vm671, %v2313, -inf
    %2338 = vmax.xlane.f32.xlu0 %v2337
    %v2339 = vpop.xlane.xlu0 %2338
    %v2340 = vsel %vm671, %v2314, -inf
    %2341 = vmax.xlane.f32.xlu0 %v2340
    %v2342 = vpop.xlane.xlu0 %2341
    %v2343 = vsel %vm671, %v2315, -inf
    %2344 = vmax.xlane.f32.xlu0 %v2343
    %v2345 = vpop.xlane.xlu0 %2344
    %v2346 = vsel %vm671, %v2316, -inf
    %2347 = vmax.xlane.f32.xlu0 %v2346
    %v2348 = vpop.xlane.xlu0 %2347
    %v2349 = vsel %vm671, %v2317, -inf
    %2350 = vmax.xlane.f32.xlu0 %v2349
    %v2351 = vpop.xlane.xlu0 %2350
    %v2352 = vsel %vm671, %v2318, -inf
    %2353 = vmax.xlane.f32.xlu0 %v2352
    %v2354 = vpop.xlane.xlu0 %2353
    %v2355 = vsel %vm671, %v2319, -inf
    %2356 = vmax.xlane.f32.xlu0 %v2355
    %v2357 = vpop.xlane.xlu0 %2356
    %v2358 = vsel %vm671, %v2320, -inf
    %2359 = vmax.xlane.f32.xlu0 %v2358
    %v2360 = vpop.xlane.xlu0 %2359
    %v2361 = vsel %vm671, %v2321, -inf
    %2362 = vmax.xlane.f32.xlu0 %v2361
    %v2363 = vpop.xlane.xlu0 %2362
    %v2364 = vsel %vm671, %v2322, -inf
    %2365 = vmax.xlane.f32.xlu0 %v2364
    %v2366 = vpop.xlane.xlu0 %2365
    %v2367 = vsel %vm671, %v2323, -inf
    %2368 = vmax.xlane.f32.xlu0 %v2367
    %v2369 = vpop.xlane.xlu0 %2368
    %v2370 = vsel %vm671, %v2324, -inf
    %2371 = vmax.xlane.f32.xlu0 %v2370
    %v2372 = vpop.xlane.xlu0 %2371
    %v2373 = vsub.f32 %v2309, %v2327
    %v2374 = vsub.f32 %v2310, %v2330
    %v2375 = vsub.f32 %v2311, %v2333
    %v2376 = vsub.f32 %v2312, %v2336
    %v2377 = vsub.f32 %v2313, %v2339
    %v2378 = vsub.f32 %v2314, %v2342
    %v2379 = vsub.f32 %v2315, %v2345
    %v2380 = vsub.f32 %v2316, %v2348
    %v2381 = vsub.f32 %v2317, %v2351
    %v2382 = vsub.f32 %v2318, %v2354
    %v2383 = vsub.f32 %v2319, %v2357
    %v2384 = vsub.f32 %v2320, %v2360
    %v2385 = vsub.f32 %v2321, %v2363
    %v2386 = vsub.f32 %v2322, %v2366
    %v2387 = vsub.f32 %v2323, %v2369
    %v2388 = vsub.f32 %v2324, %v2372
    %v2389 = vmul.f32 %v2373, 1.442695
    %v2390 = vpow.pop %v2389
    %v2391 = vmul.f32 %v2374, 1.442695
    %v2392 = vpow.pop %v2391
    %v2393 = vmul.f32 %v2375, 1.442695
    %v2394 = vpow.pop %v2393
    %v2395 = vmul.f32 %v2376, 1.442695
    %v2396 = vpow.pop %v2395
    %v2397 = vmul.f32 %v2377, 1.442695
    %v2398 = vpow.pop %v2397
    %v2399 = vmul.f32 %v2378, 1.442695
    %v2400 = vpow.pop %v2399
    %v2401 = vmul.f32 %v2379, 1.442695
    %v2402 = vpow.pop %v2401
    %v2403 = vmul.f32 %v2380, 1.442695
    %v2404 = vpow.pop %v2403
    %v2405 = vmul.f32 %v2381, 1.442695
    %v2406 = vpow.pop %v2405
    %v2407 = vmul.f32 %v2382, 1.442695
    %v2408 = vpow.pop %v2407
    %v2409 = vmul.f32 %v2383, 1.442695
    %v2410 = vpow.pop %v2409
    %v2411 = vmul.f32 %v2384, 1.442695
    %v2412 = vpow.pop %v2411
    %v2413 = vmul.f32 %v2385, 1.442695
    %v2414 = vpow.pop %v2413
    %v2415 = vmul.f32 %v2386, 1.442695
    %v2416 = vpow.pop %v2415
    %v2417 = vmul.f32 %v2387, 1.442695
    %v2418 = vpow.pop %v2417
    %v2419 = vmul.f32 %v2388, 1.442695
    %v2420 = vpow.pop %v2419
    %v2421 = vsel %vm671, %v2390, 0.0
    %2422 = vadd.xlane.f32.xlu0 %v2421
    %v2423 = vpop.xlane.xlu0 %2422
    %v2424 = vsel %vm671, %v2392, 0.0
    %2425 = vadd.xlane.f32.xlu0 %v2424
    %v2426 = vpop.xlane.xlu0 %2425
    %v2427 = vsel %vm671, %v2394, 0.0
    %2428 = vadd.xlane.f32.xlu0 %v2427
    %v2429 = vpop.xlane.xlu0 %2428
    %v2430 = vsel %vm671, %v2396, 0.0
    %2431 = vadd.xlane.f32.xlu0 %v2430
    %v2432 = vpop.xlane.xlu0 %2431
    %v2433 = vsel %vm671, %v2398, 0.0
    %2434 = vadd.xlane.f32.xlu0 %v2433
    %v2435 = vpop.xlane.xlu0 %2434
    %v2436 = vsel %vm671, %v2400, 0.0
    %2437 = vadd.xlane.f32.xlu0 %v2436
    %v2438 = vpop.xlane.xlu0 %2437
    %v2439 = vsel %vm671, %v2402, 0.0
    %2440 = vadd.xlane.f32.xlu0 %v2439
    %v2441 = vpop.xlane.xlu0 %2440
    %v2442 = vsel %vm671, %v2404, 0.0
    %2443 = vadd.xlane.f32.xlu0 %v2442
    %v2444 = vpop.xlane.xlu0 %2443
    %v2445 = vsel %vm671, %v2406, 0.0
    %2446 = vadd.xlane.f32.xlu0 %v2445
    %v2447 = vpop.xlane.xlu0 %2446
    %v2448 = vsel %vm671, %v2408, 0.0
    %2449 = vadd.xlane.f32.xlu0 %v2448
    %v2450 = vpop.xlane.xlu0 %2449
    %v2451 = vsel %vm671, %v2410, 0.0
    %2452 = vadd.xlane.f32.xlu0 %v2451
    %v2453 = vpop.xlane.xlu0 %2452
    %v2454 = vsel %vm671, %v2412, 0.0
    %2455 = vadd.xlane.f32.xlu0 %v2454
    %v2456 = vpop.xlane.xlu0 %2455
    %v2457 = vsel %vm671, %v2414, 0.0
    %2458 = vadd.xlane.f32.xlu0 %v2457
    %v2459 = vpop.xlane.xlu0 %2458
    %v2460 = vsel %vm671, %v2416, 0.0
    %2461 = vadd.xlane.f32.xlu0 %v2460
    %v2462 = vpop.xlane.xlu0 %2461
    %v2463 = vsel %vm671, %v2418, 0.0
    %2464 = vadd.xlane.f32.xlu0 %v2463
    %v2465 = vpop.xlane.xlu0 %2464
    %v2466 = vsel %vm671, %v2420, 0.0
    %2467 = vadd.xlane.f32.xlu0 %v2466
    %v2468 = vpop.xlane.xlu0 %2467
    %v2469 = vrcp.pop %v2423
    %v2470 = vmul.f32 %v2423, %v2469
    %v2471 = vsub.f32 1.0, %v2470
    %v2472 = vmul.f32 %v2469, %v2471
    %v2473 = vadd.f32 %v2469, %v2472
    %vm2474 = vweird.f32 %v2423
    %vm2475 = vweird.f32 %v2469
    %vm2476 = vmor %vm2474, %vm2475
    %v2477 = vsel %vm2476, %v2469, %v2473
    %v2478 = vand.u32 2147483647, %v2423
    %vm2479 = vcmp.eq.f32.partialorder %v2478, 8.507059e+37
    %v2480 = vand.u32 %v2423, 2147483648
    %v2481 = vor.u32 1.1754944e-38, %v2480
    %v2482 = vsel %vm2479, %v2481, %v2477
    %v2483 = vrcp.pop %v2426
    %v2484 = vmul.f32 %v2426, %v2483
    %v2485 = vsub.f32 1.0, %v2484
    %v2486 = vmul.f32 %v2483, %v2485
    %v2487 = vadd.f32 %v2483, %v2486
    %vm2488 = vweird.f32 %v2426
    %vm2489 = vweird.f32 %v2483
    %vm2490 = vmor %vm2488, %vm2489
    %v2491 = vsel %vm2490, %v2483, %v2487
    %v2492 = vand.u32 2147483647, %v2426
    %vm2493 = vcmp.eq.f32.partialorder %v2492, 8.507059e+37
    %v2494 = vand.u32 %v2426, 2147483648
    %v2495 = vor.u32 1.1754944e-38, %v2494
    %v2496 = vsel %vm2493, %v2495, %v2491
    %v2497 = vrcp.pop %v2429
    %v2498 = vmul.f32 %v2429, %v2497
    %v2499 = vsub.f32 1.0, %v2498
    %v2500 = vmul.f32 %v2497, %v2499
    %v2501 = vadd.f32 %v2497, %v2500
    %vm2502 = vweird.f32 %v2429
    %vm2503 = vweird.f32 %v2497
    %vm2504 = vmor %vm2502, %vm2503
    %v2505 = vsel %vm2504, %v2497, %v2501
    %v2506 = vand.u32 2147483647, %v2429
    %vm2507 = vcmp.eq.f32.partialorder %v2506, 8.507059e+37
    %v2508 = vand.u32 %v2429, 2147483648
    %v2509 = vor.u32 1.1754944e-38, %v2508
    %v2510 = vsel %vm2507, %v2509, %v2505
    %v2511 = vrcp.pop %v2432
    %v2512 = vmul.f32 %v2432, %v2511
    %v2513 = vsub.f32 1.0, %v2512
    %v2514 = vmul.f32 %v2511, %v2513
    %v2515 = vadd.f32 %v2511, %v2514
    %vm2516 = vweird.f32 %v2432
    %vm2517 = vweird.f32 %v2511
    %vm2518 = vmor %vm2516, %vm2517
    %v2519 = vsel %vm2518, %v2511, %v2515
    %v2520 = vand.u32 2147483647, %v2432
    %vm2521 = vcmp.eq.f32.partialorder %v2520, 8.507059e+37
    %v2522 = vand.u32 %v2432, 2147483648
    %v2523 = vor.u32 1.1754944e-38, %v2522
    %v2524 = vsel %vm2521, %v2523, %v2519
    %v2525 = vrcp.pop %v2435
    %v2526 = vmul.f32 %v2435, %v2525
    %v2527 = vsub.f32 1.0, %v2526
    %v2528 = vmul.f32 %v2525, %v2527
    %v2529 = vadd.f32 %v2525, %v2528
    %vm2530 = vweird.f32 %v2435
    %vm2531 = vweird.f32 %v2525
    %vm2532 = vmor %vm2530, %vm2531
    %v2533 = vsel %vm2532, %v2525, %v2529
    %v2534 = vand.u32 2147483647, %v2435
    %vm2535 = vcmp.eq.f32.partialorder %v2534, 8.507059e+37
    %v2536 = vand.u32 %v2435, 2147483648
    %v2537 = vor.u32 1.1754944e-38, %v2536
    %v2538 = vsel %vm2535, %v2537, %v2533
    %v2539 = vrcp.pop %v2438
    %v2540 = vmul.f32 %v2438, %v2539
    %v2541 = vsub.f32 1.0, %v2540
    %v2542 = vmul.f32 %v2539, %v2541
    %v2543 = vadd.f32 %v2539, %v2542
    %vm2544 = vweird.f32 %v2438
    %vm2545 = vweird.f32 %v2539
    %vm2546 = vmor %vm2544, %vm2545
    %v2547 = vsel %vm2546, %v2539, %v2543
    %v2548 = vand.u32 2147483647, %v2438
    %vm2549 = vcmp.eq.f32.partialorder %v2548, 8.507059e+37
    %v2550 = vand.u32 %v2438, 2147483648
    %v2551 = vor.u32 1.1754944e-38, %v2550
    %v2552 = vsel %vm2549, %v2551, %v2547
    %v2553 = vrcp.pop %v2441
    %v2554 = vmul.f32 %v2441, %v2553
    %v2555 = vsub.f32 1.0, %v2554
    %v2556 = vmul.f32 %v2553, %v2555
    %v2557 = vadd.f32 %v2553, %v2556
    %vm2558 = vweird.f32 %v2441
    %vm2559 = vweird.f32 %v2553
    %vm2560 = vmor %vm2558, %vm2559
    %v2561 = vsel %vm2560, %v2553, %v2557
    %v2562 = vand.u32 2147483647, %v2441
    %vm2563 = vcmp.eq.f32.partialorder %v2562, 8.507059e+37
    %v2564 = vand.u32 %v2441, 2147483648
    %v2565 = vor.u32 1.1754944e-38, %v2564
    %v2566 = vsel %vm2563, %v2565, %v2561
    %v2567 = vrcp.pop %v2444
    %v2568 = vmul.f32 %v2444, %v2567
    %v2569 = vsub.f32 1.0, %v2568
    %v2570 = vmul.f32 %v2567, %v2569
    %v2571 = vadd.f32 %v2567, %v2570
    %vm2572 = vweird.f32 %v2444
    %vm2573 = vweird.f32 %v2567
    %vm2574 = vmor %vm2572, %vm2573
    %v2575 = vsel %vm2574, %v2567, %v2571
    %v2576 = vand.u32 2147483647, %v2444
    %vm2577 = vcmp.eq.f32.partialorder %v2576, 8.507059e+37
    %v2578 = vand.u32 %v2444, 2147483648
    %v2579 = vor.u32 1.1754944e-38, %v2578
    %v2580 = vsel %vm2577, %v2579, %v2575
    %v2581 = vrcp.pop %v2447
    %v2582 = vmul.f32 %v2447, %v2581
    %v2583 = vsub.f32 1.0, %v2582
    %v2584 = vmul.f32 %v2581, %v2583
    %v2585 = vadd.f32 %v2581, %v2584
    %vm2586 = vweird.f32 %v2447
    %vm2587 = vweird.f32 %v2581
    %vm2588 = vmor %vm2586, %vm2587
    %v2589 = vsel %vm2588, %v2581, %v2585
    %v2590 = vand.u32 2147483647, %v2447
    %vm2591 = vcmp.eq.f32.partialorder %v2590, 8.507059e+37
    %v2592 = vand.u32 %v2447, 2147483648
    %v2593 = vor.u32 1.1754944e-38, %v2592
    %v2594 = vsel %vm2591, %v2593, %v2589
    %v2595 = vrcp.pop %v2450
    %v2596 = vmul.f32 %v2450, %v2595
    %v2597 = vsub.f32 1.0, %v2596
    %v2598 = vmul.f32 %v2595, %v2597
    %v2599 = vadd.f32 %v2595, %v2598
    %vm2600 = vweird.f32 %v2450
    %vm2601 = vweird.f32 %v2595
    %vm2602 = vmor %vm2600, %vm2601
    %v2603 = vsel %vm2602, %v2595, %v2599
    %v2604 = vand.u32 2147483647, %v2450
    %vm2605 = vcmp.eq.f32.partialorder %v2604, 8.507059e+37
    %v2606 = vand.u32 %v2450, 2147483648
    %v2607 = vor.u32 1.1754944e-38, %v2606
    %v2608 = vsel %vm2605, %v2607, %v2603
    %v2609 = vrcp.pop %v2453
    %v2610 = vmul.f32 %v2453, %v2609
    %v2611 = vsub.f32 1.0, %v2610
    %v2612 = vmul.f32 %v2609, %v2611
    %v2613 = vadd.f32 %v2609, %v2612
    %vm2614 = vweird.f32 %v2453
    %vm2615 = vweird.f32 %v2609
    %vm2616 = vmor %vm2614, %vm2615
    %v2617 = vsel %vm2616, %v2609, %v2613
    %v2618 = vand.u32 2147483647, %v2453
    %vm2619 = vcmp.eq.f32.partialorder %v2618, 8.507059e+37
    %v2620 = vand.u32 %v2453, 2147483648
    %v2621 = vor.u32 1.1754944e-38, %v2620
    %v2622 = vsel %vm2619, %v2621, %v2617
    %v2623 = vrcp.pop %v2456
    %v2624 = vmul.f32 %v2456, %v2623
    %v2625 = vsub.f32 1.0, %v2624
    %v2626 = vmul.f32 %v2623, %v2625
    %v2627 = vadd.f32 %v2623, %v2626
    %vm2628 = vweird.f32 %v2456
    %vm2629 = vweird.f32 %v2623
    %vm2630 = vmor %vm2628, %vm2629
    %v2631 = vsel %vm2630, %v2623, %v2627
    %v2632 = vand.u32 2147483647, %v2456
    %vm2633 = vcmp.eq.f32.partialorder %v2632, 8.507059e+37
    %v2634 = vand.u32 %v2456, 2147483648
    %v2635 = vor.u32 1.1754944e-38, %v2634
    %v2636 = vsel %vm2633, %v2635, %v2631
    %v2637 = vrcp.pop %v2459
    %v2638 = vmul.f32 %v2459, %v2637
    %v2639 = vsub.f32 1.0, %v2638
    %v2640 = vmul.f32 %v2637, %v2639
    %v2641 = vadd.f32 %v2637, %v2640
    %vm2642 = vweird.f32 %v2459
    %vm2643 = vweird.f32 %v2637
    %vm2644 = vmor %vm2642, %vm2643
    %v2645 = vsel %vm2644, %v2637, %v2641
    %v2646 = vand.u32 2147483647, %v2459
    %vm2647 = vcmp.eq.f32.partialorder %v2646, 8.507059e+37
    %v2648 = vand.u32 %v2459, 2147483648
    %v2649 = vor.u32 1.1754944e-38, %v2648
    %v2650 = vsel %vm2647, %v2649, %v2645
    %v2651 = vrcp.pop %v2462
    %v2652 = vmul.f32 %v2462, %v2651
    %v2653 = vsub.f32 1.0, %v2652
    %v2654 = vmul.f32 %v2651, %v2653
    %v2655 = vadd.f32 %v2651, %v2654
    %vm2656 = vweird.f32 %v2462
    %vm2657 = vweird.f32 %v2651
    %vm2658 = vmor %vm2656, %vm2657
    %v2659 = vsel %vm2658, %v2651, %v2655
    %v2660 = vand.u32 2147483647, %v2462
    %vm2661 = vcmp.eq.f32.partialorder %v2660, 8.507059e+37
    %v2662 = vand.u32 %v2462, 2147483648
    %v2663 = vor.u32 1.1754944e-38, %v2662
    %v2664 = vsel %vm2661, %v2663, %v2659
    %v2665 = vrcp.pop %v2465
    %v2666 = vmul.f32 %v2465, %v2665
    %v2667 = vsub.f32 1.0, %v2666
    %v2668 = vmul.f32 %v2665, %v2667
    %v2669 = vadd.f32 %v2665, %v2668
    %vm2670 = vweird.f32 %v2465
    %vm2671 = vweird.f32 %v2665
    %vm2672 = vmor %vm2670, %vm2671
    %v2673 = vsel %vm2672, %v2665, %v2669
    %v2674 = vand.u32 2147483647, %v2465
    %vm2675 = vcmp.eq.f32.partialorder %v2674, 8.507059e+37
    %v2676 = vand.u32 %v2465, 2147483648
    %v2677 = vor.u32 1.1754944e-38, %v2676
    %v2678 = vsel %vm2675, %v2677, %v2673
    %v2679 = vrcp.pop %v2468
    %v2680 = vmul.f32 %v2468, %v2679
    %v2681 = vsub.f32 1.0, %v2680
    %v2682 = vmul.f32 %v2679, %v2681
    %v2683 = vadd.f32 %v2679, %v2682
    %vm2684 = vweird.f32 %v2468
    %vm2685 = vweird.f32 %v2679
    %vm2686 = vmor %vm2684, %vm2685
    %v2687 = vsel %vm2686, %v2679, %v2683
    %v2688 = vand.u32 2147483647, %v2468
    %vm2689 = vcmp.eq.f32.partialorder %v2688, 8.507059e+37
    %v2690 = vand.u32 %v2468, 2147483648
    %v2691 = vor.u32 1.1754944e-38, %v2690
    %v2692 = vsel %vm2689, %v2691, %v2687
    %v2693 = vmul.f32 %v2390, %v2482
    %v2694 = vmul.f32 %v2392, %v2496
    %v2695 = vmul.f32 %v2394, %v2510
    %v2696 = vmul.f32 %v2396, %v2524
    %v2697 = vmul.f32 %v2398, %v2538
    %v2698 = vmul.f32 %v2400, %v2552
    %v2699 = vmul.f32 %v2402, %v2566
    %v2700 = vmul.f32 %v2404, %v2580
    %v2701 = vmul.f32 %v2406, %v2594
    %v2702 = vmul.f32 %v2408, %v2608
    %v2703 = vmul.f32 %v2410, %v2622
    %v2704 = vmul.f32 %v2412, %v2636
    %v2705 = vmul.f32 %v2414, %v2650
    %v2706 = vmul.f32 %v2416, %v2664
    %v2707 = vmul.f32 %v2418, %v2678
    %v2708 = vmul.f32 %v2420, %v2692
    %v2710 = vsel %vm671, %v2693, 0
    %v2713 = vsel %vm671, %v2694, 0
    %2715 = vmatpush.msra.mxu0 0.0
    %2716 = vmatpush.msra.mxu0 0.0
    %2717 = vmatpush.msra.mxu0 0.0
    %2718 = vmatpush.msra.mxu0 0.0
    %2719 = vmatpush.msra.mxu0 0.0
    %2720 = vmatpush.msra.mxu0 0.0
    %2721 = vmatpush.msra.mxu0 0.0
    %2722 = vmatpush.msra.mxu0 0.0
    %2723 = vmatpush.msra.mxu0 0.0
    %2724 = vmatpush.msra.mxu0 0.0
    %2725 = vmatpush.msra.mxu0 0.0
    %2726 = vmatpush.msra.mxu0 0.0
    %2727 = vmatpush.msra.mxu0 0.0
    %2728 = vmatpush.msra.mxu0 0.0
    %2729 = vmatpush.msra.mxu0 %v1997
    %2730 = vmatpush.msra.mxu0 %v1994
    %2731 = vmatmul.f32.gmra.mxu0 %v2710
    %v2732 = vpop.f32.mrf.mxu0
    %v2733 = vadd.f32 0.0, %v2732
    %2734 = vmatmul.f32.gmra.mxu0 %v2713
    %v2735 = vpop.f32.mrf.mxu0
    %v2736 = vadd.f32 0.0, %v2735
    %2737 = vdwg.mxu0
    %v2739 = vsel %vm671, %v2695, 0
    %v2742 = vsel %vm671, %v2696, 0
    %2744 = vmatpush.msra.mxu0 0.0
    %2745 = vmatpush.msra.mxu0 0.0
    %2746 = vmatpush.msra.mxu0 0.0
    %2747 = vmatpush.msra.mxu0 0.0
    %2748 = vmatpush.msra.mxu0 0.0
    %2749 = vmatpush.msra.mxu0 0.0
    %2750 = vmatpush.msra.mxu0 0.0
    %2751 = vmatpush.msra.mxu0 0.0
    %2752 = vmatpush.msra.mxu0 0.0
    %2753 = vmatpush.msra.mxu0 0.0
    %2754 = vmatpush.msra.mxu0 0.0
    %2755 = vmatpush.msra.mxu0 0.0
    %2756 = vmatpush.msra.mxu0 0.0
    %2757 = vmatpush.msra.mxu0 0.0
    %2758 = vmatpush.msra.mxu0 %v2003
    %2759 = vmatpush.msra.mxu0 %v2000
    %2760 = vmatmul.f32.gmra.mxu0 %v2739
    %v2761 = vpop.f32.mrf.mxu0
    %v2762 = vadd.f32 0.0, %v2761
    %2763 = vmatmul.f32.gmra.mxu0 %v2742
    %v2764 = vpop.f32.mrf.mxu0
    %v2765 = vadd.f32 0.0, %v2764
    %2766 = vdwg.mxu0
    %2769 = vrot.lane.b32.xlu0 %v1994, 96
    %v2770 = vpop.permute.xlu0 %2769
    %2771 = vrot.lane.b32.xlu0 %v1997, 96
    %v2772 = vpop.permute.xlu0 %2771
    %v2776 = vsel %vm671, %v2697, 0
    %v2779 = vsel %vm671, %v2698, 0
    %2781 = vmatpush.msra.mxu0 0.0
    %2782 = vmatpush.msra.mxu0 0.0
    %2783 = vmatpush.msra.mxu0 0.0
    %2784 = vmatpush.msra.mxu0 0.0
    %2785 = vmatpush.msra.mxu0 0.0
    %2786 = vmatpush.msra.mxu0 0.0
    %2787 = vmatpush.msra.mxu0 0.0
    %2788 = vmatpush.msra.mxu0 0.0
    %2789 = vmatpush.msra.mxu0 0.0
    %2790 = vmatpush.msra.mxu0 0.0
    %2791 = vmatpush.msra.mxu0 0.0
    %2792 = vmatpush.msra.mxu0 0.0
    %2793 = vmatpush.msra.mxu0 0.0
    %2794 = vmatpush.msra.mxu0 0.0
    %2795 = vmatpush.msra.mxu0 %v2772
    %2796 = vmatpush.msra.mxu0 %v2770
    %2797 = vmatmul.f32.gmra.mxu0 %v2776
    %v2798 = vpop.f32.mrf.mxu0
    %v2799 = vadd.f32 0.0, %v2798
    %2800 = vmatmul.f32.gmra.mxu0 %v2779
    %v2801 = vpop.f32.mrf.mxu0
    %v2802 = vadd.f32 0.0, %v2801
    %2803 = vdwg.mxu0
    %2806 = vrot.lane.b32.xlu0 %v2000, 96
    %v2807 = vpop.permute.xlu0 %2806
    %2808 = vrot.lane.b32.xlu0 %v2003, 96
    %v2809 = vpop.permute.xlu0 %2808
    %v2813 = vsel %vm671, %v2699, 0
    %v2816 = vsel %vm671, %v2700, 0
    %2818 = vmatpush.msra.mxu0 0.0
    %2819 = vmatpush.msra.mxu0 0.0
    %2820 = vmatpush.msra.mxu0 0.0
    %2821 = vmatpush.msra.mxu0 0.0
    %2822 = vmatpush.msra.mxu0 0.0
    %2823 = vmatpush.msra.mxu0 0.0
    %2824 = vmatpush.msra.mxu0 0.0
    %2825 = vmatpush.msra.mxu0 0.0
    %2826 = vmatpush.msra.mxu0 0.0
    %2827 = vmatpush.msra.mxu0 0.0
    %2828 = vmatpush.msra.mxu0 0.0
    %2829 = vmatpush.msra.mxu0 0.0
    %2830 = vmatpush.msra.mxu0 0.0
    %2831 = vmatpush.msra.mxu0 0.0
    %2832 = vmatpush.msra.mxu0 %v2809
    %2833 = vmatpush.msra.mxu0 %v2807
    %2834 = vmatmul.f32.gmra.mxu0 %v2813
    %v2835 = vpop.f32.mrf.mxu0
    %v2836 = vadd.f32 0.0, %v2835
    %2837 = vmatmul.f32.gmra.mxu0 %v2816
    %v2838 = vpop.f32.mrf.mxu0
    %v2839 = vadd.f32 0.0, %v2838
    %2840 = vdwg.mxu0
    %2841 = vrot.lane.b32.xlu0 %v1994, 64
    %v2842 = vpop.permute.xlu0 %2841
    %2843 = vrot.lane.b32.xlu0 %v1997, 64
    %v2844 = vpop.permute.xlu0 %2843
    %v2848 = vsel %vm671, %v2701, 0
    %v2851 = vsel %vm671, %v2702, 0
    %2853 = vmatpush.msra.mxu0 0.0
    %2854 = vmatpush.msra.mxu0 0.0
    %2855 = vmatpush.msra.mxu0 0.0
    %2856 = vmatpush.msra.mxu0 0.0
    %2857 = vmatpush.msra.mxu0 0.0
    %2858 = vmatpush.msra.mxu0 0.0
    %2859 = vmatpush.msra.mxu0 0.0
    %2860 = vmatpush.msra.mxu0 0.0
    %2861 = vmatpush.msra.mxu0 0.0
    %2862 = vmatpush.msra.mxu0 0.0
    %2863 = vmatpush.msra.mxu0 0.0
    %2864 = vmatpush.msra.mxu0 0.0
    %2865 = vmatpush.msra.mxu0 0.0
    %2866 = vmatpush.msra.mxu0 0.0
    %2867 = vmatpush.msra.mxu0 %v2844
    %2868 = vmatpush.msra.mxu0 %v2842
    %2869 = vmatmul.f32.gmra.mxu0 %v2848
    %v2870 = vpop.f32.mrf.mxu0
    %v2871 = vadd.f32 0.0, %v2870
    %2872 = vmatmul.f32.gmra.mxu0 %v2851
    %v2873 = vpop.f32.mrf.mxu0
    %v2874 = vadd.f32 0.0, %v2873
    %2875 = vdwg.mxu0
    %2876 = vrot.lane.b32.xlu0 %v2000, 64
    %v2877 = vpop.permute.xlu0 %2876
    %2878 = vrot.lane.b32.xlu0 %v2003, 64
    %v2879 = vpop.permute.xlu0 %2878
    %v2883 = vsel %vm671, %v2703, 0
    %v2886 = vsel %vm671, %v2704, 0
    %2888 = vmatpush.msra.mxu0 0.0
    %2889 = vmatpush.msra.mxu0 0.0
    %2890 = vmatpush.msra.mxu0 0.0
    %2891 = vmatpush.msra.mxu0 0.0
    %2892 = vmatpush.msra.mxu0 0.0
    %2893 = vmatpush.msra.mxu0 0.0
    %2894 = vmatpush.msra.mxu0 0.0
    %2895 = vmatpush.msra.mxu0 0.0
    %2896 = vmatpush.msra.mxu0 0.0
    %2897 = vmatpush.msra.mxu0 0.0
    %2898 = vmatpush.msra.mxu0 0.0
    %2899 = vmatpush.msra.mxu0 0.0
    %2900 = vmatpush.msra.mxu0 0.0
    %2901 = vmatpush.msra.mxu0 0.0
    %2902 = vmatpush.msra.mxu0 %v2879
    %2903 = vmatpush.msra.mxu0 %v2877
    %2904 = vmatmul.f32.gmra.mxu0 %v2883
    %v2905 = vpop.f32.mrf.mxu0
    %v2906 = vadd.f32 0.0, %v2905
    %2907 = vmatmul.f32.gmra.mxu0 %v2886
    %v2908 = vpop.f32.mrf.mxu0
    %v2909 = vadd.f32 0.0, %v2908
    %2910 = vdwg.mxu0
    %2911 = vrot.lane.b32.xlu0 %v1994, 32
    %v2912 = vpop.permute.xlu0 %2911
    %2913 = vrot.lane.b32.xlu0 %v1997, 32
    %v2914 = vpop.permute.xlu0 %2913
    %v2918 = vsel %vm671, %v2705, 0
    %v2921 = vsel %vm671, %v2706, 0
    %2923 = vmatpush.msra.mxu0 0.0
    %2924 = vmatpush.msra.mxu0 0.0
    %2925 = vmatpush.msra.mxu0 0.0
    %2926 = vmatpush.msra.mxu0 0.0
    %2927 = vmatpush.msra.mxu0 0.0
    %2928 = vmatpush.msra.mxu0 0.0
    %2929 = vmatpush.msra.mxu0 0.0
    %2930 = vmatpush.msra.mxu0 0.0
    %2931 = vmatpush.msra.mxu0 0.0
    %2932 = vmatpush.msra.mxu0 0.0
    %2933 = vmatpush.msra.mxu0 0.0
    %2934 = vmatpush.msra.mxu0 0.0
    %2935 = vmatpush.msra.mxu0 0.0
    %2936 = vmatpush.msra.mxu0 0.0
    %2937 = vmatpush.msra.mxu0 %v2914
    %2938 = vmatpush.msra.mxu0 %v2912
    %2939 = vmatmul.f32.gmra.mxu0 %v2918
    %v2940 = vpop.f32.mrf.mxu0
    %v2941 = vadd.f32 0.0, %v2940
    %2942 = vmatmul.f32.gmra.mxu0 %v2921
    %v2943 = vpop.f32.mrf.mxu0
    %v2944 = vadd.f32 0.0, %v2943
    %2945 = vdwg.mxu0
    %2946 = vrot.lane.b32.xlu0 %v2000, 32
    %v2947 = vpop.permute.xlu0 %2946
    %2948 = vrot.lane.b32.xlu0 %v2003, 32
    %v2949 = vpop.permute.xlu0 %2948
    %v2953 = vsel %vm671, %v2707, 0
    %v2956 = vsel %vm671, %v2708, 0
    %2958 = vmatpush.msra.mxu0 0.0
    %2959 = vmatpush.msra.mxu0 0.0
    %2960 = vmatpush.msra.mxu0 0.0
    %2961 = vmatpush.msra.mxu0 0.0
    %2962 = vmatpush.msra.mxu0 0.0
    %2963 = vmatpush.msra.mxu0 0.0
    %2964 = vmatpush.msra.mxu0 0.0
    %2965 = vmatpush.msra.mxu0 0.0
    %2966 = vmatpush.msra.mxu0 0.0
    %2967 = vmatpush.msra.mxu0 0.0
    %2968 = vmatpush.msra.mxu0 0.0
    %2969 = vmatpush.msra.mxu0 0.0
    %2970 = vmatpush.msra.mxu0 0.0
    %2971 = vmatpush.msra.mxu0 0.0
    %2972 = vmatpush.msra.mxu0 %v2949
    %2973 = vmatpush.msra.mxu0 %v2947
    %2974 = vmatmul.f32.gmra.mxu0 %v2953
    %v2975 = vpop.f32.mrf.mxu0
    %v2976 = vadd.f32 0.0, %v2975
    %2977 = vmatmul.f32.gmra.mxu0 %v2956
    %v2978 = vpop.f32.mrf.mxu0
    %v2979 = vadd.f32 0.0, %v2978
    %2980 = vdwg.mxu0
    %2985 = vrot.lane.b32.xlu0 %v2799, 32
    %v2986 = vpop.permute.xlu0 %2985
    %2987 = vrot.lane.b32.xlu0 %v2802, 32
    %v2988 = vpop.permute.xlu0 %2987
    %2989 = vrot.lane.b32.xlu0 %v2836, 32
    %v2990 = vpop.permute.xlu0 %2989
    %2991 = vrot.lane.b32.xlu0 %v2839, 32
    %v2992 = vpop.permute.xlu0 %2991
    %3001 = vrot.lane.b32.xlu0 %v2871, 64
    %v3002 = vpop.permute.xlu0 %3001
    %3003 = vrot.lane.b32.xlu0 %v2874, 64
    %v3004 = vpop.permute.xlu0 %3003
    %3005 = vrot.lane.b32.xlu0 %v2906, 64
    %v3006 = vpop.permute.xlu0 %3005
    %3007 = vrot.lane.b32.xlu0 %v2909, 64
    %v3008 = vpop.permute.xlu0 %3007
    %3017 = vrot.lane.b32.xlu0 %v2941, 96
    %v3018 = vpop.permute.xlu0 %3017
    %3019 = vrot.lane.b32.xlu0 %v2944, 96
    %v3020 = vpop.permute.xlu0 %3019
    %3021 = vrot.lane.b32.xlu0 %v2976, 96
    %v3022 = vpop.permute.xlu0 %3021
    %3023 = vrot.lane.b32.xlu0 %v2979, 96
    %v3024 = vpop.permute.xlu0 %3023
    %v3029 = vsel %vm350, %v2733, %v2986
    %v3030 = vsel %vm350, %v2736, %v2988
    %v3031 = vsel %vm350, %v2762, %v2990
    %v3032 = vsel %vm350, %v2765, %v2992
    %v3033 = vsel %vm1380, %v3029, %v3002
    %v3034 = vsel %vm1380, %v3030, %v3004
    %v3035 = vsel %vm1380, %v3031, %v3006
    %v3036 = vsel %vm1380, %v3032, %v3008
    %v3037 = vsel %vm1385, %v3033, %v3018
    %v3038 = vsel %vm1385, %v3034, %v3020
    %v3039 = vsel %vm1385, %v3035, %v3022
    %v3040 = vsel %vm1385, %v3036, %v3024
    %s3041 = scalar_lea.vmem [#allocation8], 128
    %v3042 = vld [vmem:[%s3041] sm:$0xff]
    %v3043 = vld [vmem:[%s3041 + $0x8] sm:$0xff]
    %v3044 = vld [vmem:[%s3041 + $0x10] sm:$0xff]
    %v3045 = vld [vmem:[%s3041 + $0x18] sm:$0xff]
    %v3046 = vld [vmem:[%s3041 + $0x20] sm:$0xff]
    %v3047 = vld [vmem:[%s3041 + $0x28] sm:$0xff]
    %v3048 = vld [vmem:[%s3041 + $0x30] sm:$0xff]
    %v3049 = vld [vmem:[%s3041 + $0x38] sm:$0xff]
    %v3050 = vld [vmem:[%s3041 + $0x40] sm:$0xff]
    %v3051 = vld [vmem:[%s3041 + $0x48] sm:$0xff]
    %v3052 = vld [vmem:[%s3041 + $0x50] sm:$0xff]
    %v3053 = vld [vmem:[%s3041 + $0x58] sm:$0xff]
    %v3054 = vld [vmem:[%s3041 + $0x60] sm:$0xff]
    %v3055 = vld [vmem:[%s3041 + $0x68] sm:$0xff]
    %v3056 = vld [vmem:[%s3041 + $0x70] sm:$0xff]
    %v3057 = vld [vmem:[%s3041 + $0x78] sm:$0xff]
    %s3058 = scalar_lea.vmem %s4, 1
    %v3059 = vld [vmem:[%s3058] sm:$0x1]
    %v3061 = vperm.slane %v3059, 0
    %3063 = vmatpush.msra.mxu0 %v3057
    %3064 = vmatpush.msra.mxu0 %v3056
    %3065 = vmatpush.msra.mxu0 %v3055
    %3066 = vmatpush.msra.mxu0 %v3054
    %3067 = vmatpush.msra.mxu0 %v3053
    %3068 = vmatpush.msra.mxu0 %v3052
    %3069 = vmatpush.msra.mxu0 %v3051
    %3070 = vmatpush.msra.mxu0 %v3050
    %3071 = vmatpush.msra.mxu0 %v3049
    %3072 = vmatpush.msra.mxu0 %v3048
    %3073 = vmatpush.msra.mxu0 %v3047
    %3074 = vmatpush.msra.mxu0 %v3046
    %3075 = vmatpush.msra.mxu0 %v3045
    %3076 = vmatpush.msra.mxu0 %v3044
    %3077 = vmatpush.msra.mxu0 %v3043
    %3078 = vmatpush.msra.mxu0 %v3042
    %3079 = vmatmul.f32.gmra.mxu0 %v3037
    %v3080 = vpop.f32.mrf.mxu0
    %v3081 = vadd.f32 %v3061, %v3080
    %3082 = vmatmul.f32.gmra.mxu0 %v3038
    %v3083 = vpop.f32.mrf.mxu0
    %v3084 = vadd.f32 %v3061, %v3083
    %3085 = vmatmul.f32.gmra.mxu0 %v3039
    %v3086 = vpop.f32.mrf.mxu0
    %v3087 = vadd.f32 %v3061, %v3086
    %3088 = vmatmul.f32.gmra.mxu0 %v3040
    %v3089 = vpop.f32.mrf.mxu0
    %v3090 = vadd.f32 %v3061, %v3089
    %3091 = vdwg.mxu0
    %v3092 = vadd.f32 %v1856, %v3081
    %v3093 = vadd.f32 %v1857, %v3084
    %v3094 = vadd.f32 %v1858, %v3087
    %v3095 = vadd.f32 %v1859, %v3090
    %s3096 = scalar_lea.vmem [#allocation10], 1
    %v3097 = vld [vmem:[%s3096] sm:$0x1]
    %s3098 = scalar_lea.vmem [#allocation11], 1
    %v3099 = vld [vmem:[%s3098] sm:$0x1]
    %3100 = vadd.xlane.f32.xlu0 %v3092
    %v3101 = vpop.xlane.xlu0 %3100
    %3102 = vadd.xlane.f32.xlu0 %v3093
    %v3103 = vpop.xlane.xlu0 %3102
    %3104 = vadd.xlane.f32.xlu0 %v3094
    %v3105 = vpop.xlane.xlu0 %3104
    %3106 = vadd.xlane.f32.xlu0 %v3095
    %v3107 = vpop.xlane.xlu0 %3106
    %v3108 = vmul.f32 %v3101, %v1459
    %v3109 = vmul.f32 %v3103, %v1459
    %v3110 = vmul.f32 %v3105, %v1459
    %v3111 = vmul.f32 %v3107, %v1459
    %v3112 = vmul.f32 %v3092, %v3092
    %v3113 = vmul.f32 %v3093, %v3093
    %v3114 = vmul.f32 %v3094, %v3094
    %v3115 = vmul.f32 %v3095, %v3095
    %3116 = vadd.xlane.f32.xlu0 %v3112
    %v3117 = vpop.xlane.xlu0 %3116
    %3118 = vadd.xlane.f32.xlu0 %v3113
    %v3119 = vpop.xlane.xlu0 %3118
    %3120 = vadd.xlane.f32.xlu0 %v3114
    %v3121 = vpop.xlane.xlu0 %3120
    %3122 = vadd.xlane.f32.xlu0 %v3115
    %v3123 = vpop.xlane.xlu0 %3122
    %v3124 = vmul.f32 %v3117, %v1459
    %v3125 = vmul.f32 %v3119, %v1459
    %v3126 = vmul.f32 %v3121, %v1459
    %v3127 = vmul.f32 %v3123, %v1459
    %v3128 = vmul.f32 %v3108, %v3108
    %v3129 = vmul.f32 %v3109, %v3109
    %v3130 = vmul.f32 %v3110, %v3110
    %v3131 = vmul.f32 %v3111, %v3111
    %v3132 = vsub.f32 %v3124, %v3128
    %v3133 = vsub.f32 %v3125, %v3129
    %v3134 = vsub.f32 %v3126, %v3130
    %v3135 = vsub.f32 %v3127, %v3131
    %v3136 = vsub.f32 %v3092, %v3108
    %v3137 = vsub.f32 %v3093, %v3109
    %v3138 = vsub.f32 %v3094, %v3110
    %v3139 = vsub.f32 %v3095, %v3111
    %v3140 = vadd.f32 %v3132, 1e-05
    %v3141 = vadd.f32 %v3133, 1e-05
    %v3142 = vadd.f32 %v3134, 1e-05
    %v3143 = vadd.f32 %v3135, 1e-05
    %v3144 = vrsqrt.pop %v3140
    %v3145 = vmul.f32 %v3144, %v3140
    %v3146 = vmul.f32 %v3145, %v3144
    %v3147 = vmul.f32 0.5, %v3146
    %v3148 = vsub.f32 1.5, %v3147
    %v3149 = vmul.f32 %v3144, %v3148
    %vm3150 = vweird.f32 %v3140
    %vm3151 = vweird.f32 %v3144
    %vm3152 = vmor %vm3150, %vm3151
    %v3153 = vsel %vm3152, %v3144, %v3149
    %v3154 = vrsqrt.pop %v3141
    %v3155 = vmul.f32 %v3154, %v3141
    %v3156 = vmul.f32 %v3155, %v3154
    %v3157 = vmul.f32 0.5, %v3156
    %v3158 = vsub.f32 1.5, %v3157
    %v3159 = vmul.f32 %v3154, %v3158
    %vm3160 = vweird.f32 %v3141
    %vm3161 = vweird.f32 %v3154
    %vm3162 = vmor %vm3160, %vm3161
    %v3163 = vsel %vm3162, %v3154, %v3159
    %v3164 = vrsqrt.pop %v3142
    %v3165 = vmul.f32 %v3164, %v3142
    %v3166 = vmul.f32 %v3165, %v3164
    %v3167 = vmul.f32 0.5, %v3166
    %v3168 = vsub.f32 1.5, %v3167
    %v3169 = vmul.f32 %v3164, %v3168
    %vm3170 = vweird.f32 %v3142
    %vm3171 = vweird.f32 %v3164
    %vm3172 = vmor %vm3170, %vm3171
    %v3173 = vsel %vm3172, %v3164, %v3169
    %v3174 = vrsqrt.pop %v3143
    %v3175 = vmul.f32 %v3174, %v3143
    %v3176 = vmul.f32 %v3175, %v3174
    %v3177 = vmul.f32 0.5, %v3176
    %v3178 = vsub.f32 1.5, %v3177
    %v3179 = vmul.f32 %v3174, %v3178
    %vm3180 = vweird.f32 %v3143
    %vm3181 = vweird.f32 %v3174
    %vm3182 = vmor %vm3180, %vm3181
    %v3183 = vsel %vm3182, %v3174, %v3179
    %v3184 = vmul.f32 %v3136, %v3153
    %v3185 = vmul.f32 %v3137, %v3163
    %v3186 = vmul.f32 %v3138, %v3173
    %v3187 = vmul.f32 %v3139, %v3183
    %v3189 = vperm.slane %v3097, 0
    %v3191 = vmul.f32 %v3184, %v3189
    %v3192 = vmul.f32 %v3185, %v3189
    %v3193 = vmul.f32 %v3186, %v3189
    %v3194 = vmul.f32 %v3187, %v3189
    %v3196 = vperm.slane %v3099, 0
    %v3198 = vadd.f32 %v3191, %v3196
    %v3199 = vadd.f32 %v3192, %v3196
    %v3200 = vadd.f32 %v3193, %v3196
    %v3201 = vadd.f32 %v3194, %v3196
    %s3202 = scalar_lea.vmem [#allocation16], 256
    %v3203 = vld [vmem:[%s3202] sm:$0xff]
    %v3204 = vld [vmem:[%s3202 + $0x8] sm:$0xff]
    %v3205 = vld [vmem:[%s3202 + $0x10] sm:$0xff]
    %v3206 = vld [vmem:[%s3202 + $0x18] sm:$0xff]
    %v3207 = vld [vmem:[%s3202 + $0x20] sm:$0xff]
    %v3208 = vld [vmem:[%s3202 + $0x28] sm:$0xff]
    %v3209 = vld [vmem:[%s3202 + $0x30] sm:$0xff]
    %v3210 = vld [vmem:[%s3202 + $0x38] sm:$0xff]
    %v3211 = vld [vmem:[%s3202 + $0x40] sm:$0xff]
    %v3212 = vld [vmem:[%s3202 + $0x48] sm:$0xff]
    %v3213 = vld [vmem:[%s3202 + $0x50] sm:$0xff]
    %v3214 = vld [vmem:[%s3202 + $0x58] sm:$0xff]
    %v3215 = vld [vmem:[%s3202 + $0x60] sm:$0xff]
    %v3216 = vld [vmem:[%s3202 + $0x68] sm:$0xff]
    %v3217 = vld [vmem:[%s3202 + $0x70] sm:$0xff]
    %v3218 = vld [vmem:[%s3202 + $0x78] sm:$0xff]
    %v3219 = vld [vmem:[%s3202 + $0x80] sm:$0xff]
    %v3220 = vld [vmem:[%s3202 + $0x88] sm:$0xff]
    %v3221 = vld [vmem:[%s3202 + $0x90] sm:$0xff]
    %v3222 = vld [vmem:[%s3202 + $0x98] sm:$0xff]
    %v3223 = vld [vmem:[%s3202 + $0xa0] sm:$0xff]
    %v3224 = vld [vmem:[%s3202 + $0xa8] sm:$0xff]
    %v3225 = vld [vmem:[%s3202 + $0xb0] sm:$0xff]
    %v3226 = vld [vmem:[%s3202 + $0xb8] sm:$0xff]
    %v3227 = vld [vmem:[%s3202 + $0xc0] sm:$0xff]
    %v3228 = vld [vmem:[%s3202 + $0xc8] sm:$0xff]
    %v3229 = vld [vmem:[%s3202 + $0xd0] sm:$0xff]
    %v3230 = vld [vmem:[%s3202 + $0xd8] sm:$0xff]
    %v3231 = vld [vmem:[%s3202 + $0xe0] sm:$0xff]
    %v3232 = vld [vmem:[%s3202 + $0xe8] sm:$0xff]
    %v3233 = vld [vmem:[%s3202 + $0xf0] sm:$0xff]
    %v3234 = vld [vmem:[%s3202 + $0xf8] sm:$0xff]
    %s3235 = scalar_lea.vmem %s10, 2
    %v3236 = vld [vmem:[%s3235] sm:$0x3]
    %v3238 = vperm.slane %v3236, 0
    %v3239 = vperm.slane %v3236, 1
    %3242 = vmatpush.msra.mxu0 %v3233
    %3243 = vmatpush.msra.mxu0 %v3231
    %3244 = vmatpush.msra.mxu0 %v3229
    %3245 = vmatpush.msra.mxu0 %v3227
    %3246 = vmatpush.msra.mxu0 %v3225
    %3247 = vmatpush.msra.mxu0 %v3223
    %3248 = vmatpush.msra.mxu0 %v3221
    %3249 = vmatpush.msra.mxu0 %v3219
    %3250 = vmatpush.msra.mxu0 %v3217
    %3251 = vmatpush.msra.mxu0 %v3215
    %3252 = vmatpush.msra.mxu0 %v3213
    %3253 = vmatpush.msra.mxu0 %v3211
    %3254 = vmatpush.msra.mxu0 %v3209
    %3255 = vmatpush.msra.mxu0 %v3207
    %3256 = vmatpush.msra.mxu0 %v3205
    %3257 = vmatpush.msra.mxu0 %v3203
    %3258 = vmatmul.f32.gmra.mxu0 %v3198
    %v3259 = vpop.f32.mrf.mxu0
    %v3260 = vadd.f32 %v3238, %v3259
    %3261 = vmatmul.f32.gmra.mxu0 %v3199
    %v3262 = vpop.f32.mrf.mxu0
    %v3263 = vadd.f32 %v3238, %v3262
    %3264 = vmatmul.f32.gmra.mxu0 %v3200
    %v3265 = vpop.f32.mrf.mxu0
    %v3266 = vadd.f32 %v3238, %v3265
    %3267 = vmatmul.f32.gmra.mxu0 %v3201
    %v3268 = vpop.f32.mrf.mxu0
    %v3269 = vadd.f32 %v3238, %v3268
    %3270 = vdwg.mxu0
    %3271 = vmatpush.msra.mxu0 %v3234
    %3272 = vmatpush.msra.mxu0 %v3232
    %3273 = vmatpush.msra.mxu0 %v3230
    %3274 = vmatpush.msra.mxu0 %v3228
    %3275 = vmatpush.msra.mxu0 %v3226
    %3276 = vmatpush.msra.mxu0 %v3224
    %3277 = vmatpush.msra.mxu0 %v3222
    %3278 = vmatpush.msra.mxu0 %v3220
    %3279 = vmatpush.msra.mxu0 %v3218
    %3280 = vmatpush.msra.mxu0 %v3216
    %3281 = vmatpush.msra.mxu0 %v3214
    %3282 = vmatpush.msra.mxu0 %v3212
    %3283 = vmatpush.msra.mxu0 %v3210
    %3284 = vmatpush.msra.mxu0 %v3208
    %3285 = vmatpush.msra.mxu0 %v3206
    %3286 = vmatpush.msra.mxu0 %v3204
    %3287 = vmatmul.f32.gmra.mxu0 %v3198
    %v3288 = vpop.f32.mrf.mxu0
    %v3289 = vadd.f32 %v3239, %v3288
    %3290 = vmatmul.f32.gmra.mxu0 %v3199
    %v3291 = vpop.f32.mrf.mxu0
    %v3292 = vadd.f32 %v3239, %v3291
    %3293 = vmatmul.f32.gmra.mxu0 %v3200
    %v3294 = vpop.f32.mrf.mxu0
    %v3295 = vadd.f32 %v3239, %v3294
    %3296 = vmatmul.f32.gmra.mxu0 %v3201
    %v3297 = vpop.f32.mrf.mxu0
    %v3298 = vadd.f32 %v3239, %v3297
    %3299 = vdwg.mxu0
    %v3300 = vmax.f32 %v3260, 0.0
    %v3301 = vmax.f32 %v3289, 0.0
    %v3302 = vmax.f32 %v3263, 0.0
    %v3303 = vmax.f32 %v3292, 0.0
    %v3304 = vmax.f32 %v3266, 0.0
    %v3305 = vmax.f32 %v3295, 0.0
    %v3306 = vmax.f32 %v3269, 0.0
    %v3307 = vmax.f32 %v3298, 0.0
    %s3308 = scalar_lea.vmem [#allocation17], 256
    %v3309 = vld [vmem:[%s3308] sm:$0xff]
    %v3310 = vld [vmem:[%s3308 + $0x8] sm:$0xff]
    %v3311 = vld [vmem:[%s3308 + $0x10] sm:$0xff]
    %v3312 = vld [vmem:[%s3308 + $0x18] sm:$0xff]
    %v3313 = vld [vmem:[%s3308 + $0x20] sm:$0xff]
    %v3314 = vld [vmem:[%s3308 + $0x28] sm:$0xff]
    %v3315 = vld [vmem:[%s3308 + $0x30] sm:$0xff]
    %v3316 = vld [vmem:[%s3308 + $0x38] sm:$0xff]
    %v3317 = vld [vmem:[%s3308 + $0x40] sm:$0xff]
    %v3318 = vld [vmem:[%s3308 + $0x48] sm:$0xff]
    %v3319 = vld [vmem:[%s3308 + $0x50] sm:$0xff]
    %v3320 = vld [vmem:[%s3308 + $0x58] sm:$0xff]
    %v3321 = vld [vmem:[%s3308 + $0x60] sm:$0xff]
    %v3322 = vld [vmem:[%s3308 + $0x68] sm:$0xff]
    %v3323 = vld [vmem:[%s3308 + $0x70] sm:$0xff]
    %v3324 = vld [vmem:[%s3308 + $0x78] sm:$0xff]
    %v3325 = vld [vmem:[%s3308 + $0x80] sm:$0xff]
    %v3326 = vld [vmem:[%s3308 + $0x88] sm:$0xff]
    %v3327 = vld [vmem:[%s3308 + $0x90] sm:$0xff]
    %v3328 = vld [vmem:[%s3308 + $0x98] sm:$0xff]
    %v3329 = vld [vmem:[%s3308 + $0xa0] sm:$0xff]
    %v3330 = vld [vmem:[%s3308 + $0xa8] sm:$0xff]
    %v3331 = vld [vmem:[%s3308 + $0xb0] sm:$0xff]
    %v3332 = vld [vmem:[%s3308 + $0xb8] sm:$0xff]
    %v3333 = vld [vmem:[%s3308 + $0xc0] sm:$0xff]
    %v3334 = vld [vmem:[%s3308 + $0xc8] sm:$0xff]
    %v3335 = vld [vmem:[%s3308 + $0xd0] sm:$0xff]
    %v3336 = vld [vmem:[%s3308 + $0xd8] sm:$0xff]
    %v3337 = vld [vmem:[%s3308 + $0xe0] sm:$0xff]
    %v3338 = vld [vmem:[%s3308 + $0xe8] sm:$0xff]
    %v3339 = vld [vmem:[%s3308 + $0xf0] sm:$0xff]
    %v3340 = vld [vmem:[%s3308 + $0xf8] sm:$0xff]
    %s3341 = scalar_lea.vmem %s12, 1
    %v3342 = vld [vmem:[%s3341] sm:$0x1]
    %v3344 = vperm.slane %v3342, 0
    %3346 = vmatpush.msra.mxu0 %v3324
    %3347 = vmatpush.msra.mxu0 %v3323
    %3348 = vmatpush.msra.mxu0 %v3322
    %3349 = vmatpush.msra.mxu0 %v3321
    %3350 = vmatpush.msra.mxu0 %v3320
    %3351 = vmatpush.msra.mxu0 %v3319
    %3352 = vmatpush.msra.mxu0 %v3318
    %3353 = vmatpush.msra.mxu0 %v3317
    %3354 = vmatpush.msra.mxu0 %v3316
    %3355 = vmatpush.msra.mxu0 %v3315
    %3356 = vmatpush.msra.mxu0 %v3314
    %3357 = vmatpush.msra.mxu0 %v3313
    %3358 = vmatpush.msra.mxu0 %v3312
    %3359 = vmatpush.msra.mxu0 %v3311
    %3360 = vmatpush.msra.mxu0 %v3310
    %3361 = vmatpush.msra.mxu0 %v3309
    %3362 = vmatmul.f32.gmra.mxu0 %v3300
    %v3363 = vpop.f32.mrf.mxu0
    %3364 = vmatmul.f32.gmra.mxu0 %v3302
    %v3365 = vpop.f32.mrf.mxu0
    %v3366 = vadd.f32 %v3344, %v3365
    %3367 = vmatmul.f32.gmra.mxu0 %v3304
    %v3368 = vpop.f32.mrf.mxu0
    %3369 = vmatmul.f32.gmra.mxu0 %v3306
    %v3370 = vpop.f32.mrf.mxu0
    %v3371 = vadd.f32 %v3344, %v3370
    %3372 = vdwg.mxu0
    %3373 = vmatpush.msra.mxu0 %v3340
    %3374 = vmatpush.msra.mxu0 %v3339
    %3375 = vmatpush.msra.mxu0 %v3338
    %3376 = vmatpush.msra.mxu0 %v3337
    %3377 = vmatpush.msra.mxu0 %v3336
    %3378 = vmatpush.msra.mxu0 %v3335
    %3379 = vmatpush.msra.mxu0 %v3334
    %3380 = vmatpush.msra.mxu0 %v3333
    %3381 = vmatpush.msra.mxu0 %v3332
    %3382 = vmatpush.msra.mxu0 %v3331
    %3383 = vmatpush.msra.mxu0 %v3330
    %3384 = vmatpush.msra.mxu0 %v3329
    %3385 = vmatpush.msra.mxu0 %v3328
    %3386 = vmatpush.msra.mxu0 %v3327
    %3387 = vmatpush.msra.mxu0 %v3326
    %3388 = vmatpush.msra.mxu0 %v3325
    %3389 = vmatmul.f32.gmra.mxu0 %v3301
    %v3390 = vpop.f32.mrf.mxu0
    %3391 = vmatmul.f32.gmra.mxu0 %v3303
    %v3392 = vpop.f32.mrf.mxu0
    %v3393 = vadd.f32 %v3366, %v3392
    %3394 = vmatmul.f32.gmra.mxu0 %v3305
    %v3395 = vpop.f32.mrf.mxu0
    %3396 = vmatmul.f32.gmra.mxu0 %v3307
    %v3397 = vpop.f32.mrf.mxu0
    %v3398 = vadd.f32 %v3371, %v3397
    %3399 = vdwg.mxu0
    %v3400 = vadd.f32 %v3199, %v3393
    %v3401 = vadd.f32 %v3201, %v3398
    %s3402 = scalar_lea.vmem [#allocation13], 1
    %v3403 = vld [vmem:[%s3402] sm:$0x1]
    %s3404 = scalar_lea.vmem [#allocation14], 1
    %v3405 = vld [vmem:[%s3404] sm:$0x1]
    %3406 = vadd.xlane.f32.xlu0 %v3400
    %v3407 = vpop.xlane.xlu0 %3406
    %3408 = vadd.xlane.f32.xlu0 %v3401
    %v3409 = vpop.xlane.xlu0 %3408
    %v3410 = vmul.f32 %v3407, %v1459
    %v3411 = vmul.f32 %v3409, %v1459
    %v3412 = vmul.f32 %v3400, %v3400
    %v3413 = vmul.f32 %v3401, %v3401
    %3414 = vadd.xlane.f32.xlu0 %v3412
    %v3415 = vpop.xlane.xlu0 %3414
    %3416 = vadd.xlane.f32.xlu0 %v3413
    %v3417 = vpop.xlane.xlu0 %3416
    %v3418 = vmul.f32 %v3415, %v1459
    %v3419 = vmul.f32 %v3417, %v1459
    %v3420 = vmul.f32 %v3410, %v3410
    %v3421 = vmul.f32 %v3411, %v3411
    %v3422 = vsub.f32 %v3418, %v3420
    %v3423 = vsub.f32 %v3419, %v3421
    %v3424 = vsub.f32 %v3400, %v3410
    %v3425 = vsub.f32 %v3401, %v3411
    %v3426 = vadd.f32 %v3422, 1e-05
    %v3427 = vadd.f32 %v3423, 1e-05
    %v3428 = vrsqrt.pop %v3426
    %v3429 = vmul.f32 %v3428, %v3426
    %v3430 = vmul.f32 %v3429, %v3428
    %v3431 = vmul.f32 0.5, %v3430
    %v3432 = vsub.f32 1.5, %v3431
    %v3433 = vmul.f32 %v3428, %v3432
    %vm3434 = vweird.f32 %v3426
    %vm3435 = vweird.f32 %v3428
    %vm3436 = vmor %vm3434, %vm3435
    %v3437 = vsel %vm3436, %v3428, %v3433
    %v3438 = vrsqrt.pop %v3427
    %v3439 = vmul.f32 %v3438, %v3427
    %v3440 = vmul.f32 %v3439, %v3438
    %v3441 = vmul.f32 0.5, %v3440
    %v3442 = vsub.f32 1.5, %v3441
    %v3443 = vmul.f32 %v3438, %v3442
    %vm3444 = vweird.f32 %v3427
    %vm3445 = vweird.f32 %v3438
    %vm3446 = vmor %vm3444, %vm3445
    %v3447 = vsel %vm3446, %v3438, %v3443
    %v3448 = vmul.f32 %v3424, %v3437
    %v3449 = vmul.f32 %v3425, %v3447
    %v3451 = vperm.slane %v3403, 0
    %v3453 = vmul.f32 %v3448, %v3451
    %v3454 = vmul.f32 %v3449, %v3451
    %v3456 = vperm.slane %v3405, 0
    %v3458 = vadd.f32 %v3453, %v3456
    %v3459 = vadd.f32 %v3454, %v3456
    %3460 = vst [vmem:[#allocation19 + $0x2] sm:$0xff] 0.0
    %3461 = vst [vmem:[#allocation19 + $0xa] sm:$0x3] 0.0
    %vm3464 = vcmask 1044484
    %v3465 = vsel %vm3464, %v3458, %v3458
    %vm3466 = vcmask 1046534
    %v3467 = vsel %vm3466, %v3458, %v3465
    %v3468 = vrot.slane %v3459, 7
    %vm3469 = vcmask 1041409
    %v3470 = vsel %vm3469, %v3468, %v3467
    %vm3471 = vcmask 1043459
    %v3472 = vsel %vm3471, %v3468, %v3470
    %vm3473 = vcmask 1045509
    %v3474 = vsel %vm3473, %v3468, %v3472
    %vm3475 = vcmask 1047559
    %v3476 = vsel %vm3475, %v3468, %v3474
    %3478 = vst [vmem:[#allocation19] sm:$0x3] %v3476
    // Predicated region
    $region94: #{tpu_custom_call.1} parent=1 // pred_check
      _
    $region95: #{tpu_custom_call.1} parent=1 // pred_check_branch
      %3480 = sbr.rel (0) target = $region97
    $region96: #{tpu_custom_call.1} parent=1 // pred_region
      %3482 = vsyncadd [#allocation4], 0
      %s3484 = sshll.u32 [#allocation19], 4
      %s3485 = int_to_ptr.vmem [resolvable:$true] %s3484
      %s3486 = sshll.u32 %s13, 4
      %s3487 = int_to_ptr.hbm [resolvable:$true] %s3486
      %3489 = dma.vmem_to_hbm [thread:$0]  %s3485, 192, %s3487, [#allocation4]
    $region97: #{tpu_custom_call.1} parent=1 // pred_fallthru
      _
    // Predicated region
    $region98: #{tpu_custom_call.1} parent=1 // pred_check
      _
    $region99: #{tpu_custom_call.1} parent=1 // pred_check_branch
      %3491 = sbr.rel (0) target = $region101
    $region100: #{tpu_custom_call.1} parent=1 // pred_region
      %3493 = dma.done [#allocation4], 192
    $region101: #{tpu_custom_call.1} parent=1 // pred_fallthru
      _
    %3494 = vsyncpa [#allocation3], 1
    %3495 = vsyncpa [#allocation6], 1
    %3496 = vsyncpa [#allocation9], 1
    %3497 = vsyncpa [#allocation12], 1
    %3498 = vsyncpa [#allocation15], 1
    %3499 = vsyncpa [#allocation18], 1
    %3500 = vsyncpa [#allocation4], 1

</llo_original>
